<compile_context>
chip_gen: v6e
topology: v6e:2x2x1
jax: 0.10.0
libtpu: 0.0.40
codegen_flags: <defaults>
</compile_context>

<pallas_src>
import functools
import math

import jax
import jax.numpy as jnp
from jax import lax
from jax.experimental import pallas as pl
from jax.experimental.pallas import tpu as pltpu


# ----------------------------- configuration --------------------------------

def _pick_vmem_limit():
    """Generation-aware VMEM limit: ~100 MiB on v5e/v6e (128 MiB physical),
    48 MiB on v7x (64 MiB physical) or when the query fails."""
    try:
        info = pltpu.get_tpu_info()
        cap = int(getattr(info, "vmem_capacity_bytes", 64 * 1024 * 1024))
    except Exception:
        cap = 64 * 1024 * 1024
    if cap >= 128 * 1024 * 1024:
        return 100 * 1024 * 1024
    return 48 * 1024 * 1024


VMEM_LIMIT = _pick_vmem_limit()
_TM = 256                      # row-tile target (batch*seq rows)
_TF = 512                      # d_ff reduction tile target (multiple of 128)
_TN = 512                      # feature tile target for the large-vocab fallback
PARAM_DTYPE = jnp.bfloat16     # weights; biases + accumulation stay f32


def _row_tile(m, target=_TM):
    """Row tile: full dim if small, else `target` (grid uses pl.cdiv + padding)."""
    return m if m <= target else target


def _reduction_tile(n, target=_TF):
    """Largest multiple of 128 <= target that divides n, else the full dim.
    (Reduction axes cannot rely on padded partial blocks.)"""
    t = min(target, n) // 128 * 128
    while t >= 128:
        if n % t == 0:
            return t
        t -= 128
    return n


def _resident(shape):
    """BlockSpec for a weight/bias kept resident across a 1-D grid."""
    nd = len(shape)
    return pl.BlockSpec(shape, lambda b: (0,) * nd)


# ----------------------------- fused MHA kernels -----------------------------

def _attn_core(q, k, v, wo, bo, o_ref, *, h, d_k, d_v, scale, causal):
    """All-heads attention + fused output projection.

    q: (Lq, h*d_k) f32   k: (Lk, h*d_k) f32   v: (Lk, h*d_v) f32
    wo: (h*d_v, d_model) bf16   bo: (1, d_model) f32
    Writes o_ref[0] = (Lq, d_model).
    """
    lq, lk = q.shape[0], k.shape[0]
    d_model = wo.shape[1]

    if causal:
        row = lax.broadcasted_iota(jnp.int32, (lq, lk), 0)
        col = lax.broadcasted_iota(jnp.int32, (lq, lk), 1)
        neg = jnp.where(col <= row, 0.0, -1e30).astype(jnp.float32)

    # TODO(synk): for real configs (h*d_k multiple of 128, long Lk) switch to a
    # batched-head dot_general + flash-style online softmax over Lk tiles; the
    # static per-head loop is fine at toy head counts / sequence lengths.
    acc = jnp.zeros((lq, d_model), jnp.float32)
    for head in range(h):
        qh = q[:, head * d_k:(head + 1) * d_k].astype(PARAM_DTYPE)
        kh = k[:, head * d_k:(head + 1) * d_k].astype(PARAM_DTYPE)
        vh = v[:, head * d_v:(head + 1) * d_v].astype(PARAM_DTYPE)
        # NT contraction: no explicit kh.T transpose through the XLU.
        s = lax.dot_general(qh, kh,
                            dimension_numbers=(((1,), (1,)), ((), ())),
                            preferred_element_type=jnp.float32) * scale
        if causal:
            s = s + neg
        s = s - jnp.max(s, axis=-1, keepdims=True)
        p = jnp.exp(s)
        p = p * pl.reciprocal(jnp.sum(p, axis=-1, keepdims=True), approx=True)
        oh = jnp.dot(p.astype(PARAM_DTYPE), vh,
                     preferred_element_type=jnp.float32)
        # Fold this head's slice of the output projection into the accumulator
        # (avoids the (Lq, h*d_v) concatenate; one score matrix live at a time).
        acc = acc + jnp.dot(oh.astype(PARAM_DTYPE),
                            wo[head * d_v:(head + 1) * d_v, :],
                            preferred_element_type=jnp.float32)
    o_ref[0] = (acc + bo).astype(o_ref.dtype)


def _mha_self_kernel(x_ref, wqkv_ref, bqkv_ref, wo_ref, bo_ref, o_ref,
                     *, h, d_k, d_v, causal):
    x = x_ref[0].astype(PARAM_DTYPE)                        # (L, d_model)
    qkv = jnp.dot(x, wqkv_ref[...],
                  preferred_element_type=jnp.float32) + bqkv_ref[...]
    hdk = h * d_k
    q = qkv[:, :hdk]
    k = qkv[:, hdk:2 * hdk]
    v = qkv[:, 2 * hdk:]
    _attn_core(q, k, v, wo_ref[...], bo_ref[...], o_ref,
               h=h, d_k=d_k, d_v=d_v, scale=1.0 / math.sqrt(d_k),
               causal=causal)


def _mha_cross_kernel(xq_ref, xkv_ref, wq_ref, bq_ref, wkv_ref, bkv_ref,
                      wo_ref, bo_ref, o_ref, *, h, d_k, d_v):
    xq = xq_ref[0].astype(PARAM_DTYPE)
    xkv = xkv_ref[0].astype(PARAM_DTYPE)
    q = jnp.dot(xq, wq_ref[...],
                preferred_element_type=jnp.float32) + bq_ref[...]
    kv = jnp.dot(xkv, wkv_ref[...],
                 preferred_element_type=jnp.float32) + bkv_ref[...]
    hdk = h * d_k
    k = kv[:, :hdk]
    v = kv[:, hdk:]
    _attn_core(q, k, v, wo_ref[...], bo_ref[...], o_ref,
               h=h, d_k=d_k, d_v=d_v, scale=1.0 / math.sqrt(d_k),
               causal=False)


def mha_self(x, p, *, h, d_k, d_v, causal):
    B, L, d_model = x.shape
    kern = functools.partial(_mha_self_kernel, h=h, d_k=d_k, d_v=d_v,
                             causal=causal)
    return pl.pallas_call(
        kern,
        out_shape=jax.ShapeDtypeStruct((B, L, d_model), x.dtype),
        grid=(B,),
        in_specs=[pl.BlockSpec((1, L, d_model), lambda b: (b, 0, 0)),
                  _resident(p["w_qkv"].shape),
                  _resident(p["b_qkv"].shape),
                  _resident(p["wo"].shape),
                  _resident(p["bo"].shape)],
        out_specs=pl.BlockSpec((1, L, d_model), lambda b: (b, 0, 0)),
        compiler_params=pltpu.CompilerParams(
            dimension_semantics=("parallel",),
            vmem_limit_bytes=VMEM_LIMIT),
    )(x, p["w_qkv"], p["b_qkv"], p["wo"], p["bo"])


def mha_cross(x_q, x_kv, p, *, h, d_k, d_v):
    B, Lq, d_model = x_q.shape
    Lk = x_kv.shape[1]
    kern = functools.partial(_mha_cross_kernel, h=h, d_k=d_k, d_v=d_v)
    return pl.pallas_call(
        kern,
        out_shape=jax.ShapeDtypeStruct((B, Lq, d_model), x_q.dtype),
        grid=(B,),
        in_specs=[pl.BlockSpec((1, Lq, d_model), lambda b: (b, 0, 0)),
                  pl.BlockSpec((1, Lk, d_model), lambda b: (b, 0, 0)),
                  _resident(p["wq"].shape),
                  _resident(p["bq"].shape),
                  _resident(p["w_kv"].shape),
                  _resident(p["b_kv"].shape),
                  _resident(p["wo"].shape),
                  _resident(p["bo"].shape)],
        out_specs=pl.BlockSpec((1, Lq, d_model), lambda b: (b, 0, 0)),
        compiler_params=pltpu.CompilerParams(
            dimension_semantics=("parallel",),
            vmem_limit_bytes=VMEM_LIMIT),
    )(x_q, x_kv, p["wq"], p["bq"], p["w_kv"], p["b_kv"], p["wo"], p["bo"])


# ----------------------------- FFN (tiled d_ff) -------------------------------

def _ffn_kernel(x_ref, w1_ref, b1_ref, w2_ref, b2_ref, o_ref, acc_ref):
    @pl.when(pl.program_id(1) == 0)
    def _():
        acc_ref[...] = jnp.zeros_like(acc_ref)

    x = x_ref[...].astype(PARAM_DTYPE)
    hblk = jnp.dot(x, w1_ref[...],
                   preferred_element_type=jnp.float32) + b1_ref[...]
    hblk = jnp.maximum(hblk, 0.0)
    acc_ref[...] += jnp.dot(hblk.astype(PARAM_DTYPE), w2_ref[...],
                            preferred_element_type=jnp.float32)

    @pl.when(pl.program_id(1) == pl.num_programs(1) - 1)
    def _():
        o_ref[...] = (acc_ref[...] + b2_ref[...]).astype(o_ref.dtype)


def ffn_apply(p, x):
    B, L, d_model = x.shape
    M = B * L
    F = p["w1"].shape[1]
    N = p["w2"].shape[1]
    TM = _row_tile(M)
    TF = _reduction_tile(F)
    y = pl.pallas_call(
        _ffn_kernel,
        out_shape=jax.ShapeDtypeStruct((M, N), x.dtype),
        grid=(pl.cdiv(M, TM), F // TF),
        in_specs=[pl.BlockSpec((TM, d_model), lambda i, f: (i, 0)),
                  pl.BlockSpec((d_model, TF), lambda i, f: (0, f)),
                  pl.BlockSpec((1, TF), lambda i, f: (0, f)),
                  pl.BlockSpec((TF, N), lambda i, f: (f, 0)),
                  pl.BlockSpec((1, N), lambda i, f: (0, 0))],
        out_specs=pl.BlockSpec((TM, N), lambda i, f: (i, 0)),
        scratch_shapes=[pltpu.VMEM((TM, N), jnp.float32)],
        compiler_params=pltpu.CompilerParams(
            dimension_semantics=("parallel", "arbitrary"),
            vmem_limit_bytes=VMEM_LIMIT),
    )(x.reshape(M, d_model), p["w1"], p["b1"], p["w2"], p["b2"])
    return y.reshape(B, L, N)


# ----------------------------- logits + softmax -------------------------------

def _logits_softmax_kernel(x_ref, w_ref, o_ref):
    z = jnp.dot(x_ref[...].astype(PARAM_DTYPE), w_ref[...],
                preferred_element_type=jnp.float32)
    z = z - jnp.max(z, axis=-1, keepdims=True)
    e = jnp.exp(z)
    # exact divide for the returned probability distribution
    o_ref[...] = (e / jnp.sum(e, axis=-1, keepdims=True)).astype(o_ref.dtype)


def _matmul_kernel(x_ref, w_ref, o_ref):
    o_ref[...] = jnp.dot(x_ref[...].astype(PARAM_DTYPE), w_ref[...],
                         preferred_element_type=jnp.float32).astype(o_ref.dtype)


def _softmax_kernel(x_ref, o_ref):
    z = x_ref[...].astype(jnp.float32)
    z = z - jnp.max(z, axis=-1, keepdims=True)
    e = jnp.exp(z)
    o_ref[...] = (e / jnp.sum(e, axis=-1, keepdims=True)).astype(o_ref.dtype)


def logits_softmax(x2d, w):
    """Final linear (no bias) fused with softmax over the vocab axis."""
    M, K = x2d.shape
    V = w.shape[1]
    TM = _row_tile(M)
    fused_bytes = (K * V * w.dtype.itemsize           # resident vocab weight
                   + 2 * TM * K * x2d.dtype.itemsize  # double-buffered x
                   + 2 * TM * V * 4                   # double-buffered out
                   + TM * V * 4)                      # in-kernel f32 logits
    if fused_bytes <= int(VMEM_LIMIT * 0.7):
        return pl.pallas_call(
            _logits_softmax_kernel,
            out_shape=jax.ShapeDtypeStruct((M, V), jnp.float32),
            grid=(pl.cdiv(M, TM),),
            in_specs=[pl.BlockSpec((TM, K), lambda i: (i, 0)),
                      pl.BlockSpec((K, V), lambda i: (0, 0))],
            out_specs=pl.BlockSpec((TM, V), lambda i: (i, 0)),
            compiler_params=pltpu.CompilerParams(
                dimension_semantics=("parallel",),
                vmem_limit_bytes=VMEM_LIMIT),
        )(x2d, w)

    # Large-vocab fallback: tiled matmul over (M, V) then a VMEM-bounded
    # row-softmax.  TODO(synk): replace with a flash-style online softmax over
    # vocab tiles to remove the extra HBM round-trip of the logits.
    TN = min(_TN, V)
    logits = pl.pallas_call(
        _matmul_kernel,
        out_shape=jax.ShapeDtypeStruct((M, V), jnp.float32),
        grid=(pl.cdiv(M, TM), pl.cdiv(V, TN)),
        in_specs=[pl.BlockSpec((TM, K), lambda i, j: (i, 0)),
                  pl.BlockSpec((K, TN), lambda i, j: (0, j))],
        out_specs=pl.BlockSpec((TM, TN), lambda i, j: (i, j)),
        compiler_params=pltpu.CompilerParams(
            dimension_semantics=("parallel", "parallel"),
            vmem_limit_bytes=VMEM_LIMIT),
    )(x2d, w)
    tm_soft = (int(VMEM_LIMIT * 0.2) // (V * 4)) // 8 * 8
    tm_soft = max(8, min(tm_soft, _TM))
    if M <= tm_soft:
        tm_soft = M
    return pl.pallas_call(
        _softmax_kernel,
        out_shape=jax.ShapeDtypeStruct((M, V), jnp.float32),
        grid=(pl.cdiv(M, tm_soft),),
        in_specs=[pl.BlockSpec((tm_soft, V), lambda i: (i, 0))],
        out_specs=pl.BlockSpec((tm_soft, V), lambda i: (i, 0)),
        compiler_params=pltpu.CompilerParams(
            dimension_semantics=("parallel",),
            vmem_limit_bytes=VMEM_LIMIT),
    )(logits)


# ----------------------------- parameter init --------------------------------

def init_linear_params(key, fan_in, fan_out, bias=True):
    kw, kb = jax.random.split(key)
    bound = 1.0 / math.sqrt(fan_in)
    w = jax.random.uniform(kw, (fan_in, fan_out), jnp.float32, -bound, bound)
    if bias:
        b = jax.random.uniform(kb, (fan_out,), jnp.float32, -bound, bound)
        return w, b
    return w, None


def init_mha(key, d_model, d_k, d_v, h, cross_attention=False):
    ks = jax.random.split(key, 4)
    wq, bq = init_linear_params(ks[0], d_model, h * d_k)
    wk, bk = init_linear_params(ks[1], d_model, h * d_k)
    wv, bv = init_linear_params(ks[2], d_model, h * d_v)
    wo, bo = init_linear_params(ks[3], h * d_v, d_model)
    wo = wo.astype(PARAM_DTYPE)
    bo = bo.reshape(1, -1)
    if cross_attention:
        # Q projection separate; K,V fused (they share the encoder output).
        return dict(wq=wq.astype(PARAM_DTYPE), bq=bq.reshape(1, -1),
                    w_kv=jnp.concatenate([wk, wv], 1).astype(PARAM_DTYPE),
                    b_kv=jnp.concatenate([bk, bv]).reshape(1, -1),
                    wo=wo, bo=bo)
    # Self-attention: single fused QKV projection.
    return dict(w_qkv=jnp.concatenate([wq, wk, wv], 1).astype(PARAM_DTYPE),
                b_qkv=jnp.concatenate([bq, bk, bv]).reshape(1, -1),
                wo=wo, bo=bo)


def init_ffn(key, d_model, d_ff):
    k1, k2 = jax.random.split(key)
    w1, b1 = init_linear_params(k1, d_model, d_ff)
    w2, b2 = init_linear_params(k2, d_ff, d_model)
    return dict(w1=w1.astype(PARAM_DTYPE), b1=b1.reshape(1, -1),
                w2=w2.astype(PARAM_DTYPE), b2=b2.reshape(1, -1))


def init_transformer(key, vocab_size, n_encoders, n_decoders,
                     d_model, d_k, d_v, h, d_ff):
    keys = jax.random.split(key, n_encoders + n_decoders + 1)
    enc = []
    for i in range(n_encoders):
        k1, k2 = jax.random.split(keys[i])
        enc.append(dict(sa=init_mha(k1, d_model, d_k, d_v, h),
                        ff=init_ffn(k2, d_model, d_ff)))
    dec = []
    for i in range(n_decoders):
        k1, k2, k3 = jax.random.split(keys[n_encoders + i], 3)
        dec.append(dict(msa=init_mha(k1, d_model, d_k, d_v, h),
                        ca=init_mha(k2, d_model, d_k, d_v, h,
                                    cross_attention=True),
                        ff=init_ffn(k3, d_model, d_ff)))
    w_out, _ = init_linear_params(keys[-1], d_model, vocab_size, bias=False)
    return dict(enc=enc, dec=dec, w_out=w_out.astype(PARAM_DTYPE))


# ----------------------------- model glue (jitted) ----------------------------

def positional_encoding(seq_len, d_model):
    pos = jnp.arange(seq_len, dtype=jnp.float32)[:, None]
    i = jnp.arange(d_model)[None, :]
    angle = pos / jnp.power(10000.0, (2 * (i // 2)).astype(jnp.float32) / d_model)
    return jnp.where(i % 2 == 0, jnp.sin(angle), jnp.cos(angle))


# TODO(synk): for real model sizes, pad d_model / h*d_v / vocab to multiples of
# 128 at the wrapper level so all stores are unmasked lane-dense vst.
@functools.partial(jax.jit, static_argnames=("d_k", "d_v", "h"))
def transformer_forward(params, out_embed, in_embed, *, d_k, d_v, h):
    B, Lq, d_model = out_embed.shape
    Lk = in_embed.shape[1]
    in_embed = in_embed + positional_encoding(Lk, d_model)[None]
    out_embed = out_embed + positional_encoding(Lq, d_model)[None]

    for lp in params["enc"]:
        x = mha_self(in_embed, lp["sa"], h=h, d_k=d_k, d_v=d_v, causal=False)
        in_embed = ffn_apply(lp["ff"], x)

    for lp in params["dec"]:
        x = mha_self(out_embed, lp["msa"], h=h, d_k=d_k, d_v=d_v, causal=True)
        x = mha_cross(x, in_embed, lp["ca"], h=h, d_k=d_k, d_v=d_v)
        out_embed = ffn_apply(lp["ff"], x)

    # TODO(synk): reference returns nn.Softmax(out) (an nn.Module, not a tensor);
    # we apply the intended softmax over the vocab axis of the linear output.
    probs = logits_softmax(out_embed.reshape(B * Lq, d_model), params["w_out"])
    return probs.reshape(B, Lq, -1)


# ----------------------------------- main -------------------------------------

if __name__ == "__main__":
    # small shapes consistent with the module
    vocab_size = 50
    n_encoders, n_decoders = 2, 2
    d_model, d_k, d_v, h, d_ff = 32, 8, 8, 4, 64
    batch, len_q, len_k = 2, 8, 12

    key = jax.random.PRNGKey(0)
    k_params, k_out, k_in = jax.random.split(key, 3)

    params = init_transformer(k_params, vocab_size, n_encoders, n_decoders,
                              d_model, d_k, d_v, h, d_ff)
    out_embed = jax.random.normal(k_out, (batch, len_q, d_model), jnp.float32)
    in_embed = jax.random.normal(k_in, (batch, len_k, d_model), jnp.float32)

    probs = transformer_forward(params, out_embed, in_embed,
                                d_k=d_k, d_v=d_v, h=h)
    probs = jax.block_until_ready(probs)

    assert probs.shape == (batch, len_q, vocab_size)
    assert bool(jnp.all(jnp.isfinite(probs)))
    # softmax rows sum to 1
    assert bool(jnp.allclose(jnp.sum(probs, axis=-1), 1.0, atol=1e-4))
    print("KERNEL_OK")
</pallas_src>

<mosaic_0001>
module attributes {stable_mosaic.version = 11 : i64} {
  func.func @_ffn_kernel(%arg0: i32, %arg1: i32, %arg2: memref<24x32xf32, #tpu.memory_space<vmem>>, %arg3: memref<32x64xbf16, #tpu.memory_space<vmem>>, %arg4: memref<1x64xf32, #tpu.memory_space<vmem>>, %arg5: memref<64x32xbf16, #tpu.memory_space<vmem>>, %arg6: memref<1x32xf32, #tpu.memory_space<vmem>>, %arg7: memref<24x32xf32, #tpu.memory_space<vmem>>, %arg8: memref<24x32xf32, #tpu.memory_space<vmem>>) attributes {dimension_semantics = [#tpu.dimension_semantics<parallel>, #tpu.dimension_semantics<arbitrary>], iteration_bounds = array<i64: 1, 1>, scalar_prefetch = 0 : i64, scratch_operands = 1 : i64, tpu.core_type = #tpu.core_type<tc>, window_params = [{transform_indices = @transform_0, window_bounds = array<i64: 24, 32>}, {transform_indices = @transform_1, window_bounds = array<i64: 32, 64>}, {transform_indices = @transform_2, window_bounds = array<i64: 1, 64>}, {transform_indices = @transform_3, window_bounds = array<i64: 64, 32>}, {pipeline_mode = #tpu.pipeline_mode<synchronous>, transform_indices = @transform_4, window_bounds = array<i64: 1, 32>}, {transform_indices = @transform_5, window_bounds = array<i64: 24, 32>}]} {
    %c0_i32 = arith.constant 0 : i32
    %0 = arith.cmpi eq, %arg1, %c0_i32 : i32
    %1 = arith.extui %0 : i1 to i32
    %c0_i32_0 = arith.constant 0 : i32
    %2 = arith.cmpi ne, %1, %c0_i32_0 : i32
    scf.if %2 {
      %cst_16 = arith.constant 0.000000e+00 : f32
      %21 = vector.broadcast %cst_16 : f32 to vector<24x32xf32>
      %c0_17 = arith.constant 0 : index
      %c0_18 = arith.constant 0 : index
      %22 = vector.load %arg8[%c0_17, %c0_18] : memref<24x32xf32, #tpu.memory_space<vmem>>, vector<24x32xf32>
      tpu.vector_store %arg8[%c0_17, %c0_18], %21 {strides = array<i32>} : memref<24x32xf32, #tpu.memory_space<vmem>>, vector<24x32xf32>,
    } else {
    }
    %c0 = arith.constant 0 : index
    %c0_1 = arith.constant 0 : index
    %3 = vector.load %arg2[%c0, %c0_1] : memref<24x32xf32, #tpu.memory_space<vmem>>, vector<24x32xf32>
    %4 = arith.truncf %3 : vector<24x32xf32> to vector<24x32xbf16>
    %c0_2 = arith.constant 0 : index
    %c0_3 = arith.constant 0 : index
    %5 = vector.load %arg3[%c0_2, %c0_3] : memref<32x64xbf16, #tpu.memory_space<vmem>>, vector<32x64xbf16>
    %cst = arith.constant dense<0.000000e+00> : vector<24x64xf32>
    %6 = tpu.matmul %4, %5, %cst {dimension_numbers = #tpu.dot_dimension_numbers<[1], [0], [0], [1], [0, 0, 1, 1], [], []>} : vector<24x32xbf16>, vector<32x64xbf16>, vector<24x64xf32> -> vector<24x64xf32>
    %c0_4 = arith.constant 0 : index
    %c0_5 = arith.constant 0 : index
    %7 = vector.load %arg4[%c0_4, %c0_5] : memref<1x64xf32, #tpu.memory_space<vmem>>, vector<1x64xf32>
    %8 = vector.broadcast %7 : vector<1x64xf32> to vector<24x64xf32>
    %9 = arith.addf %6, %8 : vector<24x64xf32>
    %cst_6 = arith.constant 0.000000e+00 : f32
    %10 = vector.broadcast %cst_6 : f32 to vector<24x64xf32>
    %11 = arith.maximumf %9, %10 : vector<24x64xf32>
    %c0_7 = arith.constant 0 : index
    %c0_8 = arith.constant 0 : index
    %12 = vector.load %arg8[%c0_7, %c0_8] : memref<24x32xf32, #tpu.memory_space<vmem>>, vector<24x32xf32>
    %13 = arith.truncf %11 : vector<24x64xf32> to vector<24x64xbf16>
    %c0_9 = arith.constant 0 : index
    %c0_10 = arith.constant 0 : index
    %14 = vector.load %arg5[%c0_9, %c0_10] : memref<64x32xbf16, #tpu.memory_space<vmem>>, vector<64x32xbf16>
    %cst_11 = arith.constant dense<0.000000e+00> : vector<24x32xf32>
    %15 = tpu.matmul %13, %14, %cst_11 {dimension_numbers = #tpu.dot_dimension_numbers<[1], [0], [0], [1], [0, 0, 1, 1], [], []>} : vector<24x64xbf16>, vector<64x32xbf16>, vector<24x32xf32> -> vector<24x32xf32>
    %16 = arith.addf %12, %15 : vector<24x32xf32>
    %c0_12 = arith.constant 0 : index
    %c0_13 = arith.constant 0 : index
    %17 = vector.load %arg8[%c0_12, %c0_13] : memref<24x32xf32, #tpu.memory_space<vmem>>, vector<24x32xf32>
    tpu.vector_store %arg8[%c0_12, %c0_13], %16 {strides = array<i32>} : memref<24x32xf32, #tpu.memory_space<vmem>>, vector<24x32xf32>,
    %c0_i32_14 = arith.constant 0 : i32
    %18 = arith.cmpi eq, %arg1, %c0_i32_14 : i32
    %19 = arith.extui %18 : i1 to i32
    %c0_i32_15 = arith.constant 0 : i32
    %20 = arith.cmpi ne, %19, %c0_i32_15 : i32
    scf.if %20 {
      %c0_16 = arith.constant 0 : index
      %c0_17 = arith.constant 0 : index
      %21 = vector.load %arg8[%c0_16, %c0_17] : memref<24x32xf32, #tpu.memory_space<vmem>>, vector<24x32xf32>
      %c0_18 = arith.constant 0 : index
      %c0_19 = arith.constant 0 : index
      %22 = vector.load %arg6[%c0_18, %c0_19] : memref<1x32xf32, #tpu.memory_space<vmem>>, vector<1x32xf32>
      %23 = vector.broadcast %22 : vector<1x32xf32> to vector<24x32xf32>
      %24 = arith.addf %21, %23 : vector<24x32xf32>
      %c0_20 = arith.constant 0 : index
      %c0_21 = arith.constant 0 : index
      %25 = vector.load %arg7[%c0_20, %c0_21] : memref<24x32xf32, #tpu.memory_space<vmem>>, vector<24x32xf32>
      tpu.vector_store %arg7[%c0_20, %c0_21], %24 {strides = array<i32>} : memref<24x32xf32, #tpu.memory_space<vmem>>, vector<24x32xf32>,
    } else {
    }
    return
  }
  func.func @transform_0(%arg0: i32, %arg1: i32) -> (i32, i32) {
    %c0_i32 = arith.constant 0 : i32
    %c0_i32_0 = arith.constant 0 : i32
    return %arg0, %c0_i32 : i32, i32
  }
  func.func @transform_1(%arg0: i32, %arg1: i32) -> (i32, i32) {
    %c0_i32 = arith.constant 0 : i32
    %c0_i32_0 = arith.constant 0 : i32
    return %c0_i32, %arg1 : i32, i32
  }
  func.func @transform_2(%arg0: i32, %arg1: i32) -> (i32, i32) {
    %c0_i32 = arith.constant 0 : i32
    %c0_i32_0 = arith.constant 0 : i32
    return %c0_i32, %arg1 : i32, i32
  }
  func.func @transform_3(%arg0: i32, %arg1: i32) -> (i32, i32) {
    %c0_i32 = arith.constant 0 : i32
    %c0_i32_0 = arith.constant 0 : i32
    return %arg1, %c0_i32 : i32, i32
  }
  func.func @transform_4(%arg0: i32, %arg1: i32) -> (i32, i32) {
    %c0_i32 = arith.constant 0 : i32
    %c0_i32_0 = arith.constant 0 : i32
    %c0_i32_1 = arith.constant 0 : i32
    return %c0_i32, %c0_i32_0 : i32, i32
  }
  func.func @transform_5(%arg0: i32, %arg1: i32) -> (i32, i32) {
    %c0_i32 = arith.constant 0 : i32
    %c0_i32_0 = arith.constant 0 : i32
    return %arg0, %c0_i32 : i32, i32
  }
}

module attributes {stable_mosaic.version = 11 : i64} {
  func.func @_mha_self_kernel(%arg0: i32, %arg1: memref<1x12x32xf32, #tpu.memory_space<vmem>>, %arg2: memref<32x96xbf16, #tpu.memory_space<vmem>>, %arg3: memref<1x96xf32, #tpu.memory_space<vmem>>, %arg4: memref<32x32xbf16, #tpu.memory_space<vmem>>, %arg5: memref<1x32xf32, #tpu.memory_space<vmem>>, %arg6: memref<1x12x32xf32, #tpu.memory_space<vmem>>) attributes {dimension_semantics = [#tpu.dimension_semantics<parallel>], iteration_bounds = array<i64: 2>, scalar_prefetch = 0 : i64, scratch_operands = 0 : i64, tpu.core_type = #tpu.core_type<tc>, window_params = [{transform_indices = @transform_0, window_bounds = array<i64: 1, 12, 32>}, {pipeline_mode = #tpu.pipeline_mode<synchronous>, transform_indices = @transform_1, window_bounds = array<i64: 32, 96>}, {pipeline_mode = #tpu.pipeline_mode<synchronous>, transform_indices = @transform_2, window_bounds = array<i64: 1, 96>}, {pipeline_mode = #tpu.pipeline_mode<synchronous>, transform_indices = @transform_3, window_bounds = array<i64: 32, 32>}, {pipeline_mode = #tpu.pipeline_mode<synchronous>, transform_indices = @transform_4, window_bounds = array<i64: 1, 32>}, {transform_indices = @transform_5, window_bounds = array<i64: 1, 12, 32>}]} {
    %c0 = arith.constant 0 : index
    %c0_0 = arith.constant 0 : index
    %c0_1 = arith.constant 0 : index
    %0 = vector.load %arg1[%c0, %c0_0, %c0_1] : memref<1x12x32xf32, #tpu.memory_space<vmem>>, vector<1x12x32xf32>
    %1 = vector.shape_cast %0 : vector<1x12x32xf32> to vector<12x32xf32>
    %2 = arith.truncf %1 : vector<12x32xf32> to vector<12x32xbf16>
    %c0_2 = arith.constant 0 : index
    %c0_3 = arith.constant 0 : index
    %3 = vector.load %arg2[%c0_2, %c0_3] : memref<32x96xbf16, #tpu.memory_space<vmem>>, vector<32x96xbf16>
    %cst = arith.constant dense<0.000000e+00> : vector<12x96xf32>
    %4 = tpu.matmul %2, %3, %cst {dimension_numbers = #tpu.dot_dimension_numbers<[1], [0], [0], [1], [0, 0, 1, 1], [], []>} : vector<12x32xbf16>, vector<32x96xbf16>, vector<12x96xf32> -> vector<12x96xf32>
    %c0_4 = arith.constant 0 : index
    %c0_5 = arith.constant 0 : index
    %5 = vector.load %arg3[%c0_4, %c0_5] : memref<1x96xf32, #tpu.memory_space<vmem>>, vector<1x96xf32>
    %6 = vector.broadcast %5 : vector<1x96xf32> to vector<12x96xf32>
    %7 = arith.addf %4, %6 : vector<12x96xf32>
    %8 = vector.extract_strided_slice %7 {offsets = [0, 0], sizes = [12, 32], strides = [1, 1]} : vector<12x96xf32> to vector<12x32xf32>
    %9 = vector.extract_strided_slice %7 {offsets = [0, 32], sizes = [12, 32], strides = [1, 1]} : vector<12x96xf32> to vector<12x32xf32>
    %10 = vector.extract_strided_slice %7 {offsets = [0, 64], sizes = [12, 32], strides = [1, 1]} : vector<12x96xf32> to vector<12x32xf32>
    %c0_6 = arith.constant 0 : index
    %c0_7 = arith.constant 0 : index
    %11 = vector.load %arg4[%c0_6, %c0_7] : memref<32x32xbf16, #tpu.memory_space<vmem>>, vector<32x32xbf16>
    %c0_8 = arith.constant 0 : index
    %c0_9 = arith.constant 0 : index
    %12 = vector.load %arg5[%c0_8, %c0_9] : memref<1x32xf32, #tpu.memory_space<vmem>>, vector<1x32xf32>
    %cst_10 = arith.constant 0.000000e+00 : f32
    %13 = vector.broadcast %cst_10 : f32 to vector<12x32xf32>
    %14 = vector.extract_strided_slice %8 {offsets = [0, 0], sizes = [12, 8], strides = [1, 1]} : vector<12x32xf32> to vector<12x8xf32>
    %15 = arith.truncf %14 : vector<12x8xf32> to vector<12x8xbf16>
    %16 = vector.extract_strided_slice %9 {offsets = [0, 0], sizes = [12, 8], strides = [1, 1]} : vector<12x32xf32> to vector<12x8xf32>
    %17 = arith.truncf %16 : vector<12x8xf32> to vector<12x8xbf16>
    %18 = vector.extract_strided_slice %10 {offsets = [0, 0], sizes = [12, 8], strides = [1, 1]} : vector<12x32xf32> to vector<12x8xf32>
    %19 = arith.truncf %18 : vector<12x8xf32> to vector<12x8xbf16>
    %cst_11 = arith.constant dense<0.000000e+00> : vector<12x12xf32>
    %20 = tpu.matmul %15, %17, %cst_11 {dimension_numbers = #tpu.dot_dimension_numbers<[1], [1], [0], [0], [0, 0, 1, 0], [], []>} : vector<12x8xbf16>, vector<12x8xbf16>, vector<12x12xf32> -> vector<12x12xf32>
    %cst_12 = arith.constant 0.353553385 : f32
    %21 = vector.broadcast %cst_12 : f32 to vector<12x12xf32>
    %22 = arith.mulf %20, %21 : vector<12x12xf32>
    %cst_13 = arith.constant dense<0xFF800000> : vector<12xf32>
    %23 = vector.multi_reduction <maximumf>, %22, %cst_13 [1] : vector<12x12xf32> to vector<12xf32>
    %24 = vector.shape_cast %23 : vector<12xf32> to vector<12x1xf32>
    %25 = vector.broadcast %24 : vector<12x1xf32> to vector<12x12xf32>
    %26 = arith.subf %22, %25 : vector<12x12xf32>
    %27 = math.exp %26 : vector<12x12xf32>
    %cst_14 = arith.constant dense<0.000000e+00> : vector<12xf32>
    %28 = vector.multi_reduction <add>, %27, %cst_14 [1] : vector<12x12xf32> to vector<12xf32>
    %29 = vector.shape_cast %28 : vector<12xf32> to vector<12x1xf32>
    %30 = tpu.reciprocal %29 {approx = true} : vector<12x1xf32> -> vector<12x1xf32>
    %31 = vector.broadcast %30 : vector<12x1xf32> to vector<12x12xf32>
    %32 = arith.mulf %27, %31 : vector<12x12xf32>
    %33 = arith.truncf %32 : vector<12x12xf32> to vector<12x12xbf16>
    %cst_15 = arith.constant dense<0.000000e+00> : vector<12x8xf32>
    %34 = tpu.matmul %33, %19, %cst_15 {dimension_numbers = #tpu.dot_dimension_numbers<[1], [0], [0], [1], [0, 0, 1, 1], [], []>} : vector<12x12xbf16>, vector<12x8xbf16>, vector<12x8xf32> -> vector<12x8xf32>
    %35 = arith.truncf %34 : vector<12x8xf32> to vector<12x8xbf16>
    %36 = vector.extract_strided_slice %11 {offsets = [0, 0], sizes = [8, 32], strides = [1, 1]} : vector<32x32xbf16> to vector<8x32xbf16>
    %cst_16 = arith.constant dense<0.000000e+00> : vector<12x32xf32>
    %37 = tpu.matmul %35, %36, %cst_16 {dimension_numbers = #tpu.dot_dimension_numbers<[1], [0], [0], [1], [0, 0, 1, 1], [], []>} : vector<12x8xbf16>, vector<8x32xbf16>, vector<12x32xf32> -> vector<12x32xf32>
    %38 = arith.addf %13, %37 : vector<12x32xf32>
    %39 = vector.extract_strided_slice %8 {offsets = [0, 8], sizes = [12, 8], strides = [1, 1]} : vector<12x32xf32> to vector<12x8xf32>
    %40 = arith.truncf %39 : vector<12x8xf32> to vector<12x8xbf16>
    %41 = vector.extract_strided_slice %9 {offsets = [0, 8], sizes = [12, 8], strides = [1, 1]} : vector<12x32xf32> to vector<12x8xf32>
    %42 = arith.truncf %41 : vector<12x8xf32> to vector<12x8xbf16>
    %43 = vector.extract_strided_slice %10 {offsets = [0, 8], sizes = [12, 8], strides = [1, 1]} : vector<12x32xf32> to vector<12x8xf32>
    %44 = arith.truncf %43 : vector<12x8xf32> to vector<12x8xbf16>
    %cst_17 = arith.constant dense<0.000000e+00> : vector<12x12xf32>
    %45 = tpu.matmul %40, %42, %cst_17 {dimension_numbers = #tpu.dot_dimension_numbers<[1], [1], [0], [0], [0, 0, 1, 0], [], []>} : vector<12x8xbf16>, vector<12x8xbf16>, vector<12x12xf32> -> vector<12x12xf32>
    %cst_18 = arith.constant 0.353553385 : f32
    %46 = vector.broadcast %cst_18 : f32 to vector<12x12xf32>
    %47 = arith.mulf %45, %46 : vector<12x12xf32>
    %cst_19 = arith.constant dense<0xFF800000> : vector<12xf32>
    %48 = vector.multi_reduction <maximumf>, %47, %cst_19 [1] : vector<12x12xf32> to vector<12xf32>
    %49 = vector.shape_cast %48 : vector<12xf32> to vector<12x1xf32>
    %50 = vector.broadcast %49 : vector<12x1xf32> to vector<12x12xf32>
    %51 = arith.subf %47, %50 : vector<12x12xf32>
    %52 = math.exp %51 : vector<12x12xf32>
    %cst_20 = arith.constant dense<0.000000e+00> : vector<12xf32>
    %53 = vector.multi_reduction <add>, %52, %cst_20 [1] : vector<12x12xf32> to vector<12xf32>
    %54 = vector.shape_cast %53 : vector<12xf32> to vector<12x1xf32>
    %55 = tpu.reciprocal %54 {approx = true} : vector<12x1xf32> -> vector<12x1xf32>
    %56 = vector.broadcast %55 : vector<12x1xf32> to vector<12x12xf32>
    %57 = arith.mulf %52, %56 : vector<12x12xf32>
    %58 = arith.truncf %57 : vector<12x12xf32> to vector<12x12xbf16>
    %cst_21 = arith.constant dense<0.000000e+00> : vector<12x8xf32>
    %59 = tpu.matmul %58, %44, %cst_21 {dimension_numbers = #tpu.dot_dimension_numbers<[1], [0], [0], [1], [0, 0, 1, 1], [], []>} : vector<12x12xbf16>, vector<12x8xbf16>, vector<12x8xf32> -> vector<12x8xf32>
    %60 = arith.truncf %59 : vector<12x8xf32> to vector<12x8xbf16>
    %61 = vector.extract_strided_slice %11 {offsets = [8, 0], sizes = [8, 32], strides = [1, 1]} : vector<32x32xbf16> to vector<8x32xbf16>
    %cst_22 = arith.constant dense<0.000000e+00> : vector<12x32xf32>
    %62 = tpu.matmul %60, %61, %cst_22 {dimension_numbers = #tpu.dot_dimension_numbers<[1], [0], [0], [1], [0, 0, 1, 1], [], []>} : vector<12x8xbf16>, vector<8x32xbf16>, vector<12x32xf32> -> vector<12x32xf32>
    %63 = arith.addf %38, %62 : vector<12x32xf32>
    %64 = vector.extract_strided_slice %8 {offsets = [0, 16], sizes = [12, 8], strides = [1, 1]} : vector<12x32xf32> to vector<12x8xf32>
    %65 = arith.truncf %64 : vector<12x8xf32> to vector<12x8xbf16>
    %66 = vector.extract_strided_slice %9 {offsets = [0, 16], sizes = [12, 8], strides = [1, 1]} : vector<12x32xf32> to vector<12x8xf32>
    %67 = arith.truncf %66 : vector<12x8xf32> to vector<12x8xbf16>
    %68 = vector.extract_strided_slice %10 {offsets = [0, 16], sizes = [12, 8], strides = [1, 1]} : vector<12x32xf32> to vector<12x8xf32>
    %69 = arith.truncf %68 : vector<12x8xf32> to vector<12x8xbf16>
    %cst_23 = arith.constant dense<0.000000e+00> : vector<12x12xf32>
    %70 = tpu.matmul %65, %67, %cst_23 {dimension_numbers = #tpu.dot_dimension_numbers<[1], [1], [0], [0], [0, 0, 1, 0], [], []>} : vector<12x8xbf16>, vector<12x8xbf16>, vector<12x12xf32> -> vector<12x12xf32>
    %cst_24 = arith.constant 0.353553385 : f32
    %71 = vector.broadcast %cst_24 : f32 to vector<12x12xf32>
    %72 = arith.mulf %70, %71 : vector<12x12xf32>
    %cst_25 = arith.constant dense<0xFF800000> : vector<12xf32>
    %73 = vector.multi_reduction <maximumf>, %72, %cst_25 [1] : vector<12x12xf32> to vector<12xf32>
    %74 = vector.shape_cast %73 : vector<12xf32> to vector<12x1xf32>
    %75 = vector.broadcast %74 : vector<12x1xf32> to vector<12x12xf32>
    %76 = arith.subf %72, %75 : vector<12x12xf32>
    %77 = math.exp %76 : vector<12x12xf32>
    %cst_26 = arith.constant dense<0.000000e+00> : vector<12xf32>
    %78 = vector.multi_reduction <add>, %77, %cst_26 [1] : vector<12x12xf32> to vector<12xf32>
    %79 = vector.shape_cast %78 : vector<12xf32> to vector<12x1xf32>
    %80 = tpu.reciprocal %79 {approx = true} : vector<12x1xf32> -> vector<12x1xf32>
    %81 = vector.broadcast %80 : vector<12x1xf32> to vector<12x12xf32>
    %82 = arith.mulf %77, %81 : vector<12x12xf32>
    %83 = arith.truncf %82 : vector<12x12xf32> to vector<12x12xbf16>
    %cst_27 = arith.constant dense<0.000000e+00> : vector<12x8xf32>
    %84 = tpu.matmul %83, %69, %cst_27 {dimension_numbers = #tpu.dot_dimension_numbers<[1], [0], [0], [1], [0, 0, 1, 1], [], []>} : vector<12x12xbf16>, vector<12x8xbf16>, vector<12x8xf32> -> vector<12x8xf32>
    %85 = arith.truncf %84 : vector<12x8xf32> to vector<12x8xbf16>
    %86 = vector.extract_strided_slice %11 {offsets = [16, 0], sizes = [8, 32], strides = [1, 1]} : vector<32x32xbf16> to vector<8x32xbf16>
    %cst_28 = arith.constant dense<0.000000e+00> : vector<12x32xf32>
    %87 = tpu.matmul %85, %86, %cst_28 {dimension_numbers = #tpu.dot_dimension_numbers<[1], [0], [0], [1], [0, 0, 1, 1], [], []>} : vector<12x8xbf16>, vector<8x32xbf16>, vector<12x32xf32> -> vector<12x32xf32>
    %88 = arith.addf %63, %87 : vector<12x32xf32>
    %89 = vector.extract_strided_slice %8 {offsets = [0, 24], sizes = [12, 8], strides = [1, 1]} : vector<12x32xf32> to vector<12x8xf32>
    %90 = arith.truncf %89 : vector<12x8xf32> to vector<12x8xbf16>
    %91 = vector.extract_strided_slice %9 {offsets = [0, 24], sizes = [12, 8], strides = [1, 1]} : vector<12x32xf32> to vector<12x8xf32>
    %92 = arith.truncf %91 : vector<12x8xf32> to vector<12x8xbf16>
    %93 = vector.extract_strided_slice %10 {offsets = [0, 24], sizes = [12, 8], strides = [1, 1]} : vector<12x32xf32> to vector<12x8xf32>
    %94 = arith.truncf %93 : vector<12x8xf32> to vector<12x8xbf16>
    %cst_29 = arith.constant dense<0.000000e+00> : vector<12x12xf32>
    %95 = tpu.matmul %90, %92, %cst_29 {dimension_numbers = #tpu.dot_dimension_numbers<[1], [1], [0], [0], [0, 0, 1, 0], [], []>} : vector<12x8xbf16>, vector<12x8xbf16>, vector<12x12xf32> -> vector<12x12xf32>
    %cst_30 = arith.constant 0.353553385 : f32
    %96 = vector.broadcast %cst_30 : f32 to vector<12x12xf32>
    %97 = arith.mulf %95, %96 : vector<12x12xf32>
    %cst_31 = arith.constant dense<0xFF800000> : vector<12xf32>
    %98 = vector.multi_reduction <maximumf>, %97, %cst_31 [1] : vector<12x12xf32> to vector<12xf32>
    %99 = vector.shape_cast %98 : vector<12xf32> to vector<12x1xf32>
    %100 = vector.broadcast %99 : vector<12x1xf32> to vector<12x12xf32>
    %101 = arith.subf %97, %100 : vector<12x12xf32>
    %102 = math.exp %101 : vector<12x12xf32>
    %cst_32 = arith.constant dense<0.000000e+00> : vector<12xf32>
    %103 = vector.multi_reduction <add>, %102, %cst_32 [1] : vector<12x12xf32> to vector<12xf32>
    %104 = vector.shape_cast %103 : vector<12xf32> to vector<12x1xf32>
    %105 = tpu.reciprocal %104 {approx = true} : vector<12x1xf32> -> vector<12x1xf32>
    %106 = vector.broadcast %105 : vector<12x1xf32> to vector<12x12xf32>
    %107 = arith.mulf %102, %106 : vector<12x12xf32>
    %108 = arith.truncf %107 : vector<12x12xf32> to vector<12x12xbf16>
    %cst_33 = arith.constant dense<0.000000e+00> : vector<12x8xf32>
    %109 = tpu.matmul %108, %94, %cst_33 {dimension_numbers = #tpu.dot_dimension_numbers<[1], [0], [0], [1], [0, 0, 1, 1], [], []>} : vector<12x12xbf16>, vector<12x8xbf16>, vector<12x8xf32> -> vector<12x8xf32>
    %110 = arith.truncf %109 : vector<12x8xf32> to vector<12x8xbf16>
    %111 = vector.extract_strided_slice %11 {offsets = [24, 0], sizes = [8, 32], strides = [1, 1]} : vector<32x32xbf16> to vector<8x32xbf16>
    %cst_34 = arith.constant dense<0.000000e+00> : vector<12x32xf32>
    %112 = tpu.matmul %110, %111, %cst_34 {dimension_numbers = #tpu.dot_dimension_numbers<[1], [0], [0], [1], [0, 0, 1, 1], [], []>} : vector<12x8xbf16>, vector<8x32xbf16>, vector<12x32xf32> -> vector<12x32xf32>
    %113 = arith.addf %88, %112 : vector<12x32xf32>
    %114 = vector.broadcast %12 : vector<1x32xf32> to vector<12x32xf32>
    %115 = arith.addf %113, %114 : vector<12x32xf32>
    %c0_35 = arith.constant 0 : index
    %c0_36 = arith.constant 0 : index
    %c0_37 = arith.constant 0 : index
    %116 = vector.load %arg6[%c0_35, %c0_36, %c0_37] : memref<1x12x32xf32, #tpu.memory_space<vmem>>, vector<1x12x32xf32>
    %117 = vector.shape_cast %116 : vector<1x12x32xf32> to vector<12x32xf32>
    %118 = vector.shape_cast %115 : vector<12x32xf32> to vector<1x12x32xf32>
    tpu.vector_store %arg6[%c0_35, %c0_36, %c0_37], %118 {strides = array<i32>} : memref<1x12x32xf32, #tpu.memory_space<vmem>>, vector<1x12x32xf32>,
    return
  }
  func.func @transform_0(%arg0: i32) -> (i32, i32, i32) {
    %c0_i32 = arith.constant 0 : i32
    %c0_i32_0 = arith.constant 0 : i32
    %c0_i32_1 = arith.constant 0 : i32
    return %arg0, %c0_i32, %c0_i32_0 : i32, i32, i32
  }
  func.func @transform_1(%arg0: i32) -> (i32, i32) {
    %c0_i32 = arith.constant 0 : i32
    %c0_i32_0 = arith.constant 0 : i32
    %c0_i32_1 = arith.constant 0 : i32
    return %c0_i32, %c0_i32_0 : i32, i32
  }
  func.func @transform_2(%arg0: i32) -> (i32, i32) {
    %c0_i32 = arith.constant 0 : i32
    %c0_i32_0 = arith.constant 0 : i32
    %c0_i32_1 = arith.constant 0 : i32
    return %c0_i32, %c0_i32_0 : i32, i32
  }
  func.func @transform_3(%arg0: i32) -> (i32, i32) {
    %c0_i32 = arith.constant 0 : i32
    %c0_i32_0 = arith.constant 0 : i32
    %c0_i32_1 = arith.constant 0 : i32
    return %c0_i32, %c0_i32_0 : i32, i32
  }
  func.func @transform_4(%arg0: i32) -> (i32, i32) {
    %c0_i32 = arith.constant 0 : i32
    %c0_i32_0 = arith.constant 0 : i32
    %c0_i32_1 = arith.constant 0 : i32
    return %c0_i32, %c0_i32_0 : i32, i32
  }
  func.func @transform_5(%arg0: i32) -> (i32, i32, i32) {
    %c0_i32 = arith.constant 0 : i32
    %c0_i32_0 = arith.constant 0 : i32
    %c0_i32_1 = arith.constant 0 : i32
    return %arg0, %c0_i32, %c0_i32_0 : i32, i32, i32
  }
}

module attributes {stable_mosaic.version = 11 : i64} {
  func.func @_mha_self_kernel(%arg0: i32, %arg1: memref<1x8x32xf32, #tpu.memory_space<vmem>>, %arg2: memref<32x96xbf16, #tpu.memory_space<vmem>>, %arg3: memref<1x96xf32, #tpu.memory_space<vmem>>, %arg4: memref<32x32xbf16, #tpu.memory_space<vmem>>, %arg5: memref<1x32xf32, #tpu.memory_space<vmem>>, %arg6: memref<1x8x32xf32, #tpu.memory_space<vmem>>) attributes {dimension_semantics = [#tpu.dimension_semantics<parallel>], iteration_bounds = array<i64: 2>, scalar_prefetch = 0 : i64, scratch_operands = 0 : i64, tpu.core_type = #tpu.core_type<tc>, window_params = [{transform_indices = @transform_0, window_bounds = array<i64: 1, 8, 32>}, {pipeline_mode = #tpu.pipeline_mode<synchronous>, transform_indices = @transform_1, window_bounds = array<i64: 32, 96>}, {pipeline_mode = #tpu.pipeline_mode<synchronous>, transform_indices = @transform_2, window_bounds = array<i64: 1, 96>}, {pipeline_mode = #tpu.pipeline_mode<synchronous>, transform_indices = @transform_3, window_bounds = array<i64: 32, 32>}, {pipeline_mode = #tpu.pipeline_mode<synchronous>, transform_indices = @transform_4, window_bounds = array<i64: 1, 32>}, {transform_indices = @transform_5, window_bounds = array<i64: 1, 8, 32>}]} {
    %c0 = arith.constant 0 : index
    %c0_0 = arith.constant 0 : index
    %c0_1 = arith.constant 0 : index
    %0 = vector.load %arg1[%c0, %c0_0, %c0_1] : memref<1x8x32xf32, #tpu.memory_space<vmem>>, vector<1x8x32xf32>
    %1 = vector.shape_cast %0 : vector<1x8x32xf32> to vector<8x32xf32>
    %2 = arith.truncf %1 : vector<8x32xf32> to vector<8x32xbf16>
    %c0_2 = arith.constant 0 : index
    %c0_3 = arith.constant 0 : index
    %3 = vector.load %arg2[%c0_2, %c0_3] : memref<32x96xbf16, #tpu.memory_space<vmem>>, vector<32x96xbf16>
    %cst = arith.constant dense<0.000000e+00> : vector<8x96xf32>
    %4 = tpu.matmul %2, %3, %cst {dimension_numbers = #tpu.dot_dimension_numbers<[1], [0], [0], [1], [0, 0, 1, 1], [], []>} : vector<8x32xbf16>, vector<32x96xbf16>, vector<8x96xf32> -> vector<8x96xf32>
    %c0_4 = arith.constant 0 : index
    %c0_5 = arith.constant 0 : index
    %5 = vector.load %arg3[%c0_4, %c0_5] : memref<1x96xf32, #tpu.memory_space<vmem>>, vector<1x96xf32>
    %6 = vector.broadcast %5 : vector<1x96xf32> to vector<8x96xf32>
    %7 = arith.addf %4, %6 : vector<8x96xf32>
    %8 = vector.extract_strided_slice %7 {offsets = [0, 0], sizes = [8, 32], strides = [1, 1]} : vector<8x96xf32> to vector<8x32xf32>
    %9 = vector.extract_strided_slice %7 {offsets = [0, 32], sizes = [8, 32], strides = [1, 1]} : vector<8x96xf32> to vector<8x32xf32>
    %10 = vector.extract_strided_slice %7 {offsets = [0, 64], sizes = [8, 32], strides = [1, 1]} : vector<8x96xf32> to vector<8x32xf32>
    %c0_6 = arith.constant 0 : index
    %c0_7 = arith.constant 0 : index
    %11 = vector.load %arg4[%c0_6, %c0_7] : memref<32x32xbf16, #tpu.memory_space<vmem>>, vector<32x32xbf16>
    %c0_8 = arith.constant 0 : index
    %c0_9 = arith.constant 0 : index
    %12 = vector.load %arg5[%c0_8, %c0_9] : memref<1x32xf32, #tpu.memory_space<vmem>>, vector<1x32xf32>
    %13 = tpu.iota {dimensions = array<i32: 0>} : vector<8x8xi32>
    %14 = tpu.iota {dimensions = array<i32: 1>} : vector<8x8xi32>
    %15 = arith.cmpi sle, %14, %13 : vector<8x8xi32>
    %cst_10 = arith.constant 0.000000e+00 : f32
    %cst_11 = arith.constant -1.000000e+30 : f32
    %16 = vector.broadcast %cst_10 : f32 to vector<8x8xf32>
    %17 = vector.broadcast %cst_11 : f32 to vector<8x8xf32>
    %18 = arith.select %15, %16, %17 : vector<8x8xi1>, vector<8x8xf32>
    %cst_12 = arith.constant 0.000000e+00 : f32
    %19 = vector.broadcast %cst_12 : f32 to vector<8x32xf32>
    %20 = vector.extract_strided_slice %8 {offsets = [0, 0], sizes = [8, 8], strides = [1, 1]} : vector<8x32xf32> to vector<8x8xf32>
    %21 = arith.truncf %20 : vector<8x8xf32> to vector<8x8xbf16>
    %22 = vector.extract_strided_slice %9 {offsets = [0, 0], sizes = [8, 8], strides = [1, 1]} : vector<8x32xf32> to vector<8x8xf32>
    %23 = arith.truncf %22 : vector<8x8xf32> to vector<8x8xbf16>
    %24 = vector.extract_strided_slice %10 {offsets = [0, 0], sizes = [8, 8], strides = [1, 1]} : vector<8x32xf32> to vector<8x8xf32>
    %25 = arith.truncf %24 : vector<8x8xf32> to vector<8x8xbf16>
    %cst_13 = arith.constant dense<0.000000e+00> : vector<8x8xf32>
    %26 = tpu.matmul %21, %23, %cst_13 {dimension_numbers = #tpu.dot_dimension_numbers<[1], [1], [0], [0], [0, 0, 1, 0], [], []>} : vector<8x8xbf16>, vector<8x8xbf16>, vector<8x8xf32> -> vector<8x8xf32>
    %cst_14 = arith.constant 0.353553385 : f32
    %27 = vector.broadcast %cst_14 : f32 to vector<8x8xf32>
    %28 = arith.mulf %26, %27 : vector<8x8xf32>
    %29 = arith.addf %28, %18 : vector<8x8xf32>
    %cst_15 = arith.constant dense<0xFF800000> : vector<8xf32>
    %30 = vector.multi_reduction <maximumf>, %29, %cst_15 [1] : vector<8x8xf32> to vector<8xf32>
    %31 = vector.shape_cast %30 : vector<8xf32> to vector<8x1xf32>
    %32 = vector.broadcast %31 : vector<8x1xf32> to vector<8x8xf32>
    %33 = arith.subf %29, %32 : vector<8x8xf32>
    %34 = math.exp %33 : vector<8x8xf32>
    %cst_16 = arith.constant dense<0.000000e+00> : vector<8xf32>
    %35 = vector.multi_reduction <add>, %34, %cst_16 [1] : vector<8x8xf32> to vector<8xf32>
    %36 = vector.shape_cast %35 : vector<8xf32> to vector<8x1xf32>
    %37 = tpu.reciprocal %36 {approx = true} : vector<8x1xf32> -> vector<8x1xf32>
    %38 = vector.broadcast %37 : vector<8x1xf32> to vector<8x8xf32>
    %39 = arith.mulf %34, %38 : vector<8x8xf32>
    %40 = arith.truncf %39 : vector<8x8xf32> to vector<8x8xbf16>
    %cst_17 = arith.constant dense<0.000000e+00> : vector<8x8xf32>
    %41 = tpu.matmul %40, %25, %cst_17 {dimension_numbers = #tpu.dot_dimension_numbers<[1], [0], [0], [1], [0, 0, 1, 1], [], []>} : vector<8x8xbf16>, vector<8x8xbf16>, vector<8x8xf32> -> vector<8x8xf32>
    %42 = arith.truncf %41 : vector<8x8xf32> to vector<8x8xbf16>
    %43 = vector.extract_strided_slice %11 {offsets = [0, 0], sizes = [8, 32], strides = [1, 1]} : vector<32x32xbf16> to vector<8x32xbf16>
    %cst_18 = arith.constant dense<0.000000e+00> : vector<8x32xf32>
    %44 = tpu.matmul %42, %43, %cst_18 {dimension_numbers = #tpu.dot_dimension_numbers<[1], [0], [0], [1], [0, 0, 1, 1], [], []>} : vector<8x8xbf16>, vector<8x32xbf16>, vector<8x32xf32> -> vector<8x32xf32>
    %45 = arith.addf %19, %44 : vector<8x32xf32>
    %46 = vector.extract_strided_slice %8 {offsets = [0, 8], sizes = [8, 8], strides = [1, 1]} : vector<8x32xf32> to vector<8x8xf32>
    %47 = arith.truncf %46 : vector<8x8xf32> to vector<8x8xbf16>
    %48 = vector.extract_strided_slice %9 {offsets = [0, 8], sizes = [8, 8], strides = [1, 1]} : vector<8x32xf32> to vector<8x8xf32>
    %49 = arith.truncf %48 : vector<8x8xf32> to vector<8x8xbf16>
    %50 = vector.extract_strided_slice %10 {offsets = [0, 8], sizes = [8, 8], strides = [1, 1]} : vector<8x32xf32> to vector<8x8xf32>
    %51 = arith.truncf %50 : vector<8x8xf32> to vector<8x8xbf16>
    %cst_19 = arith.constant dense<0.000000e+00> : vector<8x8xf32>
    %52 = tpu.matmul %47, %49, %cst_19 {dimension_numbers = #tpu.dot_dimension_numbers<[1], [1], [0], [0], [0, 0, 1, 0], [], []>} : vector<8x8xbf16>, vector<8x8xbf16>, vector<8x8xf32> -> vector<8x8xf32>
    %cst_20 = arith.constant 0.353553385 : f32
    %53 = vector.broadcast %cst_20 : f32 to vector<8x8xf32>
    %54 = arith.mulf %52, %53 : vector<8x8xf32>
    %55 = arith.addf %54, %18 : vector<8x8xf32>
    %cst_21 = arith.constant dense<0xFF800000> : vector<8xf32>
    %56 = vector.multi_reduction <maximumf>, %55, %cst_21 [1] : vector<8x8xf32> to vector<8xf32>
    %57 = vector.shape_cast %56 : vector<8xf32> to vector<8x1xf32>
    %58 = vector.broadcast %57 : vector<8x1xf32> to vector<8x8xf32>
    %59 = arith.subf %55, %58 : vector<8x8xf32>
    %60 = math.exp %59 : vector<8x8xf32>
    %cst_22 = arith.constant dense<0.000000e+00> : vector<8xf32>
    %61 = vector.multi_reduction <add>, %60, %cst_22 [1] : vector<8x8xf32> to vector<8xf32>
    %62 = vector.shape_cast %61 : vector<8xf32> to vector<8x1xf32>
    %63 = tpu.reciprocal %62 {approx = true} : vector<8x1xf32> -> vector<8x1xf32>
    %64 = vector.broadcast %63 : vector<8x1xf32> to vector<8x8xf32>
    %65 = arith.mulf %60, %64 : vector<8x8xf32>
    %66 = arith.truncf %65 : vector<8x8xf32> to vector<8x8xbf16>
    %cst_23 = arith.constant dense<0.000000e+00> : vector<8x8xf32>
    %67 = tpu.matmul %66, %51, %cst_23 {dimension_numbers = #tpu.dot_dimension_numbers<[1], [0], [0], [1], [0, 0, 1, 1], [], []>} : vector<8x8xbf16>, vector<8x8xbf16>, vector<8x8xf32> -> vector<8x8xf32>
    %68 = arith.truncf %67 : vector<8x8xf32> to vector<8x8xbf16>
    %69 = vector.extract_strided_slice %11 {offsets = [8, 0], sizes = [8, 32], strides = [1, 1]} : vector<32x32xbf16> to vector<8x32xbf16>
    %cst_24 = arith.constant dense<0.000000e+00> : vector<8x32xf32>
    %70 = tpu.matmul %68, %69, %cst_24 {dimension_numbers = #tpu.dot_dimension_numbers<[1], [0], [0], [1], [0, 0, 1, 1], [], []>} : vector<8x8xbf16>, vector<8x32xbf16>, vector<8x32xf32> -> vector<8x32xf32>
    %71 = arith.addf %45, %70 : vector<8x32xf32>
    %72 = vector.extract_strided_slice %8 {offsets = [0, 16], sizes = [8, 8], strides = [1, 1]} : vector<8x32xf32> to vector<8x8xf32>
    %73 = arith.truncf %72 : vector<8x8xf32> to vector<8x8xbf16>
    %74 = vector.extract_strided_slice %9 {offsets = [0, 16], sizes = [8, 8], strides = [1, 1]} : vector<8x32xf32> to vector<8x8xf32>
    %75 = arith.truncf %74 : vector<8x8xf32> to vector<8x8xbf16>
    %76 = vector.extract_strided_slice %10 {offsets = [0, 16], sizes = [8, 8], strides = [1, 1]} : vector<8x32xf32> to vector<8x8xf32>
    %77 = arith.truncf %76 : vector<8x8xf32> to vector<8x8xbf16>
    %cst_25 = arith.constant dense<0.000000e+00> : vector<8x8xf32>
    %78 = tpu.matmul %73, %75, %cst_25 {dimension_numbers = #tpu.dot_dimension_numbers<[1], [1], [0], [0], [0, 0, 1, 0], [], []>} : vector<8x8xbf16>, vector<8x8xbf16>, vector<8x8xf32> -> vector<8x8xf32>
    %cst_26 = arith.constant 0.353553385 : f32
    %79 = vector.broadcast %cst_26 : f32 to vector<8x8xf32>
    %80 = arith.mulf %78, %79 : vector<8x8xf32>
    %81 = arith.addf %80, %18 : vector<8x8xf32>
    %cst_27 = arith.constant dense<0xFF800000> : vector<8xf32>
    %82 = vector.multi_reduction <maximumf>, %81, %cst_27 [1] : vector<8x8xf32> to vector<8xf32>
    %83 = vector.shape_cast %82 : vector<8xf32> to vector<8x1xf32>
    %84 = vector.broadcast %83 : vector<8x1xf32> to vector<8x8xf32>
    %85 = arith.subf %81, %84 : vector<8x8xf32>
    %86 = math.exp %85 : vector<8x8xf32>
    %cst_28 = arith.constant dense<0.000000e+00> : vector<8xf32>
    %87 = vector.multi_reduction <add>, %86, %cst_28 [1] : vector<8x8xf32> to vector<8xf32>
    %88 = vector.shape_cast %87 : vector<8xf32> to vector<8x1xf32>
    %89 = tpu.reciprocal %88 {approx = true} : vector<8x1xf32> -> vector<8x1xf32>
    %90 = vector.broadcast %89 : vector<8x1xf32> to vector<8x8xf32>
    %91 = arith.mulf %86, %90 : vector<8x8xf32>
    %92 = arith.truncf %91 : vector<8x8xf32> to vector<8x8xbf16>
    %cst_29 = arith.constant dense<0.000000e+00> : vector<8x8xf32>
    %93 = tpu.matmul %92, %77, %cst_29 {dimension_numbers = #tpu.dot_dimension_numbers<[1], [0], [0], [1], [0, 0, 1, 1], [], []>} : vector<8x8xbf16>, vector<8x8xbf16>, vector<8x8xf32> -> vector<8x8xf32>
    %94 = arith.truncf %93 : vector<8x8xf32> to vector<8x8xbf16>
    %95 = vector.extract_strided_slice %11 {offsets = [16, 0], sizes = [8, 32], strides = [1, 1]} : vector<32x32xbf16> to vector<8x32xbf16>
    %cst_30 = arith.constant dense<0.000000e+00> : vector<8x32xf32>
    %96 = tpu.matmul %94, %95, %cst_30 {dimension_numbers = #tpu.dot_dimension_numbers<[1], [0], [0], [1], [0, 0, 1, 1], [], []>} : vector<8x8xbf16>, vector<8x32xbf16>, vector<8x32xf32> -> vector<8x32xf32>
    %97 = arith.addf %71, %96 : vector<8x32xf32>
    %98 = vector.extract_strided_slice %8 {offsets = [0, 24], sizes = [8, 8], strides = [1, 1]} : vector<8x32xf32> to vector<8x8xf32>
    %99 = arith.truncf %98 : vector<8x8xf32> to vector<8x8xbf16>
    %100 = vector.extract_strided_slice %9 {offsets = [0, 24], sizes = [8, 8], strides = [1, 1]} : vector<8x32xf32> to vector<8x8xf32>
    %101 = arith.truncf %100 : vector<8x8xf32> to vector<8x8xbf16>
    %102 = vector.extract_strided_slice %10 {offsets = [0, 24], sizes = [8, 8], strides = [1, 1]} : vector<8x32xf32> to vector<8x8xf32>
    %103 = arith.truncf %102 : vector<8x8xf32> to vector<8x8xbf16>
    %cst_31 = arith.constant dense<0.000000e+00> : vector<8x8xf32>
    %104 = tpu.matmul %99, %101, %cst_31 {dimension_numbers = #tpu.dot_dimension_numbers<[1], [1], [0], [0], [0, 0, 1, 0], [], []>} : vector<8x8xbf16>, vector<8x8xbf16>, vector<8x8xf32> -> vector<8x8xf32>
    %cst_32 = arith.constant 0.353553385 : f32
    %105 = vector.broadcast %cst_32 : f32 to vector<8x8xf32>
    %106 = arith.mulf %104, %105 : vector<8x8xf32>
    %107 = arith.addf %106, %18 : vector<8x8xf32>
    %cst_33 = arith.constant dense<0xFF800000> : vector<8xf32>
    %108 = vector.multi_reduction <maximumf>, %107, %cst_33 [1] : vector<8x8xf32> to vector<8xf32>
    %109 = vector.shape_cast %108 : vector<8xf32> to vector<8x1xf32>
    %110 = vector.broadcast %109 : vector<8x1xf32> to vector<8x8xf32>
    %111 = arith.subf %107, %110 : vector<8x8xf32>
    %112 = math.exp %111 : vector<8x8xf32>
    %cst_34 = arith.constant dense<0.000000e+00> : vector<8xf32>
    %113 = vector.multi_reduction <add>, %112, %cst_34 [1] : vector<8x8xf32> to vector<8xf32>
    %114 = vector.shape_cast %113 : vector<8xf32> to vector<8x1xf32>
    %115 = tpu.reciprocal %114 {approx = true} : vector<8x1xf32> -> vector<8x1xf32>
    %116 = vector.broadcast %115 : vector<8x1xf32> to vector<8x8xf32>
    %117 = arith.mulf %112, %116 : vector<8x8xf32>
    %118 = arith.truncf %117 : vector<8x8xf32> to vector<8x8xbf16>
    %cst_35 = arith.constant dense<0.000000e+00> : vector<8x8xf32>
    %119 = tpu.matmul %118, %103, %cst_35 {dimension_numbers = #tpu.dot_dimension_numbers<[1], [0], [0], [1], [0, 0, 1, 1], [], []>} : vector<8x8xbf16>, vector<8x8xbf16>, vector<8x8xf32> -> vector<8x8xf32>
    %120 = arith.truncf %119 : vector<8x8xf32> to vector<8x8xbf16>
    %121 = vector.extract_strided_slice %11 {offsets = [24, 0], sizes = [8, 32], strides = [1, 1]} : vector<32x32xbf16> to vector<8x32xbf16>
    %cst_36 = arith.constant dense<0.000000e+00> : vector<8x32xf32>
    %122 = tpu.matmul %120, %121, %cst_36 {dimension_numbers = #tpu.dot_dimension_numbers<[1], [0], [0], [1], [0, 0, 1, 1], [], []>} : vector<8x8xbf16>, vector<8x32xbf16>, vector<8x32xf32> -> vector<8x32xf32>
    %123 = arith.addf %97, %122 : vector<8x32xf32>
    %124 = vector.broadcast %12 : vector<1x32xf32> to vector<8x32xf32>
    %125 = arith.addf %123, %124 : vector<8x32xf32>
    %c0_37 = arith.constant 0 : index
    %c0_38 = arith.constant 0 : index
    %c0_39 = arith.constant 0 : index
    %126 = vector.load %arg6[%c0_37, %c0_38, %c0_39] : memref<1x8x32xf32, #tpu.memory_space<vmem>>, vector<1x8x32xf32>
    %127 = vector.shape_cast %126 : vector<1x8x32xf32> to vector<8x32xf32>
    %128 = vector.shape_cast %125 : vector<8x32xf32> to vector<1x8x32xf32>
    tpu.vector_store %arg6[%c0_37, %c0_38, %c0_39], %128 {strides = array<i32>} : memref<1x8x32xf32, #tpu.memory_space<vmem>>, vector<1x8x32xf32>,
    return
  }
  func.func @transform_0(%arg0: i32) -> (i32, i32, i32) {
    %c0_i32 = arith.constant 0 : i32
    %c0_i32_0 = arith.constant 0 : i32
    %c0_i32_1 = arith.constant 0 : i32
    return %arg0, %c0_i32, %c0_i32_0 : i32, i32, i32
  }
  func.func @transform_1(%arg0: i32) -> (i32, i32) {
    %c0_i32 = arith.constant 0 : i32
    %c0_i32_0 = arith.constant 0 : i32
    %c0_i32_1 = arith.constant 0 : i32
    return %c0_i32, %c0_i32_0 : i32, i32
  }
  func.func @transform_2(%arg0: i32) -> (i32, i32) {
    %c0_i32 = arith.constant 0 : i32
    %c0_i32_0 = arith.constant 0 : i32
    %c0_i32_1 = arith.constant 0 : i32
    return %c0_i32, %c0_i32_0 : i32, i32
  }
  func.func @transform_3(%arg0: i32) -> (i32, i32) {
    %c0_i32 = arith.constant 0 : i32
    %c0_i32_0 = arith.constant 0 : i32
    %c0_i32_1 = arith.constant 0 : i32
    return %c0_i32, %c0_i32_0 : i32, i32
  }
  func.func @transform_4(%arg0: i32) -> (i32, i32) {
    %c0_i32 = arith.constant 0 : i32
    %c0_i32_0 = arith.constant 0 : i32
    %c0_i32_1 = arith.constant 0 : i32
    return %c0_i32, %c0_i32_0 : i32, i32
  }
  func.func @transform_5(%arg0: i32) -> (i32, i32, i32) {
    %c0_i32 = arith.constant 0 : i32
    %c0_i32_0 = arith.constant 0 : i32
    %c0_i32_1 = arith.constant 0 : i32
    return %arg0, %c0_i32, %c0_i32_0 : i32, i32, i32
  }
}

module attributes {stable_mosaic.version = 11 : i64} {
  func.func @_mha_cross_kernel(%arg0: i32, %arg1: memref<1x8x32xf32, #tpu.memory_space<vmem>>, %arg2: memref<1x12x32xf32, #tpu.memory_space<vmem>>, %arg3: memref<32x32xbf16, #tpu.memory_space<vmem>>, %arg4: memref<1x32xf32, #tpu.memory_space<vmem>>, %arg5: memref<32x64xbf16, #tpu.memory_space<vmem>>, %arg6: memref<1x64xf32, #tpu.memory_space<vmem>>, %arg7: memref<32x32xbf16, #tpu.memory_space<vmem>>, %arg8: memref<1x32xf32, #tpu.memory_space<vmem>>, %arg9: memref<1x8x32xf32, #tpu.memory_space<vmem>>) attributes {dimension_semantics = [#tpu.dimension_semantics<parallel>], iteration_bounds = array<i64: 2>, scalar_prefetch = 0 : i64, scratch_operands = 0 : i64, tpu.core_type = #tpu.core_type<tc>, window_params = [{transform_indices = @transform_0, window_bounds = array<i64: 1, 8, 32>}, {transform_indices = @transform_1, window_bounds = array<i64: 1, 12, 32>}, {pipeline_mode = #tpu.pipeline_mode<synchronous>, transform_indices = @transform_2, window_bounds = array<i64: 32, 32>}, {pipeline_mode = #tpu.pipeline_mode<synchronous>, transform_indices = @transform_3, window_bounds = array<i64: 1, 32>}, {pipeline_mode = #tpu.pipeline_mode<synchronous>, transform_indices = @transform_4, window_bounds = array<i64: 32, 64>}, {pipeline_mode = #tpu.pipeline_mode<synchronous>, transform_indices = @transform_5, window_bounds = array<i64: 1, 64>}, {pipeline_mode = #tpu.pipeline_mode<synchronous>, transform_indices = @transform_6, window_bounds = array<i64: 32, 32>}, {pipeline_mode = #tpu.pipeline_mode<synchronous>, transform_indices = @transform_7, window_bounds = array<i64: 1, 32>}, {transform_indices = @transform_8, window_bounds = array<i64: 1, 8, 32>}]} {
    %c0 = arith.constant 0 : index
    %c0_0 = arith.constant 0 : index
    %c0_1 = arith.constant 0 : index
    %0 = vector.load %arg1[%c0, %c0_0, %c0_1] : memref<1x8x32xf32, #tpu.memory_space<vmem>>, vector<1x8x32xf32>
    %1 = vector.shape_cast %0 : vector<1x8x32xf32> to vector<8x32xf32>
    %2 = arith.truncf %1 : vector<8x32xf32> to vector<8x32xbf16>
    %c0_2 = arith.constant 0 : index
    %c0_3 = arith.constant 0 : index
    %c0_4 = arith.constant 0 : index
    %3 = vector.load %arg2[%c0_2, %c0_3, %c0_4] : memref<1x12x32xf32, #tpu.memory_space<vmem>>, vector<1x12x32xf32>
    %4 = vector.shape_cast %3 : vector<1x12x32xf32> to vector<12x32xf32>
    %5 = arith.truncf %4 : vector<12x32xf32> to vector<12x32xbf16>
    %c0_5 = arith.constant 0 : index
    %c0_6 = arith.constant 0 : index
    %6 = vector.load %arg3[%c0_5, %c0_6] : memref<32x32xbf16, #tpu.memory_space<vmem>>, vector<32x32xbf16>
    %cst = arith.constant dense<0.000000e+00> : vector<8x32xf32>
    %7 = tpu.matmul %2, %6, %cst {dimension_numbers = #tpu.dot_dimension_numbers<[1], [0], [0], [1], [0, 0, 1, 1], [], []>} : vector<8x32xbf16>, vector<32x32xbf16>, vector<8x32xf32> -> vector<8x32xf32>
    %c0_7 = arith.constant 0 : index
    %c0_8 = arith.constant 0 : index
    %8 = vector.load %arg4[%c0_7, %c0_8] : memref<1x32xf32, #tpu.memory_space<vmem>>, vector<1x32xf32>
    %9 = vector.broadcast %8 : vector<1x32xf32> to vector<8x32xf32>
    %10 = arith.addf %7, %9 : vector<8x32xf32>
    %c0_9 = arith.constant 0 : index
    %c0_10 = arith.constant 0 : index
    %11 = vector.load %arg5[%c0_9, %c0_10] : memref<32x64xbf16, #tpu.memory_space<vmem>>, vector<32x64xbf16>
    %cst_11 = arith.constant dense<0.000000e+00> : vector<12x64xf32>
    %12 = tpu.matmul %5, %11, %cst_11 {dimension_numbers = #tpu.dot_dimension_numbers<[1], [0], [0], [1], [0, 0, 1, 1], [], []>} : vector<12x32xbf16>, vector<32x64xbf16>, vector<12x64xf32> -> vector<12x64xf32>
    %c0_12 = arith.constant 0 : index
    %c0_13 = arith.constant 0 : index
    %13 = vector.load %arg6[%c0_12, %c0_13] : memref<1x64xf32, #tpu.memory_space<vmem>>, vector<1x64xf32>
    %14 = vector.broadcast %13 : vector<1x64xf32> to vector<12x64xf32>
    %15 = arith.addf %12, %14 : vector<12x64xf32>
    %16 = vector.extract_strided_slice %15 {offsets = [0, 0], sizes = [12, 32], strides = [1, 1]} : vector<12x64xf32> to vector<12x32xf32>
    %17 = vector.extract_strided_slice %15 {offsets = [0, 32], sizes = [12, 32], strides = [1, 1]} : vector<12x64xf32> to vector<12x32xf32>
    %c0_14 = arith.constant 0 : index
    %c0_15 = arith.constant 0 : index
    %18 = vector.load %arg7[%c0_14, %c0_15] : memref<32x32xbf16, #tpu.memory_space<vmem>>, vector<32x32xbf16>
    %c0_16 = arith.constant 0 : index
    %c0_17 = arith.constant 0 : index
    %19 = vector.load %arg8[%c0_16, %c0_17] : memref<1x32xf32, #tpu.memory_space<vmem>>, vector<1x32xf32>
    %cst_18 = arith.constant 0.000000e+00 : f32
    %20 = vector.broadcast %cst_18 : f32 to vector<8x32xf32>
    %21 = vector.extract_strided_slice %10 {offsets = [0, 0], sizes = [8, 8], strides = [1, 1]} : vector<8x32xf32> to vector<8x8xf32>
    %22 = arith.truncf %21 : vector<8x8xf32> to vector<8x8xbf16>
    %23 = vector.extract_strided_slice %16 {offsets = [0, 0], sizes = [12, 8], strides = [1, 1]} : vector<12x32xf32> to vector<12x8xf32>
    %24 = arith.truncf %23 : vector<12x8xf32> to vector<12x8xbf16>
    %25 = vector.extract_strided_slice %17 {offsets = [0, 0], sizes = [12, 8], strides = [1, 1]} : vector<12x32xf32> to vector<12x8xf32>
    %26 = arith.truncf %25 : vector<12x8xf32> to vector<12x8xbf16>
    %cst_19 = arith.constant dense<0.000000e+00> : vector<8x12xf32>
    %27 = tpu.matmul %22, %24, %cst_19 {dimension_numbers = #tpu.dot_dimension_numbers<[1], [1], [0], [0], [0, 0, 1, 0], [], []>} : vector<8x8xbf16>, vector<12x8xbf16>, vector<8x12xf32> -> vector<8x12xf32>
    %cst_20 = arith.constant 0.353553385 : f32
    %28 = vector.broadcast %cst_20 : f32 to vector<8x12xf32>
    %29 = arith.mulf %27, %28 : vector<8x12xf32>
    %cst_21 = arith.constant dense<0xFF800000> : vector<8xf32>
    %30 = vector.multi_reduction <maximumf>, %29, %cst_21 [1] : vector<8x12xf32> to vector<8xf32>
    %31 = vector.shape_cast %30 : vector<8xf32> to vector<8x1xf32>
    %32 = vector.broadcast %31 : vector<8x1xf32> to vector<8x12xf32>
    %33 = arith.subf %29, %32 : vector<8x12xf32>
    %34 = math.exp %33 : vector<8x12xf32>
    %cst_22 = arith.constant dense<0.000000e+00> : vector<8xf32>
    %35 = vector.multi_reduction <add>, %34, %cst_22 [1] : vector<8x12xf32> to vector<8xf32>
    %36 = vector.shape_cast %35 : vector<8xf32> to vector<8x1xf32>
    %37 = tpu.reciprocal %36 {approx = true} : vector<8x1xf32> -> vector<8x1xf32>
    %38 = vector.broadcast %37 : vector<8x1xf32> to vector<8x12xf32>
    %39 = arith.mulf %34, %38 : vector<8x12xf32>
    %40 = arith.truncf %39 : vector<8x12xf32> to vector<8x12xbf16>
    %cst_23 = arith.constant dense<0.000000e+00> : vector<8x8xf32>
    %41 = tpu.matmul %40, %26, %cst_23 {dimension_numbers = #tpu.dot_dimension_numbers<[1], [0], [0], [1], [0, 0, 1, 1], [], []>} : vector<8x12xbf16>, vector<12x8xbf16>, vector<8x8xf32> -> vector<8x8xf32>
    %42 = arith.truncf %41 : vector<8x8xf32> to vector<8x8xbf16>
    %43 = vector.extract_strided_slice %18 {offsets = [0, 0], sizes = [8, 32], strides = [1, 1]} : vector<32x32xbf16> to vector<8x32xbf16>
    %cst_24 = arith.constant dense<0.000000e+00> : vector<8x32xf32>
    %44 = tpu.matmul %42, %43, %cst_24 {dimension_numbers = #tpu.dot_dimension_numbers<[1], [0], [0], [1], [0, 0, 1, 1], [], []>} : vector<8x8xbf16>, vector<8x32xbf16>, vector<8x32xf32> -> vector<8x32xf32>
    %45 = arith.addf %20, %44 : vector<8x32xf32>
    %46 = vector.extract_strided_slice %10 {offsets = [0, 8], sizes = [8, 8], strides = [1, 1]} : vector<8x32xf32> to vector<8x8xf32>
    %47 = arith.truncf %46 : vector<8x8xf32> to vector<8x8xbf16>
    %48 = vector.extract_strided_slice %16 {offsets = [0, 8], sizes = [12, 8], strides = [1, 1]} : vector<12x32xf32> to vector<12x8xf32>
    %49 = arith.truncf %48 : vector<12x8xf32> to vector<12x8xbf16>
    %50 = vector.extract_strided_slice %17 {offsets = [0, 8], sizes = [12, 8], strides = [1, 1]} : vector<12x32xf32> to vector<12x8xf32>
    %51 = arith.truncf %50 : vector<12x8xf32> to vector<12x8xbf16>
    %cst_25 = arith.constant dense<0.000000e+00> : vector<8x12xf32>
    %52 = tpu.matmul %47, %49, %cst_25 {dimension_numbers = #tpu.dot_dimension_numbers<[1], [1], [0], [0], [0, 0, 1, 0], [], []>} : vector<8x8xbf16>, vector<12x8xbf16>, vector<8x12xf32> -> vector<8x12xf32>
    %cst_26 = arith.constant 0.353553385 : f32
    %53 = vector.broadcast %cst_26 : f32 to vector<8x12xf32>
    %54 = arith.mulf %52, %53 : vector<8x12xf32>
    %cst_27 = arith.constant dense<0xFF800000> : vector<8xf32>
    %55 = vector.multi_reduction <maximumf>, %54, %cst_27 [1] : vector<8x12xf32> to vector<8xf32>
    %56 = vector.shape_cast %55 : vector<8xf32> to vector<8x1xf32>
    %57 = vector.broadcast %56 : vector<8x1xf32> to vector<8x12xf32>
    %58 = arith.subf %54, %57 : vector<8x12xf32>
    %59 = math.exp %58 : vector<8x12xf32>
    %cst_28 = arith.constant dense<0.000000e+00> : vector<8xf32>
    %60 = vector.multi_reduction <add>, %59, %cst_28 [1] : vector<8x12xf32> to vector<8xf32>
    %61 = vector.shape_cast %60 : vector<8xf32> to vector<8x1xf32>
    %62 = tpu.reciprocal %61 {approx = true} : vector<8x1xf32> -> vector<8x1xf32>
    %63 = vector.broadcast %62 : vector<8x1xf32> to vector<8x12xf32>
    %64 = arith.mulf %59, %63 : vector<8x12xf32>
    %65 = arith.truncf %64 : vector<8x12xf32> to vector<8x12xbf16>
    %cst_29 = arith.constant dense<0.000000e+00> : vector<8x8xf32>
    %66 = tpu.matmul %65, %51, %cst_29 {dimension_numbers = #tpu.dot_dimension_numbers<[1], [0], [0], [1], [0, 0, 1, 1], [], []>} : vector<8x12xbf16>, vector<12x8xbf16>, vector<8x8xf32> -> vector<8x8xf32>
    %67 = arith.truncf %66 : vector<8x8xf32> to vector<8x8xbf16>
    %68 = vector.extract_strided_slice %18 {offsets = [8, 0], sizes = [8, 32], strides = [1, 1]} : vector<32x32xbf16> to vector<8x32xbf16>
    %cst_30 = arith.constant dense<0.000000e+00> : vector<8x32xf32>
    %69 = tpu.matmul %67, %68, %cst_30 {dimension_numbers = #tpu.dot_dimension_numbers<[1], [0], [0], [1], [0, 0, 1, 1], [], []>} : vector<8x8xbf16>, vector<8x32xbf16>, vector<8x32xf32> -> vector<8x32xf32>
    %70 = arith.addf %45, %69 : vector<8x32xf32>
    %71 = vector.extract_strided_slice %10 {offsets = [0, 16], sizes = [8, 8], strides = [1, 1]} : vector<8x32xf32> to vector<8x8xf32>
    %72 = arith.truncf %71 : vector<8x8xf32> to vector<8x8xbf16>
    %73 = vector.extract_strided_slice %16 {offsets = [0, 16], sizes = [12, 8], strides = [1, 1]} : vector<12x32xf32> to vector<12x8xf32>
    %74 = arith.truncf %73 : vector<12x8xf32> to vector<12x8xbf16>
    %75 = vector.extract_strided_slice %17 {offsets = [0, 16], sizes = [12, 8], strides = [1, 1]} : vector<12x32xf32> to vector<12x8xf32>
    %76 = arith.truncf %75 : vector<12x8xf32> to vector<12x8xbf16>
    %cst_31 = arith.constant dense<0.000000e+00> : vector<8x12xf32>
    %77 = tpu.matmul %72, %74, %cst_31 {dimension_numbers = #tpu.dot_dimension_numbers<[1], [1], [0], [0], [0, 0, 1, 0], [], []>} : vector<8x8xbf16>, vector<12x8xbf16>, vector<8x12xf32> -> vector<8x12xf32>
    %cst_32 = arith.constant 0.353553385 : f32
    %78 = vector.broadcast %cst_32 : f32 to vector<8x12xf32>
    %79 = arith.mulf %77, %78 : vector<8x12xf32>
    %cst_33 = arith.constant dense<0xFF800000> : vector<8xf32>
    %80 = vector.multi_reduction <maximumf>, %79, %cst_33 [1] : vector<8x12xf32> to vector<8xf32>
    %81 = vector.shape_cast %80 : vector<8xf32> to vector<8x1xf32>
    %82 = vector.broadcast %81 : vector<8x1xf32> to vector<8x12xf32>
    %83 = arith.subf %79, %82 : vector<8x12xf32>
    %84 = math.exp %83 : vector<8x12xf32>
    %cst_34 = arith.constant dense<0.000000e+00> : vector<8xf32>
    %85 = vector.multi_reduction <add>, %84, %cst_34 [1] : vector<8x12xf32> to vector<8xf32>
    %86 = vector.shape_cast %85 : vector<8xf32> to vector<8x1xf32>
    %87 = tpu.reciprocal %86 {approx = true} : vector<8x1xf32> -> vector<8x1xf32>
    %88 = vector.broadcast %87 : vector<8x1xf32> to vector<8x12xf32>
    %89 = arith.mulf %84, %88 : vector<8x12xf32>
    %90 = arith.truncf %89 : vector<8x12xf32> to vector<8x12xbf16>
    %cst_35 = arith.constant dense<0.000000e+00> : vector<8x8xf32>
    %91 = tpu.matmul %90, %76, %cst_35 {dimension_numbers = #tpu.dot_dimension_numbers<[1], [0], [0], [1], [0, 0, 1, 1], [], []>} : vector<8x12xbf16>, vector<12x8xbf16>, vector<8x8xf32> -> vector<8x8xf32>
    %92 = arith.truncf %91 : vector<8x8xf32> to vector<8x8xbf16>
    %93 = vector.extract_strided_slice %18 {offsets = [16, 0], sizes = [8, 32], strides = [1, 1]} : vector<32x32xbf16> to vector<8x32xbf16>
    %cst_36 = arith.constant dense<0.000000e+00> : vector<8x32xf32>
    %94 = tpu.matmul %92, %93, %cst_36 {dimension_numbers = #tpu.dot_dimension_numbers<[1], [0], [0], [1], [0, 0, 1, 1], [], []>} : vector<8x8xbf16>, vector<8x32xbf16>, vector<8x32xf32> -> vector<8x32xf32>
    %95 = arith.addf %70, %94 : vector<8x32xf32>
    %96 = vector.extract_strided_slice %10 {offsets = [0, 24], sizes = [8, 8], strides = [1, 1]} : vector<8x32xf32> to vector<8x8xf32>
    %97 = arith.truncf %96 : vector<8x8xf32> to vector<8x8xbf16>
    %98 = vector.extract_strided_slice %16 {offsets = [0, 24], sizes = [12, 8], strides = [1, 1]} : vector<12x32xf32> to vector<12x8xf32>
    %99 = arith.truncf %98 : vector<12x8xf32> to vector<12x8xbf16>
    %100 = vector.extract_strided_slice %17 {offsets = [0, 24], sizes = [12, 8], strides = [1, 1]} : vector<12x32xf32> to vector<12x8xf32>
    %101 = arith.truncf %100 : vector<12x8xf32> to vector<12x8xbf16>
    %cst_37 = arith.constant dense<0.000000e+00> : vector<8x12xf32>
    %102 = tpu.matmul %97, %99, %cst_37 {dimension_numbers = #tpu.dot_dimension_numbers<[1], [1], [0], [0], [0, 0, 1, 0], [], []>} : vector<8x8xbf16>, vector<12x8xbf16>, vector<8x12xf32> -> vector<8x12xf32>
    %cst_38 = arith.constant 0.353553385 : f32
    %103 = vector.broadcast %cst_38 : f32 to vector<8x12xf32>
    %104 = arith.mulf %102, %103 : vector<8x12xf32>
    %cst_39 = arith.constant dense<0xFF800000> : vector<8xf32>
    %105 = vector.multi_reduction <maximumf>, %104, %cst_39 [1] : vector<8x12xf32> to vector<8xf32>
    %106 = vector.shape_cast %105 : vector<8xf32> to vector<8x1xf32>
    %107 = vector.broadcast %106 : vector<8x1xf32> to vector<8x12xf32>
    %108 = arith.subf %104, %107 : vector<8x12xf32>
    %109 = math.exp %108 : vector<8x12xf32>
    %cst_40 = arith.constant dense<0.000000e+00> : vector<8xf32>
    %110 = vector.multi_reduction <add>, %109, %cst_40 [1] : vector<8x12xf32> to vector<8xf32>
    %111 = vector.shape_cast %110 : vector<8xf32> to vector<8x1xf32>
    %112 = tpu.reciprocal %111 {approx = true} : vector<8x1xf32> -> vector<8x1xf32>
    %113 = vector.broadcast %112 : vector<8x1xf32> to vector<8x12xf32>
    %114 = arith.mulf %109, %113 : vector<8x12xf32>
    %115 = arith.truncf %114 : vector<8x12xf32> to vector<8x12xbf16>
    %cst_41 = arith.constant dense<0.000000e+00> : vector<8x8xf32>
    %116 = tpu.matmul %115, %101, %cst_41 {dimension_numbers = #tpu.dot_dimension_numbers<[1], [0], [0], [1], [0, 0, 1, 1], [], []>} : vector<8x12xbf16>, vector<12x8xbf16>, vector<8x8xf32> -> vector<8x8xf32>
    %117 = arith.truncf %116 : vector<8x8xf32> to vector<8x8xbf16>
    %118 = vector.extract_strided_slice %18 {offsets = [24, 0], sizes = [8, 32], strides = [1, 1]} : vector<32x32xbf16> to vector<8x32xbf16>
    %cst_42 = arith.constant dense<0.000000e+00> : vector<8x32xf32>
    %119 = tpu.matmul %117, %118, %cst_42 {dimension_numbers = #tpu.dot_dimension_numbers<[1], [0], [0], [1], [0, 0, 1, 1], [], []>} : vector<8x8xbf16>, vector<8x32xbf16>, vector<8x32xf32> -> vector<8x32xf32>
    %120 = arith.addf %95, %119 : vector<8x32xf32>
    %121 = vector.broadcast %19 : vector<1x32xf32> to vector<8x32xf32>
    %122 = arith.addf %120, %121 : vector<8x32xf32>
    %c0_43 = arith.constant 0 : index
    %c0_44 = arith.constant 0 : index
    %c0_45 = arith.constant 0 : index
    %123 = vector.load %arg9[%c0_43, %c0_44, %c0_45] : memref<1x8x32xf32, #tpu.memory_space<vmem>>, vector<1x8x32xf32>
    %124 = vector.shape_cast %123 : vector<1x8x32xf32> to vector<8x32xf32>
    %125 = vector.shape_cast %122 : vector<8x32xf32> to vector<1x8x32xf32>
    tpu.vector_store %arg9[%c0_43, %c0_44, %c0_45], %125 {strides = array<i32>} : memref<1x8x32xf32, #tpu.memory_space<vmem>>, vector<1x8x32xf32>,
    return
  }
  func.func @transform_0(%arg0: i32) -> (i32, i32, i32) {
    %c0_i32 = arith.constant 0 : i32
    %c0_i32_0 = arith.constant 0 : i32
    %c0_i32_1 = arith.constant 0 : i32
    return %arg0, %c0_i32, %c0_i32_0 : i32, i32, i32
  }
  func.func @transform_1(%arg0: i32) -> (i32, i32, i32) {
    %c0_i32 = arith.constant 0 : i32
    %c0_i32_0 = arith.constant 0 : i32
    %c0_i32_1 = arith.constant 0 : i32
    return %arg0, %c0_i32, %c0_i32_0 : i32, i32, i32
  }
  func.func @transform_2(%arg0: i32) -> (i32, i32) {
    %c0_i32 = arith.constant 0 : i32
    %c0_i32_0 = arith.constant 0 : i32
    %c0_i32_1 = arith.constant 0 : i32
    return %c0_i32, %c0_i32_0 : i32, i32
  }
  func.func @transform_3(%arg0: i32) -> (i32, i32) {
    %c0_i32 = arith.constant 0 : i32
    %c0_i32_0 = arith.constant 0 : i32
    %c0_i32_1 = arith.constant 0 : i32
    return %c0_i32, %c0_i32_0 : i32, i32
  }
  func.func @transform_4(%arg0: i32) -> (i32, i32) {
    %c0_i32 = arith.constant 0 : i32
    %c0_i32_0 = arith.constant 0 : i32
    %c0_i32_1 = arith.constant 0 : i32
    return %c0_i32, %c0_i32_0 : i32, i32
  }
  func.func @transform_5(%arg0: i32) -> (i32, i32) {
    %c0_i32 = arith.constant 0 : i32
    %c0_i32_0 = arith.constant 0 : i32
    %c0_i32_1 = arith.constant 0 : i32
    return %c0_i32, %c0_i32_0 : i32, i32
  }
  func.func @transform_6(%arg0: i32) -> (i32, i32) {
    %c0_i32 = arith.constant 0 : i32
    %c0_i32_0 = arith.constant 0 : i32
    %c0_i32_1 = arith.constant 0 : i32
    return %c0_i32, %c0_i32_0 : i32, i32
  }
  func.func @transform_7(%arg0: i32) -> (i32, i32) {
    %c0_i32 = arith.constant 0 : i32
    %c0_i32_0 = arith.constant 0 : i32
    %c0_i32_1 = arith.constant 0 : i32
    return %c0_i32, %c0_i32_0 : i32, i32
  }
  func.func @transform_8(%arg0: i32) -> (i32, i32, i32) {
    %c0_i32 = arith.constant 0 : i32
    %c0_i32_0 = arith.constant 0 : i32
    %c0_i32_1 = arith.constant 0 : i32
    return %arg0, %c0_i32, %c0_i32_0 : i32, i32, i32
  }
}

module attributes {stable_mosaic.version = 11 : i64} {
  func.func @_ffn_kernel(%arg0: i32, %arg1: i32, %arg2: memref<16x32xf32, #tpu.memory_space<vmem>>, %arg3: memref<32x64xbf16, #tpu.memory_space<vmem>>, %arg4: memref<1x64xf32, #tpu.memory_space<vmem>>, %arg5: memref<64x32xbf16, #tpu.memory_space<vmem>>, %arg6: memref<1x32xf32, #tpu.memory_space<vmem>>, %arg7: memref<16x32xf32, #tpu.memory_space<vmem>>, %arg8: memref<16x32xf32, #tpu.memory_space<vmem>>) attributes {dimension_semantics = [#tpu.dimension_semantics<parallel>, #tpu.dimension_semantics<arbitrary>], iteration_bounds = array<i64: 1, 1>, scalar_prefetch = 0 : i64, scratch_operands = 1 : i64, tpu.core_type = #tpu.core_type<tc>, window_params = [{transform_indices = @transform_0, window_bounds = array<i64: 16, 32>}, {transform_indices = @transform_1, window_bounds = array<i64: 32, 64>}, {transform_indices = @transform_2, window_bounds = array<i64: 1, 64>}, {transform_indices = @transform_3, window_bounds = array<i64: 64, 32>}, {pipeline_mode = #tpu.pipeline_mode<synchronous>, transform_indices = @transform_4, window_bounds = array<i64: 1, 32>}, {transform_indices = @transform_5, window_bounds = array<i64: 16, 32>}]} {
    %c0_i32 = arith.constant 0 : i32
    %0 = arith.cmpi eq, %arg1, %c0_i32 : i32
    %1 = arith.extui %0 : i1 to i32
    %c0_i32_0 = arith.constant 0 : i32
    %2 = arith.cmpi ne, %1, %c0_i32_0 : i32
    scf.if %2 {
      %cst_16 = arith.constant 0.000000e+00 : f32
      %21 = vector.broadcast %cst_16 : f32 to vector<16x32xf32>
      %c0_17 = arith.constant 0 : index
      %c0_18 = arith.constant 0 : index
      %22 = vector.load %arg8[%c0_17, %c0_18] : memref<16x32xf32, #tpu.memory_space<vmem>>, vector<16x32xf32>
      tpu.vector_store %arg8[%c0_17, %c0_18], %21 {strides = array<i32>} : memref<16x32xf32, #tpu.memory_space<vmem>>, vector<16x32xf32>,
    } else {
    }
    %c0 = arith.constant 0 : index
    %c0_1 = arith.constant 0 : index
    %3 = vector.load %arg2[%c0, %c0_1] : memref<16x32xf32, #tpu.memory_space<vmem>>, vector<16x32xf32>
    %4 = arith.truncf %3 : vector<16x32xf32> to vector<16x32xbf16>
    %c0_2 = arith.constant 0 : index
    %c0_3 = arith.constant 0 : index
    %5 = vector.load %arg3[%c0_2, %c0_3] : memref<32x64xbf16, #tpu.memory_space<vmem>>, vector<32x64xbf16>
    %cst = arith.constant dense<0.000000e+00> : vector<16x64xf32>
    %6 = tpu.matmul %4, %5, %cst {dimension_numbers = #tpu.dot_dimension_numbers<[1], [0], [0], [1], [0, 0, 1, 1], [], []>} : vector<16x32xbf16>, vector<32x64xbf16>, vector<16x64xf32> -> vector<16x64xf32>
    %c0_4 = arith.constant 0 : index
    %c0_5 = arith.constant 0 : index
    %7 = vector.load %arg4[%c0_4, %c0_5] : memref<1x64xf32, #tpu.memory_space<vmem>>, vector<1x64xf32>
    %8 = vector.broadcast %7 : vector<1x64xf32> to vector<16x64xf32>
    %9 = arith.addf %6, %8 : vector<16x64xf32>
    %cst_6 = arith.constant 0.000000e+00 : f32
    %10 = vector.broadcast %cst_6 : f32 to vector<16x64xf32>
    %11 = arith.maximumf %9, %10 : vector<16x64xf32>
    %c0_7 = arith.constant 0 : index
    %c0_8 = arith.constant 0 : index
    %12 = vector.load %arg8[%c0_7, %c0_8] : memref<16x32xf32, #tpu.memory_space<vmem>>, vector<16x32xf32>
    %13 = arith.truncf %11 : vector<16x64xf32> to vector<16x64xbf16>
    %c0_9 = arith.constant 0 : index
    %c0_10 = arith.constant 0 : index
    %14 = vector.load %arg5[%c0_9, %c0_10] : memref<64x32xbf16, #tpu.memory_space<vmem>>, vector<64x32xbf16>
    %cst_11 = arith.constant dense<0.000000e+00> : vector<16x32xf32>
    %15 = tpu.matmul %13, %14, %cst_11 {dimension_numbers = #tpu.dot_dimension_numbers<[1], [0], [0], [1], [0, 0, 1, 1], [], []>} : vector<16x64xbf16>, vector<64x32xbf16>, vector<16x32xf32> -> vector<16x32xf32>
    %16 = arith.addf %12, %15 : vector<16x32xf32>
    %c0_12 = arith.constant 0 : index
    %c0_13 = arith.constant 0 : index
    %17 = vector.load %arg8[%c0_12, %c0_13] : memref<16x32xf32, #tpu.memory_space<vmem>>, vector<16x32xf32>
    tpu.vector_store %arg8[%c0_12, %c0_13], %16 {strides = array<i32>} : memref<16x32xf32, #tpu.memory_space<vmem>>, vector<16x32xf32>,
    %c0_i32_14 = arith.constant 0 : i32
    %18 = arith.cmpi eq, %arg1, %c0_i32_14 : i32
    %19 = arith.extui %18 : i1 to i32
    %c0_i32_15 = arith.constant 0 : i32
    %20 = arith.cmpi ne, %19, %c0_i32_15 : i32
    scf.if %20 {
      %c0_16 = arith.constant 0 : index
      %c0_17 = arith.constant 0 : index
      %21 = vector.load %arg8[%c0_16, %c0_17] : memref<16x32xf32, #tpu.memory_space<vmem>>, vector<16x32xf32>
      %c0_18 = arith.constant 0 : index
      %c0_19 = arith.constant 0 : index
      %22 = vector.load %arg6[%c0_18, %c0_19] : memref<1x32xf32, #tpu.memory_space<vmem>>, vector<1x32xf32>
      %23 = vector.broadcast %22 : vector<1x32xf32> to vector<16x32xf32>
      %24 = arith.addf %21, %23 : vector<16x32xf32>
      %c0_20 = arith.constant 0 : index
      %c0_21 = arith.constant 0 : index
      %25 = vector.load %arg7[%c0_20, %c0_21] : memref<16x32xf32, #tpu.memory_space<vmem>>, vector<16x32xf32>
      tpu.vector_store %arg7[%c0_20, %c0_21], %24 {strides = array<i32>} : memref<16x32xf32, #tpu.memory_space<vmem>>, vector<16x32xf32>,
    } else {
    }
    return
  }
  func.func @transform_0(%arg0: i32, %arg1: i32) -> (i32, i32) {
    %c0_i32 = arith.constant 0 : i32
    %c0_i32_0 = arith.constant 0 : i32
    return %arg0, %c0_i32 : i32, i32
  }
  func.func @transform_1(%arg0: i32, %arg1: i32) -> (i32, i32) {
    %c0_i32 = arith.constant 0 : i32
    %c0_i32_0 = arith.constant 0 : i32
    return %c0_i32, %arg1 : i32, i32
  }
  func.func @transform_2(%arg0: i32, %arg1: i32) -> (i32, i32) {
    %c0_i32 = arith.constant 0 : i32
    %c0_i32_0 = arith.constant 0 : i32
    return %c0_i32, %arg1 : i32, i32
  }
  func.func @transform_3(%arg0: i32, %arg1: i32) -> (i32, i32) {
    %c0_i32 = arith.constant 0 : i32
    %c0_i32_0 = arith.constant 0 : i32
    return %arg1, %c0_i32 : i32, i32
  }
  func.func @transform_4(%arg0: i32, %arg1: i32) -> (i32, i32) {
    %c0_i32 = arith.constant 0 : i32
    %c0_i32_0 = arith.constant 0 : i32
    %c0_i32_1 = arith.constant 0 : i32
    return %c0_i32, %c0_i32_0 : i32, i32
  }
  func.func @transform_5(%arg0: i32, %arg1: i32) -> (i32, i32) {
    %c0_i32 = arith.constant 0 : i32
    %c0_i32_0 = arith.constant 0 : i32
    return %arg0, %c0_i32 : i32, i32
  }
}

module attributes {stable_mosaic.version = 11 : i64} {
  func.func @_logits_softmax_kernel(%arg0: i32, %arg1: memref<16x32xf32, #tpu.memory_space<vmem>>, %arg2: memref<32x50xbf16, #tpu.memory_space<vmem>>, %arg3: memref<16x50xf32, #tpu.memory_space<vmem>>) attributes {dimension_semantics = [#tpu.dimension_semantics<parallel>], iteration_bounds = array<i64: 1>, scalar_prefetch = 0 : i64, scratch_operands = 0 : i64, tpu.core_type = #tpu.core_type<tc>, window_params = [{transform_indices = @transform_0, window_bounds = array<i64: 16, 32>}, {pipeline_mode = #tpu.pipeline_mode<synchronous>, transform_indices = @transform_1, window_bounds = array<i64: 32, 50>}, {transform_indices = @transform_2, window_bounds = array<i64: 16, 50>}]} {
    %c0 = arith.constant 0 : index
    %c0_0 = arith.constant 0 : index
    %0 = vector.load %arg1[%c0, %c0_0] : memref<16x32xf32, #tpu.memory_space<vmem>>, vector<16x32xf32>
    %1 = arith.truncf %0 : vector<16x32xf32> to vector<16x32xbf16>
    %c0_1 = arith.constant 0 : index
    %c0_2 = arith.constant 0 : index
    %2 = vector.load %arg2[%c0_1, %c0_2] : memref<32x50xbf16, #tpu.memory_space<vmem>>, vector<32x50xbf16>
    %cst = arith.constant dense<0.000000e+00> : vector<16x50xf32>
    %3 = tpu.matmul %1, %2, %cst {dimension_numbers = #tpu.dot_dimension_numbers<[1], [0], [0], [1], [0, 0, 1, 1], [], []>} : vector<16x32xbf16>, vector<32x50xbf16>, vector<16x50xf32> -> vector<16x50xf32>
    %cst_3 = arith.constant dense<0xFF800000> : vector<16xf32>
    %4 = vector.multi_reduction <maximumf>, %3, %cst_3 [1] : vector<16x50xf32> to vector<16xf32>
    %5 = vector.shape_cast %4 : vector<16xf32> to vector<16x1xf32>
    %6 = vector.broadcast %5 : vector<16x1xf32> to vector<16x50xf32>
    %7 = arith.subf %3, %6 : vector<16x50xf32>
    %8 = math.exp %7 : vector<16x50xf32>
    %cst_4 = arith.constant dense<0.000000e+00> : vector<16xf32>
    %9 = vector.multi_reduction <add>, %8, %cst_4 [1] : vector<16x50xf32> to vector<16xf32>
    %10 = vector.shape_cast %9 : vector<16xf32> to vector<16x1xf32>
    %11 = vector.broadcast %10 : vector<16x1xf32> to vector<16x50xf32>
    %12 = arith.divf %8, %11 : vector<16x50xf32>
    %c0_5 = arith.constant 0 : index
    %c0_6 = arith.constant 0 : index
    %13 = vector.load %arg3[%c0_5, %c0_6] : memref<16x50xf32, #tpu.memory_space<vmem>>, vector<16x50xf32>
    tpu.vector_store %arg3[%c0_5, %c0_6], %12 {strides = array<i32>} : memref<16x50xf32, #tpu.memory_space<vmem>>, vector<16x50xf32>,
    return
  }
  func.func @transform_0(%arg0: i32) -> (i32, i32) {
    %c0_i32 = arith.constant 0 : i32
    %c0_i32_0 = arith.constant 0 : i32
    return %arg0, %c0_i32 : i32, i32
  }
  func.func @transform_1(%arg0: i32) -> (i32, i32) {
    %c0_i32 = arith.constant 0 : i32
    %c0_i32_0 = arith.constant 0 : i32
    %c0_i32_1 = arith.constant 0 : i32
    return %c0_i32, %c0_i32_0 : i32, i32
  }
  func.func @transform_2(%arg0: i32) -> (i32, i32) {
    %c0_i32 = arith.constant 0 : i32
    %c0_i32_0 = arith.constant 0 : i32
    return %arg0, %c0_i32 : i32, i32
  }
}

</mosaic_0001>

<llo_original>
// kernel: transformer_forward.12
$region0: #{transformer_forward.12}
  #allocation0 [shape = 'u32[]', space=smem, size = 0x4, offset = 0x4, fixed_abs, tag = 'smem constant byte address 0x4 - core index']
  #allocation1 [shape = 'u32[144,128]{1,0:T(1,128)}', space=vmem, size = 0x12000, scoped, tag = 'internal scratch']
  #allocation2 [shape = 'f32[24,32]{1,0:T(8,128)}', space=vmem, size = 0x3000, scoped, tag = 'scratch operand']
  %s0 = inlined_call_operand.vmem [shape: f32[24,32], index: 0, kind: input, shape index: {}]
  %s1 = inlined_call_operand.vmem [shape: bf16[32,64], index: 1, kind: input, shape index: {}]
  %s2 = inlined_call_operand.vmem [shape: f32[1,64], index: 2, kind: input, shape index: {}]
  %s3 = inlined_call_operand.vmem [shape: bf16[64,32], index: 3, kind: input, shape index: {}]
  %s4 = inlined_call_operand.vmem [shape: f32[1,32], index: 4, kind: input, shape index: {}]
  %s5 = inlined_call_operand.vmem [shape: f32[24,32], index: 5, kind: output, shape index: {}]
  %s6 = sld [smem:[#allocation0]]
  $region38: #{transformer_forward.12} parent=0
    _
  %s8 = ssub.s32 1, %s6
  %s9 = scalar_select 0, %s8, %s6
  // Predicated region
  $region2: #{transformer_forward.12} parent=0 // pred_check
    _
  $region3: #{transformer_forward.12} parent=0 // pred_check_branch
    %11 = sbr.rel (0) target = $region5
  $region4: #{transformer_forward.12} parent=0 // pred_region
    _
  $region5: #{transformer_forward.12} parent=0 // pred_fallthru
    _
  // Predicated region
  $region6: #{transformer_forward.12} parent=0 // pred_check
    _
  $region7: #{transformer_forward.12} parent=0 // pred_check_branch
    %13 = sbr.rel (0) target = $region9
  $region8: #{transformer_forward.12} parent=0 // pred_region
    _
  $region9: #{transformer_forward.12} parent=0 // pred_fallthru
    _
  // Predicated region
  $region10: #{transformer_forward.12} parent=0 // pred_check
    _
  $region11: #{transformer_forward.12} parent=0 // pred_check_branch
    %15 = sbr.rel (0) target = $region13
  $region12: #{transformer_forward.12} parent=0 // pred_region
    _
  $region13: #{transformer_forward.12} parent=0 // pred_fallthru
    _
  // Predicated region
  $region14: #{transformer_forward.12} parent=0 // pred_check
    _
  $region15: #{transformer_forward.12} parent=0 // pred_check_branch
    %17 = sbr.rel (0) target = $region17
  $region16: #{transformer_forward.12} parent=0 // pred_region
    _
  $region17: #{transformer_forward.12} parent=0 // pred_fallthru
    _
  // Predicated region
  $region18: #{transformer_forward.12} parent=0 // pred_check
    _
  $region19: #{transformer_forward.12} parent=0 // pred_check_branch
    %19 = sbr.rel (0) target = $region21
  $region20: #{transformer_forward.12} parent=0 // pred_region
    _
  $region21: #{transformer_forward.12} parent=0 // pred_fallthru
    _
  %p21 = scmp.eq.s32.totalorder 0, 0
  // Predicated region
  $region22: #{transformer_forward.12} parent=0 // pred_check
    %p22 = pneg %p21
  $region23: #{transformer_forward.12} parent=0 // pred_check_branch
    %24 = sbr.rel (%p22) target = $region25
  $region24: #{transformer_forward.12} parent=0 // pred_region
    %vm25 = vcmask 261120
    %26 = vst.msk [vmem:[#allocation2] sm:$0xff] %vm25, 0.0
    %27 = vst.msk [vmem:[#allocation2 + $0x8] sm:$0xff] %vm25, 0.0
    %28 = vst.msk [vmem:[#allocation2 + $0x10] sm:$0xff] %vm25, 0.0
  $region25: #{transformer_forward.12} parent=0 // pred_fallthru
    _
  %v29 = vld [vmem:[%s0] sm:$0xff]
  %v30 = vld [vmem:[%s0 + $0x8] sm:$0xff]
  %v31 = vld [vmem:[%s0 + $0x10] sm:$0xff]
  %v32 = vpack.c.bf16 %v30, %v29
  %v33 = vpack.c.bf16 %v31, %v31
  %v34 = vld [vmem:[%s1] sm:$0xf]
  %v35 = vld [vmem:[%s1 + $0x4] sm:$0xf]
  %v36 = vld [vmem:[%s1 + $0x8] sm:$0xf]
  %v37 = vld [vmem:[%s1 + $0xc] sm:$0xf]
  %v38 = vld [vmem:[%s2] sm:$0x1]
  %v40 = vlaneseq
  %v41 = vshrl.u32 %v40, 7
  %v42 = vsub.s32 0, %v41
  %v43 = vrot.slane %v38, %v42
  %v49 = vunpack.c.l.b16 %v34
  %v50 = vunpack.c.l.b16 %v35
  %v51 = vunpack.c.l.b16 %v36
  %v52 = vunpack.c.l.b16 %v37
  %v53 = vpack.c.b16 %v50, %v49
  %v54 = vpack.c.b16 %v52, %v51
  %vm57 = vcmask 261120
  %v59 = vsel %vm57, %v32, 0
  %v62 = vsel %vm57, %v33, 0
  %64 = vmatprep.subr.bf16.mxu0 0
  %65 = vmatpush1.bf16.msra.mxu0 0
  %66 = vmatprep.subr.bf16.mxu0 0
  %67 = vmatpush1.bf16.msra.mxu0 0
  %68 = vmatprep.subr.bf16.mxu0 0
  %69 = vmatpush1.bf16.msra.mxu0 0
  %70 = vmatprep.subr.bf16.mxu0 0
  %71 = vmatpush1.bf16.msra.mxu0 0
  %72 = vmatprep.subr.bf16.mxu0 0
  %73 = vmatpush1.bf16.msra.mxu0 0
  %74 = vmatprep.subr.bf16.mxu0 0
  %75 = vmatpush1.bf16.msra.mxu0 0
  %76 = vmatprep.subr.bf16.mxu0 0
  %77 = vmatpush1.bf16.msra.mxu0 %v54
  %78 = vmatprep.subr.bf16.mxu0 0
  %79 = vmatpush1.bf16.msra.mxu0 %v53
  %80 = vmatprep.subr.bf16.mxu0 0
  %81 = vmatpush2.bf16.msra.mxu0 0
  %82 = vmatprep.subr.bf16.mxu0 0
  %83 = vmatpush2.bf16.msra.mxu0 0
  %84 = vmatprep.subr.bf16.mxu0 0
  %85 = vmatpush2.bf16.msra.mxu0 0
  %86 = vmatprep.subr.bf16.mxu0 0
  %87 = vmatpush2.bf16.msra.mxu0 0
  %88 = vmatprep.subr.bf16.mxu0 0
  %89 = vmatpush2.bf16.msra.mxu0 0
  %90 = vmatprep.subr.bf16.mxu0 0
  %91 = vmatpush2.bf16.msra.mxu0 0
  %92 = vmatprep.subr.bf16.mxu0 0
  %93 = vmatpush2.bf16.msra.mxu0 0
  %94 = vmatprep.subr.bf16.mxu0 0
  %95 = vmatpush2.bf16.msra.mxu0 0
  %96 = vmatprep.mubr.bf16.mxu0 0
  %97 = vmatmul.mubr.bf16.gmra.mxu0 %v59
  %v98 = vpop.f32.mrf.mxu0
  %v99 = vadd.f32 %v43, %v98
  %v100 = vpop.f32.mrf.mxu0
  %v101 = vpop.f32.mrf.mxu0
  %v102 = vadd.f32 %v43, %v101
  %v103 = vpop.f32.mrf.mxu0
  %104 = vmatprep.mubr.bf16.mxu0 0
  %105 = vmatmul.mubr.bf16.gmra.mxu0 %v62
  %v106 = vpop.f32.mrf.mxu0
  %v107 = vadd.f32 %v43, %v106
  %v108 = vpop.f32.mrf.mxu0
  %v109 = vpop.f32.mrf.mxu0
  %v110 = vpop.f32.mrf.mxu0
  %111 = vdwg.mxu0
  %v112 = vmax.f32 %v99, 0.0
  %v113 = vmax.f32 %v102, 0.0
  %v114 = vmax.f32 %v107, 0.0
  %v115 = vld [vmem:[#allocation2] sm:$0xff]
  %v116 = vld [vmem:[#allocation2 + $0x8] sm:$0xff]
  %v117 = vld [vmem:[#allocation2 + $0x10] sm:$0xff]
  %v118 = vpack.c.bf16 %v113, %v112
  %v119 = vpack.c.bf16 %v114, %v114
  %v120 = vld [vmem:[%s3] sm:$0xf]
  %v121 = vld [vmem:[%s3 + $0x4] sm:$0xf]
  %v122 = vld [vmem:[%s3 + $0x8] sm:$0xf]
  %v123 = vld [vmem:[%s3 + $0xc] sm:$0xf]
  %v124 = vld [vmem:[%s3 + $0x10] sm:$0xf]
  %v125 = vld [vmem:[%s3 + $0x14] sm:$0xf]
  %v126 = vld [vmem:[%s3 + $0x18] sm:$0xf]
  %v127 = vld [vmem:[%s3 + $0x1c] sm:$0xf]
  %v136 = vunpack.c.l.b16 %v120
  %v137 = vunpack.c.l.b16 %v121
  %v138 = vunpack.c.l.b16 %v122
  %v139 = vunpack.c.l.b16 %v123
  %v140 = vunpack.c.l.b16 %v124
  %v141 = vunpack.c.l.b16 %v125
  %v142 = vunpack.c.l.b16 %v126
  %v143 = vunpack.c.l.b16 %v127
  %v144 = vpack.c.b16 %v137, %v136
  %v145 = vpack.c.b16 %v139, %v138
  %v146 = vpack.c.b16 %v141, %v140
  %v147 = vpack.c.b16 %v143, %v142
  %vm152 = vcmask 523264
  %v154 = vsel %vm152, %v118, 0
  %v157 = vsel %vm152, %v119, 0
  %159 = vmatprep.subr.bf16.mxu0 0
  %160 = vmatpush1.bf16.msra.mxu0 0
  %161 = vmatprep.subr.bf16.mxu0 0
  %162 = vmatpush1.bf16.msra.mxu0 0
  %163 = vmatprep.subr.bf16.mxu0 0
  %164 = vmatpush1.bf16.msra.mxu0 0
  %165 = vmatprep.subr.bf16.mxu0 0
  %166 = vmatpush1.bf16.msra.mxu0 0
  %167 = vmatprep.subr.bf16.mxu0 0
  %168 = vmatpush1.bf16.msra.mxu0 %v147
  %169 = vmatprep.subr.bf16.mxu0 0
  %170 = vmatpush1.bf16.msra.mxu0 %v146
  %171 = vmatprep.subr.bf16.mxu0 0
  %172 = vmatpush1.bf16.msra.mxu0 %v145
  %173 = vmatprep.subr.bf16.mxu0 0
  %174 = vmatpush1.bf16.msra.mxu0 %v144
  %175 = vmatprep.subr.bf16.mxu0 0
  %176 = vmatpush2.bf16.msra.mxu0 0
  %177 = vmatprep.subr.bf16.mxu0 0
  %178 = vmatpush2.bf16.msra.mxu0 0
  %179 = vmatprep.subr.bf16.mxu0 0
  %180 = vmatpush2.bf16.msra.mxu0 0
  %181 = vmatprep.subr.bf16.mxu0 0
  %182 = vmatpush2.bf16.msra.mxu0 0
  %183 = vmatprep.subr.bf16.mxu0 0
  %184 = vmatpush2.bf16.msra.mxu0 0
  %185 = vmatprep.subr.bf16.mxu0 0
  %186 = vmatpush2.bf16.msra.mxu0 0
  %187 = vmatprep.subr.bf16.mxu0 0
  %188 = vmatpush2.bf16.msra.mxu0 0
  %189 = vmatprep.subr.bf16.mxu0 0
  %190 = vmatpush2.bf16.msra.mxu0 0
  %191 = vmatprep.mubr.bf16.mxu0 0
  %192 = vmatmul.mubr.bf16.gmra.mxu0 %v154
  %v193 = vpop.f32.mrf.mxu0
  %v194 = vadd.f32 0.0, %v193
  %v195 = vpop.f32.mrf.mxu0
  %v196 = vpop.f32.mrf.mxu0
  %v197 = vadd.f32 0.0, %v196
  %v198 = vpop.f32.mrf.mxu0
  %199 = vmatprep.mubr.bf16.mxu0 0
  %200 = vmatmul.mubr.bf16.gmra.mxu0 %v157
  %v201 = vpop.f32.mrf.mxu0
  %v202 = vadd.f32 0.0, %v201
  %v203 = vpop.f32.mrf.mxu0
  %v204 = vpop.f32.mrf.mxu0
  %v205 = vpop.f32.mrf.mxu0
  %206 = vdwg.mxu0
  %v207 = vadd.f32 %v115, %v194
  %v208 = vadd.f32 %v116, %v197
  %v209 = vadd.f32 %v117, %v202
  %210 = vst.msk [vmem:[#allocation2] sm:$0xff] %vm57, %v207
  %211 = vst.msk [vmem:[#allocation2 + $0x8] sm:$0xff] %vm57, %v208
  %212 = vst.msk [vmem:[#allocation2 + $0x10] sm:$0xff] %vm57, %v209
  // Predicated region
  $region26: #{transformer_forward.12} parent=0 // pred_check
    %p213 = pneg %p21
  $region27: #{transformer_forward.12} parent=0 // pred_check_branch
    %215 = sbr.rel (%p213) target = $region29
  $region28: #{transformer_forward.12} parent=0 // pred_region
    %v216 = vld [vmem:[#allocation2] sm:$0xff]
    %v217 = vld [vmem:[#allocation2 + $0x8] sm:$0xff]
    %v218 = vld [vmem:[#allocation2 + $0x10] sm:$0xff]
    %v219 = vld [vmem:[%s4] sm:$0x1]
    %v221 = vlaneseq
    %v222 = vshrl.u32 %v221, 7
    %v223 = vsub.s32 0, %v222
    %v224 = vrot.slane %v219, %v223
    %v226 = vadd.f32 %v216, %v224
    %v227 = vadd.f32 %v217, %v224
    %v228 = vadd.f32 %v218, %v224
    %229 = vst.msk [vmem:[%s5] sm:$0xff] %vm57, %v226
    %230 = vst.msk [vmem:[%s5 + $0x8] sm:$0xff] %vm57, %v227
    %231 = vst.msk [vmem:[%s5 + $0x10] sm:$0xff] %vm57, %v228
  $region29: #{transformer_forward.12} parent=0 // pred_fallthru
    _
  // Predicated region
  $region30: #{transformer_forward.12} parent=0 // pred_check
    _
  $region31: #{transformer_forward.12} parent=0 // pred_check_branch
    %233 = sbr.rel (0) target = $region33
  $region32: #{transformer_forward.12} parent=0 // pred_region
    _
  $region33: #{transformer_forward.12} parent=0 // pred_fallthru
    _
  // Predicated region
  $region34: #{transformer_forward.12} parent=0 // pred_check
    _
  $region35: #{transformer_forward.12} parent=0 // pred_check_branch
    %235 = sbr.rel (0) target = $region37
  $region36: #{transformer_forward.12} parent=0 // pred_region
    _
  $region37: #{transformer_forward.12} parent=0 // pred_fallthru
    _

// kernel: transformer_forward.11
$region0: #{transformer_forward.11}
  #allocation0 [shape = 'u32[]', space=smem, size = 0x4, offset = 0x4, fixed_abs, tag = 'smem constant byte address 0x4 - core index']
  #allocation1 [shape = 'u32[144,128]{1,0:T(1,128)}', space=vmem, size = 0x12000, scoped, tag = 'internal scratch']
  %s0 = inlined_call_operand.vmem [shape: f32[2,12,32], index: 0, kind: input, shape index: {}]
  %s1 = inlined_call_operand.vmem [shape: bf16[32,96], index: 1, kind: input, shape index: {}]
  %s2 = inlined_call_operand.vmem [shape: f32[1,96], index: 2, kind: input, shape index: {}]
  %s3 = inlined_call_operand.vmem [shape: bf16[32,32], index: 3, kind: input, shape index: {}]
  %s4 = inlined_call_operand.vmem [shape: f32[1,32], index: 4, kind: input, shape index: {}]
  %s5 = inlined_call_operand.vmem [shape: f32[2,12,32], index: 5, kind: output, shape index: {}]
  %s6 = sld [smem:[#allocation0]]
  $region53: #{transformer_forward.11} parent=0
    _
  %s8 = ssub.s32 1, %s6
  %s9 = scalar_select 0, %s8, %s6
  loop: start=0, step=1, limit=4
  $region2: #{transformer_forward.11} parent=0 // loop_pre_header
    _
  $region3: #{transformer_forward.11} parent=0 // loop_header
    %s11 = sphi 0, %s15
    %p12 = scmp.ge.s32.totalorder %s11, 4
    %s21 = sphi 0, %s23
    %s24 = sphi 0, %s21
    %s25 = sphi 0, %s24
    %s41 = sphi 0, %s25
    %s45 = sphi 0, %s45
    %s47 = sphi 0, %s45
    %s48 = sphi 0, %s47
    %s62 = sphi 0, %s48
    %s66 = sphi 0, %s66
    %s68 = sphi 0, %s66
    %s69 = sphi 0, %s68
    %s83 = sphi 0, %s69
    %s87 = sphi 0, %s87
    %s89 = sphi 0, %s87
    %s90 = sphi 0, %s89
    %s104 = sphi 0, %s90
    %s108 = sphi 0, %s108
    %s110 = sphi 0, %s108
    %s111 = sphi 0, %s110
    %s125 = sphi 0, %s111
    %s131 = sphi 0, %s133
    %s134 = sphi 0, %s131
    %s135 = sphi 0, %s134
    %s151 = sphi 0, %s135
  $region4: #{transformer_forward.11} parent=0 // loop_header_branch
    %14 = sbr.rel (%p12) target = $region8
  $region5: #{transformer_forward.11} parent=0 // loop_body
    %s16 = ssub.s32 %s11, 1
    %s17 = ssub.s32 %s11, 2
    %s18 = sadd.s32 %s11, 1
    %s19 = ssub.s32 %s11, %s18
    %p20 = scmp.eq.s32.totalorder %s19, 0
    %s22 = sadd.s32 %s21, 1
    %s23 = scalar_select %p20, %s21, %s22
    %p26 = pneg %p20
    %p27 = scmp.eq.s32.totalorder %s11, 1
    %p28 = por %p26, %p27
    %p29 = scmp.ne.s32.totalorder %s21, %s24
    %p30 = scmp.eq.s32.totalorder %s11, 0
    %p31 = por %p29, %p30
    %p32 = scmp.ne.s32.totalorder %s21, %s24
    %p33 = scmp.eq.s32.totalorder %s16, 1
    %p34 = por %p32, %p33
    %p35 = scmp.ne.s32.totalorder %s24, %s25
    %p36 = scmp.eq.s32.totalorder %s16, 0
    %p37 = por %p35, %p36
    %p38 = scmp.ne.s32.totalorder %s24, %s25
    %p39 = scmp.eq.s32.totalorder %s17, 1
    %p40 = por %p38, %p39
    %p42 = scmp.ne.s32.totalorder %s25, %s41
    %p43 = scmp.eq.s32.totalorder %s17, 0
    %p44 = por %p42, %p43
    %s46 = sadd.s32 %s45, 1
    %p49 = scmp.eq.s32.totalorder %s11, 1
    %p50 = scmp.ne.s32.totalorder %s45, %s47
    %p51 = scmp.eq.s32.totalorder %s11, 0
    %p52 = por %p50, %p51
    %p53 = scmp.ne.s32.totalorder %s45, %s47
    %p54 = scmp.eq.s32.totalorder %s16, 1
    %p55 = por %p53, %p54
    %p56 = scmp.ne.s32.totalorder %s47, %s48
    %p57 = scmp.eq.s32.totalorder %s16, 0
    %p58 = por %p56, %p57
    %p59 = scmp.ne.s32.totalorder %s47, %s48
    %p60 = scmp.eq.s32.totalorder %s17, 1
    %p61 = por %p59, %p60
    %p63 = scmp.ne.s32.totalorder %s48, %s62
    %p64 = scmp.eq.s32.totalorder %s17, 0
    %p65 = por %p63, %p64
    %s67 = sadd.s32 %s66, 1
    %p70 = scmp.eq.s32.totalorder %s11, 1
    %p71 = scmp.ne.s32.totalorder %s66, %s68
    %p72 = scmp.eq.s32.totalorder %s11, 0
    %p73 = por %p71, %p72
    %p74 = scmp.ne.s32.totalorder %s66, %s68
    %p75 = scmp.eq.s32.totalorder %s16, 1
    %p76 = por %p74, %p75
    %p77 = scmp.ne.s32.totalorder %s68, %s69
    %p78 = scmp.eq.s32.totalorder %s16, 0
    %p79 = por %p77, %p78
    %p80 = scmp.ne.s32.totalorder %s68, %s69
    %p81 = scmp.eq.s32.totalorder %s17, 1
    %p82 = por %p80, %p81
    %p84 = scmp.ne.s32.totalorder %s69, %s83
    %p85 = scmp.eq.s32.totalorder %s17, 0
    %p86 = por %p84, %p85
    %s88 = sadd.s32 %s87, 1
    %p91 = scmp.eq.s32.totalorder %s11, 1
    %p92 = scmp.ne.s32.totalorder %s87, %s89
    %p93 = scmp.eq.s32.totalorder %s11, 0
    %p94 = por %p92, %p93
    %p95 = scmp.ne.s32.totalorder %s87, %s89
    %p96 = scmp.eq.s32.totalorder %s16, 1
    %p97 = por %p95, %p96
    %p98 = scmp.ne.s32.totalorder %s89, %s90
    %p99 = scmp.eq.s32.totalorder %s16, 0
    %p100 = por %p98, %p99
    %p101 = scmp.ne.s32.totalorder %s89, %s90
    %p102 = scmp.eq.s32.totalorder %s17, 1
    %p103 = por %p101, %p102
    %p105 = scmp.ne.s32.totalorder %s90, %s104
    %p106 = scmp.eq.s32.totalorder %s17, 0
    %p107 = por %p105, %p106
    %s109 = sadd.s32 %s108, 1
    %p112 = scmp.eq.s32.totalorder %s11, 1
    %p113 = scmp.ne.s32.totalorder %s108, %s110
    %p114 = scmp.eq.s32.totalorder %s11, 0
    %p115 = por %p113, %p114
    %p116 = scmp.ne.s32.totalorder %s108, %s110
    %p117 = scmp.eq.s32.totalorder %s16, 1
    %p118 = por %p116, %p117
    %p119 = scmp.ne.s32.totalorder %s110, %s111
    %p120 = scmp.eq.s32.totalorder %s16, 0
    %p121 = por %p119, %p120
    %p122 = scmp.ne.s32.totalorder %s110, %s111
    %p123 = scmp.eq.s32.totalorder %s17, 1
    %p124 = por %p122, %p123
    %p126 = scmp.ne.s32.totalorder %s111, %s125
    %p127 = scmp.eq.s32.totalorder %s17, 0
    %p128 = por %p126, %p127
    %s129 = ssub.s32 %s11, %s18
    %p130 = scmp.eq.s32.totalorder %s129, 0
    %s132 = sadd.s32 %s131, 1
    %s133 = scalar_select %p130, %s131, %s132
    %p136 = pneg %p130
    %p137 = scmp.eq.s32.totalorder %s11, 1
    %p138 = por %p136, %p137
    %p139 = scmp.ne.s32.totalorder %s131, %s134
    %p140 = scmp.eq.s32.totalorder %s11, 0
    %p141 = por %p139, %p140
    %p142 = scmp.ne.s32.totalorder %s131, %s134
    %p143 = scmp.eq.s32.totalorder %s16, 1
    %p144 = por %p142, %p143
    %p145 = scmp.ne.s32.totalorder %s134, %s135
    %p146 = scmp.eq.s32.totalorder %s16, 0
    %p147 = por %p145, %p146
    %p148 = scmp.ne.s32.totalorder %s134, %s135
    %p149 = scmp.eq.s32.totalorder %s17, 1
    %p150 = por %p148, %p149
    %p152 = scmp.ne.s32.totalorder %s135, %s151
    %p153 = scmp.eq.s32.totalorder %s17, 0
    %p154 = por %p152, %p153
    %p155 = scmp.le.s32.totalorder 1, %s11
    %p156 = scmp.lt.s32.totalorder %s11, 3
    %p157 = pnand %p155, %p156
    %p158 = pneg %p157
    // Predicated region
    $region9: #{transformer_forward.11} parent=5 // pred_check
      _
    $region10: #{transformer_forward.11} parent=5 // pred_check_branch
      %160 = sbr.rel (%p157) target = $region12
    $region11: #{transformer_forward.11} parent=5 // pred_region
      %s161 = ssub.s32 %s11, 1
      // Predicated region
      $region13: #{transformer_forward.11} parent=11 // pred_check
        %p162 = pneg %p58
      $region14: #{transformer_forward.11} parent=11 // pred_check_branch
        %164 = sbr.rel (%p162) target = $region16
      $region15: #{transformer_forward.11} parent=11 // pred_region
        _
      $region16: #{transformer_forward.11} parent=11 // pred_fallthru
        _
      // Predicated region
      $region17: #{transformer_forward.11} parent=11 // pred_check
        %p165 = pneg %p79
      $region18: #{transformer_forward.11} parent=11 // pred_check_branch
        %167 = sbr.rel (%p165) target = $region20
      $region19: #{transformer_forward.11} parent=11 // pred_region
        _
      $region20: #{transformer_forward.11} parent=11 // pred_fallthru
        _
      // Predicated region
      $region21: #{transformer_forward.11} parent=11 // pred_check
        %p168 = pneg %p100
      $region22: #{transformer_forward.11} parent=11 // pred_check_branch
        %170 = sbr.rel (%p168) target = $region24
      $region23: #{transformer_forward.11} parent=11 // pred_region
        _
      $region24: #{transformer_forward.11} parent=11 // pred_fallthru
        _
      // Predicated region
      $region25: #{transformer_forward.11} parent=11 // pred_check
        %p171 = pneg %p121
      $region26: #{transformer_forward.11} parent=11 // pred_check_branch
        %173 = sbr.rel (%p171) target = $region28
      $region27: #{transformer_forward.11} parent=11 // pred_region
        _
      $region28: #{transformer_forward.11} parent=11 // pred_fallthru
        _
    $region12: #{transformer_forward.11} parent=5 // pred_fallthru
      _
    %p174 = scmp.lt.s32.totalorder %s11, 2
    // Predicated region
    $region29: #{transformer_forward.11} parent=5 // pred_check
      %p175 = pneg %p174
    $region30: #{transformer_forward.11} parent=5 // pred_check_branch
      %177 = sbr.rel (%p175) target = $region32
    $region31: #{transformer_forward.11} parent=5 // pred_region
      // Predicated region
      $region33: #{transformer_forward.11} parent=31 // pred_check
        %p178 = pneg %p31
      $region34: #{transformer_forward.11} parent=31 // pred_check_branch
        %180 = sbr.rel (%p178) target = $region36
      $region35: #{transformer_forward.11} parent=31 // pred_region
        %p181 = scmp.lt.s32.totalorder %s11, 1
        %s182 = scalar_select %p181, %s11, 1
        %s183 = smul.addr %s182, 2
        %s184 = smul.addr %s183, 8
        %s185 = scalar_lea.vmem %s0, %s184
      $region36: #{transformer_forward.11} parent=31 // pred_fallthru
        _
    $region32: #{transformer_forward.11} parent=5 // pred_fallthru
      _
    %p186 = scmp.le.s32.totalorder 1, %s11
    %p187 = scmp.lt.s32.totalorder %s11, 3
    %p188 = pnand %p186, %p187
    %p189 = pneg %p188
    // Predicated region
    $region37: #{transformer_forward.11} parent=5 // pred_check
      _
    $region38: #{transformer_forward.11} parent=5 // pred_check_branch
      %191 = sbr.rel (%p188) target = $region40
    $region39: #{transformer_forward.11} parent=5 // pred_region
      %s192 = ssub.s32 %s11, 1
      %p193 = scmp.lt.s32.totalorder %s16, 1
      %s194 = scalar_select %p193, %s16, 1
      %s195 = smul.addr %s194, 2
      %s196 = smul.addr %s195, 8
      %s197 = scalar_lea.vmem %s0, %s196
      %p198 = pneg %p37
      %p199 = pneg %p34
      %p200 = pneg %p58
      %p201 = pneg %p55
      %p202 = pneg %p79
      %p203 = pneg %p76
      %p204 = pneg %p100
      %p205 = pneg %p97
      %p206 = pneg %p121
      %p207 = pneg %p118
      %p208 = pneg %p147
      %p209 = pneg %p144
      %p210 = scmp.lt.s32.totalorder %s16, 1
      %s211 = scalar_select %p210, %s16, 1
      %s212 = smul.addr %s211, 2
      %s213 = smul.addr %s212, 8
      %s214 = scalar_lea.vmem %s5, %s213
      %p215 = scmp.lt.s32.totalorder %s16, 1
      %s216 = scalar_select %p215, %s16, 1
      %s217 = smul.addr %s216, 2
      %s218 = smul.addr %s217, 8
      %s219 = scalar_lea.vmem %s0, %s218
      %p220 = scmp.lt.s32.totalorder %s16, 1
      %s221 = scalar_select %p220, %s16, 1
      %s222 = smul.addr %s221, 2
      %s223 = smul.addr %s222, 8
      %s224 = scalar_lea.vmem %s5, %s223
      %v226 = vld [vmem:[%s219] sm:$0xff]
      %v227 = vld [vmem:[%s219 + $0x8] sm:$0xf]
      %v228 = vpack.c.bf16 %v227, %v226
      %v229 = vld [vmem:[%s1] sm:$0xf]
      %v230 = vld [vmem:[%s1 + $0x4] sm:$0xf]
      %v231 = vld [vmem:[%s1 + $0x8] sm:$0xf]
      %v232 = vld [vmem:[%s1 + $0xc] sm:$0xf]
      %v233 = vld [vmem:[%s2] sm:$0x1]
      %v235 = vlaneseq
      %v236 = vshrl.u32 %v235, 7
      %v237 = vsub.s32 0, %v236
      %v238 = vrot.slane %v233, %v237
      %v244 = vunpack.c.l.b16 %v229
      %v245 = vunpack.c.l.b16 %v230
      %v246 = vunpack.c.l.b16 %v231
      %v247 = vunpack.c.l.b16 %v232
      %v248 = vpack.c.b16 %v245, %v244
      %v249 = vpack.c.b16 %v247, %v246
      %vm252 = vcmask 261120
      %v254 = vsel %vm252, %v228, 0
      %256 = vmatprep.subr.bf16.mxu0 0
      %257 = vmatpush1.bf16.msra.mxu0 0
      %258 = vmatprep.subr.bf16.mxu0 0
      %259 = vmatpush1.bf16.msra.mxu0 0
      %260 = vmatprep.subr.bf16.mxu0 0
      %261 = vmatpush1.bf16.msra.mxu0 0
      %262 = vmatprep.subr.bf16.mxu0 0
      %263 = vmatpush1.bf16.msra.mxu0 0
      %264 = vmatprep.subr.bf16.mxu0 0
      %265 = vmatpush1.bf16.msra.mxu0 0
      %266 = vmatprep.subr.bf16.mxu0 0
      %267 = vmatpush1.bf16.msra.mxu0 0
      %268 = vmatprep.subr.bf16.mxu0 0
      %269 = vmatpush1.bf16.msra.mxu0 %v249
      %270 = vmatprep.subr.bf16.mxu0 0
      %271 = vmatpush1.bf16.msra.mxu0 %v248
      %272 = vmatprep.subr.bf16.mxu0 0
      %273 = vmatpush2.bf16.msra.mxu0 0
      %274 = vmatprep.subr.bf16.mxu0 0
      %275 = vmatpush2.bf16.msra.mxu0 0
      %276 = vmatprep.subr.bf16.mxu0 0
      %277 = vmatpush2.bf16.msra.mxu0 0
      %278 = vmatprep.subr.bf16.mxu0 0
      %279 = vmatpush2.bf16.msra.mxu0 0
      %280 = vmatprep.subr.bf16.mxu0 0
      %281 = vmatpush2.bf16.msra.mxu0 0
      %282 = vmatprep.subr.bf16.mxu0 0
      %283 = vmatpush2.bf16.msra.mxu0 0
      %284 = vmatprep.subr.bf16.mxu0 0
      %285 = vmatpush2.bf16.msra.mxu0 0
      %286 = vmatprep.subr.bf16.mxu0 0
      %287 = vmatpush2.bf16.msra.mxu0 0
      %288 = vmatprep.mubr.bf16.mxu0 0
      %289 = vmatmul.mubr.bf16.gmra.mxu0 %v254
      %v290 = vpop.f32.mrf.mxu0
      %v291 = vadd.f32 %v238, %v290
      %v292 = vpop.f32.mrf.mxu0
      %v293 = vpop.f32.mrf.mxu0
      %v294 = vadd.f32 %v238, %v293
      %v295 = vpop.f32.mrf.mxu0
      %296 = vdwg.mxu0
      %v297 = vld [vmem:[%s3] sm:$0xf]
      %v298 = vld [vmem:[%s3 + $0x4] sm:$0xf]
      %v299 = vld [vmem:[%s3 + $0x8] sm:$0xf]
      %v300 = vld [vmem:[%s3 + $0xc] sm:$0xf]
      %v301 = vld [vmem:[%s4] sm:$0x1]
      %v302 = vpack.c.bf16 %v294, %v291
      %304 = vrot.lane.b32.xlu0 %v302, 96
      %v305 = vpop.permute.xlu0 %304
      %vm306 = vcmask 64512
      %v308 = vsel %vm306, %v302, 0
      %v311 = vsel %vm306, %v305, 0
      %313 = vmatprep.subr.bf16.mxu0 0
      %314 = vmatpush1.bf16.xpose.msra.mxu0 0
      %315 = vmatprep.subr.bf16.mxu0 0
      %316 = vmatpush1.bf16.xpose.msra.mxu0 0
      %317 = vmatprep.subr.bf16.mxu0 0
      %318 = vmatpush1.bf16.xpose.msra.mxu0 0
      %319 = vmatprep.subr.bf16.mxu0 0
      %320 = vmatpush1.bf16.xpose.msra.mxu0 0
      %321 = vmatprep.subr.bf16.mxu0 0
      %322 = vmatpush1.bf16.xpose.msra.mxu0 0
      %323 = vmatprep.subr.bf16.mxu0 0
      %324 = vmatpush1.bf16.xpose.msra.mxu0 0
      %325 = vmatprep.subr.bf16.mxu0 0
      %326 = vmatpush1.bf16.xpose.msra.mxu0 0
      %327 = vmatprep.subr.bf16.mxu0 0
      %328 = vmatpush1.bf16.xpose.msra.mxu0 %v311
      %329 = vmatprep.subr.bf16.mxu0 0
      %330 = vmatpush2.bf16.xpose.msra.mxu0 0
      %331 = vmatprep.subr.bf16.mxu0 0
      %332 = vmatpush2.bf16.xpose.msra.mxu0 0
      %333 = vmatprep.subr.bf16.mxu0 0
      %334 = vmatpush2.bf16.xpose.msra.mxu0 0
      %335 = vmatprep.subr.bf16.mxu0 0
      %336 = vmatpush2.bf16.xpose.msra.mxu0 0
      %337 = vmatprep.subr.bf16.mxu0 0
      %338 = vmatpush2.bf16.xpose.msra.mxu0 0
      %339 = vmatprep.subr.bf16.mxu0 0
      %340 = vmatpush2.bf16.xpose.msra.mxu0 0
      %341 = vmatprep.subr.bf16.mxu0 0
      %342 = vmatpush2.bf16.xpose.msra.mxu0 0
      %343 = vmatprep.subr.bf16.mxu0 0
      %344 = vmatpush2.bf16.xpose.msra.mxu0 0
      %345 = vmatprep.mubr.bf16.mxu0 0
      %346 = vmatmul.mubr.bf16.gmra.mxu0 %v308
      %v347 = vpop.f32.mrf.mxu0
      %v348 = vadd.f32 0.0, %v347
      %v349 = vpop.f32.mrf.mxu0
      %v350 = vpop.f32.mrf.mxu0
      %v351 = vadd.f32 0.0, %v350
      %v352 = vpop.f32.mrf.mxu0
      %353 = vdwg.mxu0
      %v354 = vmul.f32 %v348, 0.35355338
      %v355 = vmul.f32 %v351, 0.35355338
      %vm356 = vcmask 97280
      %v357 = vsel %vm356, %v354, -inf
      %358 = vmax.xlane.f32.xlu0 %v357
      %v359 = vpop.xlane.xlu0 %358
      %vm360 = vcmask 93184
      %v361 = vsel %vm360, %v355, -inf
      %362 = vmax.xlane.f32.xlu0 %v361
      %v363 = vpop.xlane.xlu0 %362
      %v364 = vsub.f32 %v354, %v359
      %v365 = vsub.f32 %v355, %v363
      %v366 = vmul.f32 %v364, 1.442695
      %v367 = vpow.pop %v366
      %v368 = vmul.f32 %v365, 1.442695
      %v369 = vpow.pop %v368
      %v370 = vsel %vm356, %v367, 0.0
      %371 = vadd.xlane.f32.xlu0 %v370
      %v372 = vpop.xlane.xlu0 %371
      %v373 = vsel %vm360, %v369, 0.0
      %374 = vadd.xlane.f32.xlu0 %v373
      %v375 = vpop.xlane.xlu0 %374
      %v376 = vrcp.pop %v372
      %v377 = vrcp.pop %v375
      %v378 = vmul.f32 %v367, %v376
      %v379 = vmul.f32 %v369, %v377
      %v380 = vpack.c.bf16 %v379, %v378
      %381 = vrot.lane.b32.xlu0 %v302, 64
      %v382 = vpop.permute.xlu0 %381
      %v384 = vsel %vm356, %v380, 0
      %vm386 = vcmask 1045504
      %v388 = vsel %vm386, %v382, 0
      %390 = vmatprep.subr.bf16.mxu0 0
      %391 = vmatpush1.bf16.msra.mxu0 0
      %392 = vmatprep.subr.bf16.mxu0 0
      %393 = vmatpush1.bf16.msra.mxu0 0
      %394 = vmatprep.subr.bf16.mxu0 0
      %395 = vmatpush1.bf16.msra.mxu0 0
      %396 = vmatprep.subr.bf16.mxu0 0
      %397 = vmatpush1.bf16.msra.mxu0 0
      %398 = vmatprep.subr.bf16.mxu0 0
      %399 = vmatpush1.bf16.msra.mxu0 0
      %400 = vmatprep.subr.bf16.mxu0 0
      %401 = vmatpush1.bf16.msra.mxu0 0
      %402 = vmatprep.subr.bf16.mxu0 0
      %403 = vmatpush1.bf16.msra.mxu0 0
      %404 = vmatprep.subr.bf16.mxu0 0
      %405 = vmatpush1.bf16.msra.mxu0 %v388
      %406 = vmatprep.subr.bf16.mxu0 0
      %407 = vmatpush2.bf16.msra.mxu0 0
      %408 = vmatprep.subr.bf16.mxu0 0
      %409 = vmatpush2.bf16.msra.mxu0 0
      %410 = vmatprep.subr.bf16.mxu0 0
      %411 = vmatpush2.bf16.msra.mxu0 0
      %412 = vmatprep.subr.bf16.mxu0 0
      %413 = vmatpush2.bf16.msra.mxu0 0
      %414 = vmatprep.subr.bf16.mxu0 0
      %415 = vmatpush2.bf16.msra.mxu0 0
      %416 = vmatprep.subr.bf16.mxu0 0
      %417 = vmatpush2.bf16.msra.mxu0 0
      %418 = vmatprep.subr.bf16.mxu0 0
      %419 = vmatpush2.bf16.msra.mxu0 0
      %420 = vmatprep.subr.bf16.mxu0 0
      %421 = vmatpush2.bf16.msra.mxu0 0
      %422 = vmatprep.mubr.bf16.mxu0 0
      %423 = vmatmul.mubr.bf16.gmra.mxu0 %v384
      %v424 = vpop.f32.mrf.mxu0
      %v425 = vadd.f32 0.0, %v424
      %v426 = vpop.f32.mrf.mxu0
      %v427 = vpop.f32.mrf.mxu0
      %v428 = vadd.f32 0.0, %v427
      %v429 = vpop.f32.mrf.mxu0
      %430 = vdwg.mxu0
      %v431 = vpack.c.bf16 %v428, %v425
      %432 = vrot.lane.b32.xlu0 %v302, 120
      %v433 = vpop.permute.xlu0 %432
      %434 = vrot.lane.b32.xlu0 %v302, 88
      %v435 = vpop.permute.xlu0 %434
      %v437 = vsel %vm306, %v433, 0
      %v440 = vsel %vm306, %v435, 0
      %442 = vmatprep.subr.bf16.mxu0 0
      %443 = vmatpush1.bf16.xpose.msra.mxu0 0
      %444 = vmatprep.subr.bf16.mxu0 0
      %445 = vmatpush1.bf16.xpose.msra.mxu0 0
      %446 = vmatprep.subr.bf16.mxu0 0
      %447 = vmatpush1.bf16.xpose.msra.mxu0 0
      %448 = vmatprep.subr.bf16.mxu0 0
      %449 = vmatpush1.bf16.xpose.msra.mxu0 0
      %450 = vmatprep.subr.bf16.mxu0 0
      %451 = vmatpush1.bf16.xpose.msra.mxu0 0
      %452 = vmatprep.subr.bf16.mxu0 0
      %453 = vmatpush1.bf16.xpose.msra.mxu0 0
      %454 = vmatprep.subr.bf16.mxu0 0
      %455 = vmatpush1.bf16.xpose.msra.mxu0 0
      %456 = vmatprep.subr.bf16.mxu0 0
      %457 = vmatpush1.bf16.xpose.msra.mxu0 %v440
      %458 = vmatprep.subr.bf16.mxu0 0
      %459 = vmatpush2.bf16.xpose.msra.mxu0 0
      %460 = vmatprep.subr.bf16.mxu0 0
      %461 = vmatpush2.bf16.xpose.msra.mxu0 0
      %462 = vmatprep.subr.bf16.mxu0 0
      %463 = vmatpush2.bf16.xpose.msra.mxu0 0
      %464 = vmatprep.subr.bf16.mxu0 0
      %465 = vmatpush2.bf16.xpose.msra.mxu0 0
      %466 = vmatprep.subr.bf16.mxu0 0
      %467 = vmatpush2.bf16.xpose.msra.mxu0 0
      %468 = vmatprep.subr.bf16.mxu0 0
      %469 = vmatpush2.bf16.xpose.msra.mxu0 0
      %470 = vmatprep.subr.bf16.mxu0 0
      %471 = vmatpush2.bf16.xpose.msra.mxu0 0
      %472 = vmatprep.subr.bf16.mxu0 0
      %473 = vmatpush2.bf16.xpose.msra.mxu0 0
      %474 = vmatprep.mubr.bf16.mxu0 0
      %475 = vmatmul.mubr.bf16.gmra.mxu0 %v437
      %v476 = vpop.f32.mrf.mxu0
      %v477 = vadd.f32 0.0, %v476
      %v478 = vpop.f32.mrf.mxu0
      %v479 = vpop.f32.mrf.mxu0
      %v480 = vadd.f32 0.0, %v479
      %v481 = vpop.f32.mrf.mxu0
      %482 = vdwg.mxu0
      %v483 = vmul.f32 %v477, 0.35355338
      %v484 = vmul.f32 %v480, 0.35355338
      %v485 = vsel %vm356, %v483, -inf
      %486 = vmax.xlane.f32.xlu0 %v485
      %v487 = vpop.xlane.xlu0 %486
      %v488 = vsel %vm360, %v484, -inf
      %489 = vmax.xlane.f32.xlu0 %v488
      %v490 = vpop.xlane.xlu0 %489
      %v491 = vsub.f32 %v483, %v487
      %v492 = vsub.f32 %v484, %v490
      %v493 = vmul.f32 %v491, 1.442695
      %v494 = vpow.pop %v493
      %v495 = vmul.f32 %v492, 1.442695
      %v496 = vpow.pop %v495
      %v497 = vsel %vm356, %v494, 0.0
      %498 = vadd.xlane.f32.xlu0 %v497
      %v499 = vpop.xlane.xlu0 %498
      %v500 = vsel %vm360, %v496, 0.0
      %501 = vadd.xlane.f32.xlu0 %v500
      %v502 = vpop.xlane.xlu0 %501
      %v503 = vrcp.pop %v499
      %v504 = vrcp.pop %v502
      %v505 = vmul.f32 %v494, %v503
      %v506 = vmul.f32 %v496, %v504
      %v507 = vpack.c.bf16 %v506, %v505
      %508 = vrot.lane.b32.xlu0 %v302, 56
      %v509 = vpop.permute.xlu0 %508
      %v511 = vsel %vm356, %v507, 0
      %v514 = vsel %vm386, %v509, 0
      %516 = vmatprep.subr.bf16.mxu0 0
      %517 = vmatpush1.bf16.msra.mxu0 0
      %518 = vmatprep.subr.bf16.mxu0 0
      %519 = vmatpush1.bf16.msra.mxu0 0
      %520 = vmatprep.subr.bf16.mxu0 0
      %521 = vmatpush1.bf16.msra.mxu0 0
      %522 = vmatprep.subr.bf16.mxu0 0
      %523 = vmatpush1.bf16.msra.mxu0 0
      %524 = vmatprep.subr.bf16.mxu0 0
      %525 = vmatpush1.bf16.msra.mxu0 0
      %526 = vmatprep.subr.bf16.mxu0 0
      %527 = vmatpush1.bf16.msra.mxu0 0
      %528 = vmatprep.subr.bf16.mxu0 0
      %529 = vmatpush1.bf16.msra.mxu0 0
      %530 = vmatprep.subr.bf16.mxu0 0
      %531 = vmatpush1.bf16.msra.mxu0 %v514
      %532 = vmatprep.subr.bf16.mxu0 0
      %533 = vmatpush2.bf16.msra.mxu0 0
      %534 = vmatprep.subr.bf16.mxu0 0
      %535 = vmatpush2.bf16.msra.mxu0 0
      %536 = vmatprep.subr.bf16.mxu0 0
      %537 = vmatpush2.bf16.msra.mxu0 0
      %538 = vmatprep.subr.bf16.mxu0 0
      %539 = vmatpush2.bf16.msra.mxu0 0
      %540 = vmatprep.subr.bf16.mxu0 0
      %541 = vmatpush2.bf16.msra.mxu0 0
      %542 = vmatprep.subr.bf16.mxu0 0
      %543 = vmatpush2.bf16.msra.mxu0 0
      %544 = vmatprep.subr.bf16.mxu0 0
      %545 = vmatpush2.bf16.msra.mxu0 0
      %546 = vmatprep.subr.bf16.mxu0 0
      %547 = vmatpush2.bf16.msra.mxu0 0
      %548 = vmatprep.mubr.bf16.mxu0 0
      %549 = vmatmul.mubr.bf16.gmra.mxu0 %v511
      %v550 = vpop.f32.mrf.mxu0
      %v551 = vadd.f32 0.0, %v550
      %v552 = vpop.f32.mrf.mxu0
      %v553 = vpop.f32.mrf.mxu0
      %v554 = vadd.f32 0.0, %v553
      %v555 = vpop.f32.mrf.mxu0
      %556 = vdwg.mxu0
      %v557 = vpack.c.bf16 %v554, %v551
      %v559 = vsel %vm306, %v557, 0
      %vm561 = vcmask 1043456
      %v563 = vsel %vm561, %v298, 0
      %565 = vmatprep.subr.bf16.mxu0 0
      %566 = vmatpush1.bf16.msra.mxu0 0
      %567 = vmatprep.subr.bf16.mxu0 0
      %568 = vmatpush1.bf16.msra.mxu0 0
      %569 = vmatprep.subr.bf16.mxu0 0
      %570 = vmatpush1.bf16.msra.mxu0 0
      %571 = vmatprep.subr.bf16.mxu0 0
      %572 = vmatpush1.bf16.msra.mxu0 0
      %573 = vmatprep.subr.bf16.mxu0 0
      %574 = vmatpush1.bf16.msra.mxu0 0
      %575 = vmatprep.subr.bf16.mxu0 0
      %576 = vmatpush1.bf16.msra.mxu0 0
      %577 = vmatprep.subr.bf16.mxu0 0
      %578 = vmatpush1.bf16.msra.mxu0 0
      %579 = vmatprep.subr.bf16.mxu0 0
      %580 = vmatpush1.bf16.msra.mxu0 %v563
      %581 = vmatprep.subr.bf16.mxu0 0
      %582 = vmatpush2.bf16.msra.mxu0 0
      %583 = vmatprep.subr.bf16.mxu0 0
      %584 = vmatpush2.bf16.msra.mxu0 0
      %585 = vmatprep.subr.bf16.mxu0 0
      %586 = vmatpush2.bf16.msra.mxu0 0
      %587 = vmatprep.subr.bf16.mxu0 0
      %588 = vmatpush2.bf16.msra.mxu0 0
      %589 = vmatprep.subr.bf16.mxu0 0
      %590 = vmatpush2.bf16.msra.mxu0 0
      %591 = vmatprep.subr.bf16.mxu0 0
      %592 = vmatpush2.bf16.msra.mxu0 0
      %593 = vmatprep.subr.bf16.mxu0 0
      %594 = vmatpush2.bf16.msra.mxu0 0
      %595 = vmatprep.subr.bf16.mxu0 0
      %596 = vmatpush2.bf16.msra.mxu0 0
      %597 = vmatprep.mubr.bf16.mxu0 0
      %598 = vmatmul.mubr.bf16.gmra.mxu0 %v559
      %v599 = vpop.f32.mrf.mxu0
      %v600 = vadd.f32 0.0, %v599
      %v601 = vpop.f32.mrf.mxu0
      %v602 = vpop.f32.mrf.mxu0
      %v603 = vadd.f32 0.0, %v602
      %v604 = vpop.f32.mrf.mxu0
      %605 = vdwg.mxu0
      %v607 = vsel %vm306, %v431, 0
      %v610 = vsel %vm561, %v297, 0
      %612 = vmatprep.subr.bf16.mxu0 0
      %613 = vmatpush1.bf16.msra.mxu0 0
      %614 = vmatprep.subr.bf16.mxu0 0
      %615 = vmatpush1.bf16.msra.mxu0 0
      %616 = vmatprep.subr.bf16.mxu0 0
      %617 = vmatpush1.bf16.msra.mxu0 0
      %618 = vmatprep.subr.bf16.mxu0 0
      %619 = vmatpush1.bf16.msra.mxu0 0
      %620 = vmatprep.subr.bf16.mxu0 0
      %621 = vmatpush1.bf16.msra.mxu0 0
      %622 = vmatprep.subr.bf16.mxu0 0
      %623 = vmatpush1.bf16.msra.mxu0 0
      %624 = vmatprep.subr.bf16.mxu0 0
      %625 = vmatpush1.bf16.msra.mxu0 0
      %626 = vmatprep.subr.bf16.mxu0 0
      %627 = vmatpush1.bf16.msra.mxu0 %v610
      %628 = vmatprep.subr.bf16.mxu0 0
      %629 = vmatpush2.bf16.msra.mxu0 0
      %630 = vmatprep.subr.bf16.mxu0 0
      %631 = vmatpush2.bf16.msra.mxu0 0
      %632 = vmatprep.subr.bf16.mxu0 0
      %633 = vmatpush2.bf16.msra.mxu0 0
      %634 = vmatprep.subr.bf16.mxu0 0
      %635 = vmatpush2.bf16.msra.mxu0 0
      %636 = vmatprep.subr.bf16.mxu0 0
      %637 = vmatpush2.bf16.msra.mxu0 0
      %638 = vmatprep.subr.bf16.mxu0 0
      %639 = vmatpush2.bf16.msra.mxu0 0
      %640 = vmatprep.subr.bf16.mxu0 0
      %641 = vmatpush2.bf16.msra.mxu0 0
      %642 = vmatprep.subr.bf16.mxu0 0
      %643 = vmatpush2.bf16.msra.mxu0 0
      %644 = vmatprep.mubr.bf16.mxu0 0
      %645 = vmatmul.mubr.bf16.gmra.mxu0 %v607
      %v646 = vpop.f32.mrf.mxu0
      %v647 = vadd.f32 %v600, %v646
      %v648 = vpop.f32.mrf.mxu0
      %v649 = vpop.f32.mrf.mxu0
      %v650 = vadd.f32 %v603, %v649
      %v651 = vpop.f32.mrf.mxu0
      %652 = vdwg.mxu0
      %653 = vrot.lane.b32.xlu0 %v302, 112
      %v654 = vpop.permute.xlu0 %653
      %655 = vrot.lane.b32.xlu0 %v302, 80
      %v656 = vpop.permute.xlu0 %655
      %v658 = vsel %vm306, %v654, 0
      %v661 = vsel %vm306, %v656, 0
      %663 = vmatprep.subr.bf16.mxu0 0
      %664 = vmatpush1.bf16.xpose.msra.mxu0 0
      %665 = vmatprep.subr.bf16.mxu0 0
      %666 = vmatpush1.bf16.xpose.msra.mxu0 0
      %667 = vmatprep.subr.bf16.mxu0 0
      %668 = vmatpush1.bf16.xpose.msra.mxu0 0
      %669 = vmatprep.subr.bf16.mxu0 0
      %670 = vmatpush1.bf16.xpose.msra.mxu0 0
      %671 = vmatprep.subr.bf16.mxu0 0
      %672 = vmatpush1.bf16.xpose.msra.mxu0 0
      %673 = vmatprep.subr.bf16.mxu0 0
      %674 = vmatpush1.bf16.xpose.msra.mxu0 0
      %675 = vmatprep.subr.bf16.mxu0 0
      %676 = vmatpush1.bf16.xpose.msra.mxu0 0
      %677 = vmatprep.subr.bf16.mxu0 0
      %678 = vmatpush1.bf16.xpose.msra.mxu0 %v661
      %679 = vmatprep.subr.bf16.mxu0 0
      %680 = vmatpush2.bf16.xpose.msra.mxu0 0
      %681 = vmatprep.subr.bf16.mxu0 0
      %682 = vmatpush2.bf16.xpose.msra.mxu0 0
      %683 = vmatprep.subr.bf16.mxu0 0
      %684 = vmatpush2.bf16.xpose.msra.mxu0 0
      %685 = vmatprep.subr.bf16.mxu0 0
      %686 = vmatpush2.bf16.xpose.msra.mxu0 0
      %687 = vmatprep.subr.bf16.mxu0 0
      %688 = vmatpush2.bf16.xpose.msra.mxu0 0
      %689 = vmatprep.subr.bf16.mxu0 0
      %690 = vmatpush2.bf16.xpose.msra.mxu0 0
      %691 = vmatprep.subr.bf16.mxu0 0
      %692 = vmatpush2.bf16.xpose.msra.mxu0 0
      %693 = vmatprep.subr.bf16.mxu0 0
      %694 = vmatpush2.bf16.xpose.msra.mxu0 0
      %695 = vmatprep.mubr.bf16.mxu0 0
      %696 = vmatmul.mubr.bf16.gmra.mxu0 %v658
      %v697 = vpop.f32.mrf.mxu0
      %v698 = vadd.f32 0.0, %v697
      %v699 = vpop.f32.mrf.mxu0
      %v700 = vpop.f32.mrf.mxu0
      %v701 = vadd.f32 0.0, %v700
      %v702 = vpop.f32.mrf.mxu0
      %703 = vdwg.mxu0
      %v704 = vmul.f32 %v698, 0.35355338
      %v705 = vmul.f32 %v701, 0.35355338
      %v706 = vsel %vm356, %v704, -inf
      %707 = vmax.xlane.f32.xlu0 %v706
      %v708 = vpop.xlane.xlu0 %707
      %v709 = vsel %vm360, %v705, -inf
      %710 = vmax.xlane.f32.xlu0 %v709
      %v711 = vpop.xlane.xlu0 %710
      %v712 = vsub.f32 %v704, %v708
      %v713 = vsub.f32 %v705, %v711
      %v714 = vmul.f32 %v712, 1.442695
      %v715 = vpow.pop %v714
      %v716 = vmul.f32 %v713, 1.442695
      %v717 = vpow.pop %v716
      %v718 = vsel %vm356, %v715, 0.0
      %719 = vadd.xlane.f32.xlu0 %v718
      %v720 = vpop.xlane.xlu0 %719
      %v721 = vsel %vm360, %v717, 0.0
      %722 = vadd.xlane.f32.xlu0 %v721
      %v723 = vpop.xlane.xlu0 %722
      %v724 = vrcp.pop %v720
      %v725 = vrcp.pop %v723
      %v726 = vmul.f32 %v715, %v724
      %v727 = vmul.f32 %v717, %v725
      %v728 = vpack.c.bf16 %v727, %v726
      %729 = vrot.lane.b32.xlu0 %v302, 48
      %v730 = vpop.permute.xlu0 %729
      %v732 = vsel %vm356, %v728, 0
      %v735 = vsel %vm386, %v730, 0
      %737 = vmatprep.subr.bf16.mxu0 0
      %738 = vmatpush1.bf16.msra.mxu0 0
      %739 = vmatprep.subr.bf16.mxu0 0
      %740 = vmatpush1.bf16.msra.mxu0 0
      %741 = vmatprep.subr.bf16.mxu0 0
      %742 = vmatpush1.bf16.msra.mxu0 0
      %743 = vmatprep.subr.bf16.mxu0 0
      %744 = vmatpush1.bf16.msra.mxu0 0
      %745 = vmatprep.subr.bf16.mxu0 0
      %746 = vmatpush1.bf16.msra.mxu0 0
      %747 = vmatprep.subr.bf16.mxu0 0
      %748 = vmatpush1.bf16.msra.mxu0 0
      %749 = vmatprep.subr.bf16.mxu0 0
      %750 = vmatpush1.bf16.msra.mxu0 0
      %751 = vmatprep.subr.bf16.mxu0 0
      %752 = vmatpush1.bf16.msra.mxu0 %v735
      %753 = vmatprep.subr.bf16.mxu0 0
      %754 = vmatpush2.bf16.msra.mxu0 0
      %755 = vmatprep.subr.bf16.mxu0 0
      %756 = vmatpush2.bf16.msra.mxu0 0
      %757 = vmatprep.subr.bf16.mxu0 0
      %758 = vmatpush2.bf16.msra.mxu0 0
      %759 = vmatprep.subr.bf16.mxu0 0
      %760 = vmatpush2.bf16.msra.mxu0 0
      %761 = vmatprep.subr.bf16.mxu0 0
      %762 = vmatpush2.bf16.msra.mxu0 0
      %763 = vmatprep.subr.bf16.mxu0 0
      %764 = vmatpush2.bf16.msra.mxu0 0
      %765 = vmatprep.subr.bf16.mxu0 0
      %766 = vmatpush2.bf16.msra.mxu0 0
      %767 = vmatprep.subr.bf16.mxu0 0
      %768 = vmatpush2.bf16.msra.mxu0 0
      %769 = vmatprep.mubr.bf16.mxu0 0
      %770 = vmatmul.mubr.bf16.gmra.mxu0 %v732
      %v771 = vpop.f32.mrf.mxu0
      %v772 = vadd.f32 0.0, %v771
      %v773 = vpop.f32.mrf.mxu0
      %v774 = vpop.f32.mrf.mxu0
      %v775 = vadd.f32 0.0, %v774
      %v776 = vpop.f32.mrf.mxu0
      %777 = vdwg.mxu0
      %v778 = vpack.c.bf16 %v775, %v772
      %v780 = vsel %vm306, %v778, 0
      %v783 = vsel %vm561, %v299, 0
      %785 = vmatprep.subr.bf16.mxu0 0
      %786 = vmatpush1.bf16.msra.mxu0 0
      %787 = vmatprep.subr.bf16.mxu0 0
      %788 = vmatpush1.bf16.msra.mxu0 0
      %789 = vmatprep.subr.bf16.mxu0 0
      %790 = vmatpush1.bf16.msra.mxu0 0
      %791 = vmatprep.subr.bf16.mxu0 0
      %792 = vmatpush1.bf16.msra.mxu0 0
      %793 = vmatprep.subr.bf16.mxu0 0
      %794 = vmatpush1.bf16.msra.mxu0 0
      %795 = vmatprep.subr.bf16.mxu0 0
      %796 = vmatpush1.bf16.msra.mxu0 0
      %797 = vmatprep.subr.bf16.mxu0 0
      %798 = vmatpush1.bf16.msra.mxu0 0
      %799 = vmatprep.subr.bf16.mxu0 0
      %800 = vmatpush1.bf16.msra.mxu0 %v783
      %801 = vmatprep.subr.bf16.mxu0 0
      %802 = vmatpush2.bf16.msra.mxu0 0
      %803 = vmatprep.subr.bf16.mxu0 0
      %804 = vmatpush2.bf16.msra.mxu0 0
      %805 = vmatprep.subr.bf16.mxu0 0
      %806 = vmatpush2.bf16.msra.mxu0 0
      %807 = vmatprep.subr.bf16.mxu0 0
      %808 = vmatpush2.bf16.msra.mxu0 0
      %809 = vmatprep.subr.bf16.mxu0 0
      %810 = vmatpush2.bf16.msra.mxu0 0
      %811 = vmatprep.subr.bf16.mxu0 0
      %812 = vmatpush2.bf16.msra.mxu0 0
      %813 = vmatprep.subr.bf16.mxu0 0
      %814 = vmatpush2.bf16.msra.mxu0 0
      %815 = vmatprep.subr.bf16.mxu0 0
      %816 = vmatpush2.bf16.msra.mxu0 0
      %817 = vmatprep.mubr.bf16.mxu0 0
      %818 = vmatmul.mubr.bf16.gmra.mxu0 %v780
      %v819 = vpop.f32.mrf.mxu0
      %v820 = vadd.f32 0.0, %v819
      %v821 = vpop.f32.mrf.mxu0
      %v822 = vpop.f32.mrf.mxu0
      %v823 = vadd.f32 0.0, %v822
      %v824 = vpop.f32.mrf.mxu0
      %825 = vdwg.mxu0
      %v826 = vadd.f32 %v647, %v820
      %v827 = vadd.f32 %v650, %v823
      %828 = vrot.lane.b32.xlu0 %v302, 104
      %v829 = vpop.permute.xlu0 %828
      %830 = vrot.lane.b32.xlu0 %v302, 72
      %v831 = vpop.permute.xlu0 %830
      %v833 = vsel %vm306, %v829, 0
      %v836 = vsel %vm306, %v831, 0
      %838 = vmatprep.subr.bf16.mxu0 0
      %839 = vmatpush1.bf16.xpose.msra.mxu0 0
      %840 = vmatprep.subr.bf16.mxu0 0
      %841 = vmatpush1.bf16.xpose.msra.mxu0 0
      %842 = vmatprep.subr.bf16.mxu0 0
      %843 = vmatpush1.bf16.xpose.msra.mxu0 0
      %844 = vmatprep.subr.bf16.mxu0 0
      %845 = vmatpush1.bf16.xpose.msra.mxu0 0
      %846 = vmatprep.subr.bf16.mxu0 0
      %847 = vmatpush1.bf16.xpose.msra.mxu0 0
      %848 = vmatprep.subr.bf16.mxu0 0
      %849 = vmatpush1.bf16.xpose.msra.mxu0 0
      %850 = vmatprep.subr.bf16.mxu0 0
      %851 = vmatpush1.bf16.xpose.msra.mxu0 0
      %852 = vmatprep.subr.bf16.mxu0 0
      %853 = vmatpush1.bf16.xpose.msra.mxu0 %v836
      %854 = vmatprep.subr.bf16.mxu0 0
      %855 = vmatpush2.bf16.xpose.msra.mxu0 0
      %856 = vmatprep.subr.bf16.mxu0 0
      %857 = vmatpush2.bf16.xpose.msra.mxu0 0
      %858 = vmatprep.subr.bf16.mxu0 0
      %859 = vmatpush2.bf16.xpose.msra.mxu0 0
      %860 = vmatprep.subr.bf16.mxu0 0
      %861 = vmatpush2.bf16.xpose.msra.mxu0 0
      %862 = vmatprep.subr.bf16.mxu0 0
      %863 = vmatpush2.bf16.xpose.msra.mxu0 0
      %864 = vmatprep.subr.bf16.mxu0 0
      %865 = vmatpush2.bf16.xpose.msra.mxu0 0
      %866 = vmatprep.subr.bf16.mxu0 0
      %867 = vmatpush2.bf16.xpose.msra.mxu0 0
      %868 = vmatprep.subr.bf16.mxu0 0
      %869 = vmatpush2.bf16.xpose.msra.mxu0 0
      %870 = vmatprep.mubr.bf16.mxu0 0
      %871 = vmatmul.mubr.bf16.gmra.mxu0 %v833
      %v872 = vpop.f32.mrf.mxu0
      %v873 = vadd.f32 0.0, %v872
      %v874 = vpop.f32.mrf.mxu0
      %v875 = vpop.f32.mrf.mxu0
      %v876 = vadd.f32 0.0, %v875
      %v877 = vpop.f32.mrf.mxu0
      %878 = vdwg.mxu0
      %v879 = vmul.f32 %v873, 0.35355338
      %v880 = vmul.f32 %v876, 0.35355338
      %v881 = vsel %vm356, %v879, -inf
      %882 = vmax.xlane.f32.xlu0 %v881
      %v883 = vpop.xlane.xlu0 %882
      %v884 = vsel %vm360, %v880, -inf
      %885 = vmax.xlane.f32.xlu0 %v884
      %v886 = vpop.xlane.xlu0 %885
      %v887 = vsub.f32 %v879, %v883
      %v888 = vsub.f32 %v880, %v886
      %v889 = vmul.f32 %v887, 1.442695
      %v890 = vpow.pop %v889
      %v891 = vmul.f32 %v888, 1.442695
      %v892 = vpow.pop %v891
      %v893 = vsel %vm356, %v890, 0.0
      %894 = vadd.xlane.f32.xlu0 %v893
      %v895 = vpop.xlane.xlu0 %894
      %v896 = vsel %vm360, %v892, 0.0
      %897 = vadd.xlane.f32.xlu0 %v896
      %v898 = vpop.xlane.xlu0 %897
      %v899 = vrcp.pop %v895
      %v900 = vrcp.pop %v898
      %v901 = vmul.f32 %v890, %v899
      %v902 = vmul.f32 %v892, %v900
      %v903 = vpack.c.bf16 %v902, %v901
      %904 = vrot.lane.b32.xlu0 %v302, 40
      %v905 = vpop.permute.xlu0 %904
      %v907 = vsel %vm356, %v903, 0
      %v910 = vsel %vm386, %v905, 0
      %912 = vmatprep.subr.bf16.mxu0 0
      %913 = vmatpush1.bf16.msra.mxu0 0
      %914 = vmatprep.subr.bf16.mxu0 0
      %915 = vmatpush1.bf16.msra.mxu0 0
      %916 = vmatprep.subr.bf16.mxu0 0
      %917 = vmatpush1.bf16.msra.mxu0 0
      %918 = vmatprep.subr.bf16.mxu0 0
      %919 = vmatpush1.bf16.msra.mxu0 0
      %920 = vmatprep.subr.bf16.mxu0 0
      %921 = vmatpush1.bf16.msra.mxu0 0
      %922 = vmatprep.subr.bf16.mxu0 0
      %923 = vmatpush1.bf16.msra.mxu0 0
      %924 = vmatprep.subr.bf16.mxu0 0
      %925 = vmatpush1.bf16.msra.mxu0 0
      %926 = vmatprep.subr.bf16.mxu0 0
      %927 = vmatpush1.bf16.msra.mxu0 %v910
      %928 = vmatprep.subr.bf16.mxu0 0
      %929 = vmatpush2.bf16.msra.mxu0 0
      %930 = vmatprep.subr.bf16.mxu0 0
      %931 = vmatpush2.bf16.msra.mxu0 0
      %932 = vmatprep.subr.bf16.mxu0 0
      %933 = vmatpush2.bf16.msra.mxu0 0
      %934 = vmatprep.subr.bf16.mxu0 0
      %935 = vmatpush2.bf16.msra.mxu0 0
      %936 = vmatprep.subr.bf16.mxu0 0
      %937 = vmatpush2.bf16.msra.mxu0 0
      %938 = vmatprep.subr.bf16.mxu0 0
      %939 = vmatpush2.bf16.msra.mxu0 0
      %940 = vmatprep.subr.bf16.mxu0 0
      %941 = vmatpush2.bf16.msra.mxu0 0
      %942 = vmatprep.subr.bf16.mxu0 0
      %943 = vmatpush2.bf16.msra.mxu0 0
      %944 = vmatprep.mubr.bf16.mxu0 0
      %945 = vmatmul.mubr.bf16.gmra.mxu0 %v907
      %v946 = vpop.f32.mrf.mxu0
      %v947 = vadd.f32 0.0, %v946
      %v948 = vpop.f32.mrf.mxu0
      %v949 = vpop.f32.mrf.mxu0
      %v950 = vadd.f32 0.0, %v949
      %v951 = vpop.f32.mrf.mxu0
      %952 = vdwg.mxu0
      %v953 = vpack.c.bf16 %v950, %v947
      %v955 = vsel %vm306, %v953, 0
      %v958 = vsel %vm561, %v300, 0
      %960 = vmatprep.subr.bf16.mxu0 0
      %961 = vmatpush1.bf16.msra.mxu0 0
      %962 = vmatprep.subr.bf16.mxu0 0
      %963 = vmatpush1.bf16.msra.mxu0 0
      %964 = vmatprep.subr.bf16.mxu0 0
      %965 = vmatpush1.bf16.msra.mxu0 0
      %966 = vmatprep.subr.bf16.mxu0 0
      %967 = vmatpush1.bf16.msra.mxu0 0
      %968 = vmatprep.subr.bf16.mxu0 0
      %969 = vmatpush1.bf16.msra.mxu0 0
      %970 = vmatprep.subr.bf16.mxu0 0
      %971 = vmatpush1.bf16.msra.mxu0 0
      %972 = vmatprep.subr.bf16.mxu0 0
      %973 = vmatpush1.bf16.msra.mxu0 0
      %974 = vmatprep.subr.bf16.mxu0 0
      %975 = vmatpush1.bf16.msra.mxu0 %v958
      %976 = vmatprep.subr.bf16.mxu0 0
      %977 = vmatpush2.bf16.msra.mxu0 0
      %978 = vmatprep.subr.bf16.mxu0 0
      %979 = vmatpush2.bf16.msra.mxu0 0
      %980 = vmatprep.subr.bf16.mxu0 0
      %981 = vmatpush2.bf16.msra.mxu0 0
      %982 = vmatprep.subr.bf16.mxu0 0
      %983 = vmatpush2.bf16.msra.mxu0 0
      %984 = vmatprep.subr.bf16.mxu0 0
      %985 = vmatpush2.bf16.msra.mxu0 0
      %986 = vmatprep.subr.bf16.mxu0 0
      %987 = vmatpush2.bf16.msra.mxu0 0
      %988 = vmatprep.subr.bf16.mxu0 0
      %989 = vmatpush2.bf16.msra.mxu0 0
      %990 = vmatprep.subr.bf16.mxu0 0
      %991 = vmatpush2.bf16.msra.mxu0 0
      %992 = vmatprep.mubr.bf16.mxu0 0
      %993 = vmatmul.mubr.bf16.gmra.mxu0 %v955
      %v994 = vpop.f32.mrf.mxu0
      %v995 = vadd.f32 0.0, %v994
      %v996 = vpop.f32.mrf.mxu0
      %v997 = vpop.f32.mrf.mxu0
      %v998 = vadd.f32 0.0, %v997
      %v999 = vpop.f32.mrf.mxu0
      %1000 = vdwg.mxu0
      %v1001 = vadd.f32 %v826, %v995
      %v1002 = vadd.f32 %v827, %v998
      %v1004 = vlaneseq
      %v1005 = vshrl.u32 %v1004, 7
      %v1006 = vsub.s32 0, %v1005
      %v1007 = vrot.slane %v301, %v1006
      %v1009 = vadd.f32 %v1001, %v1007
      %v1010 = vadd.f32 %v1002, %v1007
      %1011 = vst.msk [vmem:[%s224] sm:$0xff] %vm252, %v1009
      %vm1012 = vcmask 257024
      %1013 = vst.msk [vmem:[%s224 + $0x8] sm:$0xf] %vm1012, %v1010
      %p1014 = scmp.lt.s32.totalorder %s16, 1
      %s1015 = scalar_select %p1014, %s16, 1
      %s1016 = smul.addr %s1015, 2
      %s1017 = smul.addr %s1016, 8
      %s1018 = scalar_lea.vmem %s5, %s1017
      // Predicated region
      $region41: #{transformer_forward.11} parent=39 // pred_check
        %p1019 = pneg %p144
      $region42: #{transformer_forward.11} parent=39 // pred_check_branch
        %1021 = sbr.rel (%p1019) target = $region44
      $region43: #{transformer_forward.11} parent=39 // pred_region
        _
      $region44: #{transformer_forward.11} parent=39 // pred_fallthru
        _
    $region40: #{transformer_forward.11} parent=5 // pred_fallthru
      _
    %p1022 = scmp.le.s32.totalorder 2, %s11
    // Predicated region
    $region45: #{transformer_forward.11} parent=5 // pred_check
      %p1023 = pneg %p1022
    $region46: #{transformer_forward.11} parent=5 // pred_check_branch
      %1025 = sbr.rel (%p1023) target = $region48
    $region47: #{transformer_forward.11} parent=5 // pred_region
      %s1026 = ssub.s32 %s11, 2
      // Predicated region
      $region49: #{transformer_forward.11} parent=47 // pred_check
        %p1027 = pneg %p150
      $region50: #{transformer_forward.11} parent=47 // pred_check_branch
        %1029 = sbr.rel (%p1027) target = $region52
      $region51: #{transformer_forward.11} parent=47 // pred_region
        %p1030 = scmp.lt.s32.totalorder %s17, 1
        %s1031 = scalar_select %p1030, %s17, 1
        %s1032 = smul.addr %s1031, 2
        %s1033 = smul.addr %s1032, 8
        %s1034 = scalar_lea.vmem %s5, %s1033
      $region52: #{transformer_forward.11} parent=47 // pred_fallthru
        _
    $region48: #{transformer_forward.11} parent=5 // pred_fallthru
      _
  $region6: #{transformer_forward.11} parent=0 // loop_footer
    %s15 = sadd.s32 1, %s11
  $region7: #{transformer_forward.11} parent=0 // loop_footer_branch
    %10 = sbr.rel target = $region3
  $region8: #{transformer_forward.11} parent=0 // loop_exit
    _

// kernel: transformer_forward.15
$region0: #{transformer_forward.15}
  #allocation0 [shape = 'u32[]', space=smem, size = 0x4, offset = 0x4, fixed_abs, tag = 'smem constant byte address 0x4 - core index']
  #allocation1 [shape = 'u32[144,128]{1,0:T(1,128)}', space=vmem, size = 0x12000, scoped, tag = 'internal scratch']
  %s0 = inlined_call_operand.vmem [shape: f32[2,8,32], index: 0, kind: input, shape index: {}]
  %s1 = inlined_call_operand.vmem [shape: bf16[32,96], index: 1, kind: input, shape index: {}]
  %s2 = inlined_call_operand.vmem [shape: f32[1,96], index: 2, kind: input, shape index: {}]
  %s3 = inlined_call_operand.vmem [shape: bf16[32,32], index: 3, kind: input, shape index: {}]
  %s4 = inlined_call_operand.vmem [shape: f32[1,32], index: 4, kind: input, shape index: {}]
  %s5 = inlined_call_operand.vmem [shape: f32[2,8,32], index: 5, kind: output, shape index: {}]
  %s6 = sld [smem:[#allocation0]]
  $region53: #{transformer_forward.15} parent=0
    _
  %s8 = ssub.s32 1, %s6
  %s9 = scalar_select 0, %s8, %s6
  loop: start=0, step=1, limit=4
  $region2: #{transformer_forward.15} parent=0 // loop_pre_header
    _
  $region3: #{transformer_forward.15} parent=0 // loop_header
    %s11 = sphi 0, %s15
    %p12 = scmp.ge.s32.totalorder %s11, 4
    %s21 = sphi 0, %s23
    %s24 = sphi 0, %s21
    %s25 = sphi 0, %s24
    %s41 = sphi 0, %s25
    %s45 = sphi 0, %s45
    %s47 = sphi 0, %s45
    %s48 = sphi 0, %s47
    %s62 = sphi 0, %s48
    %s66 = sphi 0, %s66
    %s68 = sphi 0, %s66
    %s69 = sphi 0, %s68
    %s83 = sphi 0, %s69
    %s87 = sphi 0, %s87
    %s89 = sphi 0, %s87
    %s90 = sphi 0, %s89
    %s104 = sphi 0, %s90
    %s108 = sphi 0, %s108
    %s110 = sphi 0, %s108
    %s111 = sphi 0, %s110
    %s125 = sphi 0, %s111
    %s131 = sphi 0, %s133
    %s134 = sphi 0, %s131
    %s135 = sphi 0, %s134
    %s151 = sphi 0, %s135
  $region4: #{transformer_forward.15} parent=0 // loop_header_branch
    %14 = sbr.rel (%p12) target = $region8
  $region5: #{transformer_forward.15} parent=0 // loop_body
    %s16 = ssub.s32 %s11, 1
    %s17 = ssub.s32 %s11, 2
    %s18 = sadd.s32 %s11, 1
    %s19 = ssub.s32 %s11, %s18
    %p20 = scmp.eq.s32.totalorder %s19, 0
    %s22 = sadd.s32 %s21, 1
    %s23 = scalar_select %p20, %s21, %s22
    %p26 = pneg %p20
    %p27 = scmp.eq.s32.totalorder %s11, 1
    %p28 = por %p26, %p27
    %p29 = scmp.ne.s32.totalorder %s21, %s24
    %p30 = scmp.eq.s32.totalorder %s11, 0
    %p31 = por %p29, %p30
    %p32 = scmp.ne.s32.totalorder %s21, %s24
    %p33 = scmp.eq.s32.totalorder %s16, 1
    %p34 = por %p32, %p33
    %p35 = scmp.ne.s32.totalorder %s24, %s25
    %p36 = scmp.eq.s32.totalorder %s16, 0
    %p37 = por %p35, %p36
    %p38 = scmp.ne.s32.totalorder %s24, %s25
    %p39 = scmp.eq.s32.totalorder %s17, 1
    %p40 = por %p38, %p39
    %p42 = scmp.ne.s32.totalorder %s25, %s41
    %p43 = scmp.eq.s32.totalorder %s17, 0
    %p44 = por %p42, %p43
    %s46 = sadd.s32 %s45, 1
    %p49 = scmp.eq.s32.totalorder %s11, 1
    %p50 = scmp.ne.s32.totalorder %s45, %s47
    %p51 = scmp.eq.s32.totalorder %s11, 0
    %p52 = por %p50, %p51
    %p53 = scmp.ne.s32.totalorder %s45, %s47
    %p54 = scmp.eq.s32.totalorder %s16, 1
    %p55 = por %p53, %p54
    %p56 = scmp.ne.s32.totalorder %s47, %s48
    %p57 = scmp.eq.s32.totalorder %s16, 0
    %p58 = por %p56, %p57
    %p59 = scmp.ne.s32.totalorder %s47, %s48
    %p60 = scmp.eq.s32.totalorder %s17, 1
    %p61 = por %p59, %p60
    %p63 = scmp.ne.s32.totalorder %s48, %s62
    %p64 = scmp.eq.s32.totalorder %s17, 0
    %p65 = por %p63, %p64
    %s67 = sadd.s32 %s66, 1
    %p70 = scmp.eq.s32.totalorder %s11, 1
    %p71 = scmp.ne.s32.totalorder %s66, %s68
    %p72 = scmp.eq.s32.totalorder %s11, 0
    %p73 = por %p71, %p72
    %p74 = scmp.ne.s32.totalorder %s66, %s68
    %p75 = scmp.eq.s32.totalorder %s16, 1
    %p76 = por %p74, %p75
    %p77 = scmp.ne.s32.totalorder %s68, %s69
    %p78 = scmp.eq.s32.totalorder %s16, 0
    %p79 = por %p77, %p78
    %p80 = scmp.ne.s32.totalorder %s68, %s69
    %p81 = scmp.eq.s32.totalorder %s17, 1
    %p82 = por %p80, %p81
    %p84 = scmp.ne.s32.totalorder %s69, %s83
    %p85 = scmp.eq.s32.totalorder %s17, 0
    %p86 = por %p84, %p85
    %s88 = sadd.s32 %s87, 1
    %p91 = scmp.eq.s32.totalorder %s11, 1
    %p92 = scmp.ne.s32.totalorder %s87, %s89
    %p93 = scmp.eq.s32.totalorder %s11, 0
    %p94 = por %p92, %p93
    %p95 = scmp.ne.s32.totalorder %s87, %s89
    %p96 = scmp.eq.s32.totalorder %s16, 1
    %p97 = por %p95, %p96
    %p98 = scmp.ne.s32.totalorder %s89, %s90
    %p99 = scmp.eq.s32.totalorder %s16, 0
    %p100 = por %p98, %p99
    %p101 = scmp.ne.s32.totalorder %s89, %s90
    %p102 = scmp.eq.s32.totalorder %s17, 1
    %p103 = por %p101, %p102
    %p105 = scmp.ne.s32.totalorder %s90, %s104
    %p106 = scmp.eq.s32.totalorder %s17, 0
    %p107 = por %p105, %p106
    %s109 = sadd.s32 %s108, 1
    %p112 = scmp.eq.s32.totalorder %s11, 1
    %p113 = scmp.ne.s32.totalorder %s108, %s110
    %p114 = scmp.eq.s32.totalorder %s11, 0
    %p115 = por %p113, %p114
    %p116 = scmp.ne.s32.totalorder %s108, %s110
    %p117 = scmp.eq.s32.totalorder %s16, 1
    %p118 = por %p116, %p117
    %p119 = scmp.ne.s32.totalorder %s110, %s111
    %p120 = scmp.eq.s32.totalorder %s16, 0
    %p121 = por %p119, %p120
    %p122 = scmp.ne.s32.totalorder %s110, %s111
    %p123 = scmp.eq.s32.totalorder %s17, 1
    %p124 = por %p122, %p123
    %p126 = scmp.ne.s32.totalorder %s111, %s125
    %p127 = scmp.eq.s32.totalorder %s17, 0
    %p128 = por %p126, %p127
    %s129 = ssub.s32 %s11, %s18
    %p130 = scmp.eq.s32.totalorder %s129, 0
    %s132 = sadd.s32 %s131, 1
    %s133 = scalar_select %p130, %s131, %s132
    %p136 = pneg %p130
    %p137 = scmp.eq.s32.totalorder %s11, 1
    %p138 = por %p136, %p137
    %p139 = scmp.ne.s32.totalorder %s131, %s134
    %p140 = scmp.eq.s32.totalorder %s11, 0
    %p141 = por %p139, %p140
    %p142 = scmp.ne.s32.totalorder %s131, %s134
    %p143 = scmp.eq.s32.totalorder %s16, 1
    %p144 = por %p142, %p143
    %p145 = scmp.ne.s32.totalorder %s134, %s135
    %p146 = scmp.eq.s32.totalorder %s16, 0
    %p147 = por %p145, %p146
    %p148 = scmp.ne.s32.totalorder %s134, %s135
    %p149 = scmp.eq.s32.totalorder %s17, 1
    %p150 = por %p148, %p149
    %p152 = scmp.ne.s32.totalorder %s135, %s151
    %p153 = scmp.eq.s32.totalorder %s17, 0
    %p154 = por %p152, %p153
    %p155 = scmp.le.s32.totalorder 1, %s11
    %p156 = scmp.lt.s32.totalorder %s11, 3
    %p157 = pnand %p155, %p156
    %p158 = pneg %p157
    // Predicated region
    $region9: #{transformer_forward.15} parent=5 // pred_check
      _
    $region10: #{transformer_forward.15} parent=5 // pred_check_branch
      %160 = sbr.rel (%p157) target = $region12
    $region11: #{transformer_forward.15} parent=5 // pred_region
      %s161 = ssub.s32 %s11, 1
      // Predicated region
      $region13: #{transformer_forward.15} parent=11 // pred_check
        %p162 = pneg %p58
      $region14: #{transformer_forward.15} parent=11 // pred_check_branch
        %164 = sbr.rel (%p162) target = $region16
      $region15: #{transformer_forward.15} parent=11 // pred_region
        _
      $region16: #{transformer_forward.15} parent=11 // pred_fallthru
        _
      // Predicated region
      $region17: #{transformer_forward.15} parent=11 // pred_check
        %p165 = pneg %p79
      $region18: #{transformer_forward.15} parent=11 // pred_check_branch
        %167 = sbr.rel (%p165) target = $region20
      $region19: #{transformer_forward.15} parent=11 // pred_region
        _
      $region20: #{transformer_forward.15} parent=11 // pred_fallthru
        _
      // Predicated region
      $region21: #{transformer_forward.15} parent=11 // pred_check
        %p168 = pneg %p100
      $region22: #{transformer_forward.15} parent=11 // pred_check_branch
        %170 = sbr.rel (%p168) target = $region24
      $region23: #{transformer_forward.15} parent=11 // pred_region
        _
      $region24: #{transformer_forward.15} parent=11 // pred_fallthru
        _
      // Predicated region
      $region25: #{transformer_forward.15} parent=11 // pred_check
        %p171 = pneg %p121
      $region26: #{transformer_forward.15} parent=11 // pred_check_branch
        %173 = sbr.rel (%p171) target = $region28
      $region27: #{transformer_forward.15} parent=11 // pred_region
        _
      $region28: #{transformer_forward.15} parent=11 // pred_fallthru
        _
    $region12: #{transformer_forward.15} parent=5 // pred_fallthru
      _
    %p174 = scmp.lt.s32.totalorder %s11, 2
    // Predicated region
    $region29: #{transformer_forward.15} parent=5 // pred_check
      %p175 = pneg %p174
    $region30: #{transformer_forward.15} parent=5 // pred_check_branch
      %177 = sbr.rel (%p175) target = $region32
    $region31: #{transformer_forward.15} parent=5 // pred_region
      // Predicated region
      $region33: #{transformer_forward.15} parent=31 // pred_check
        %p178 = pneg %p31
      $region34: #{transformer_forward.15} parent=31 // pred_check_branch
        %180 = sbr.rel (%p178) target = $region36
      $region35: #{transformer_forward.15} parent=31 // pred_region
        %p181 = scmp.lt.s32.totalorder %s11, 1
        %s182 = scalar_select %p181, %s11, 1
        %s183 = smul.addr %s182, 8
        %s184 = scalar_lea.vmem %s0, %s183
      $region36: #{transformer_forward.15} parent=31 // pred_fallthru
        _
    $region32: #{transformer_forward.15} parent=5 // pred_fallthru
      _
    %p185 = scmp.le.s32.totalorder 1, %s11
    %p186 = scmp.lt.s32.totalorder %s11, 3
    %p187 = pnand %p185, %p186
    %p188 = pneg %p187
    // Predicated region
    $region37: #{transformer_forward.15} parent=5 // pred_check
      _
    $region38: #{transformer_forward.15} parent=5 // pred_check_branch
      %190 = sbr.rel (%p187) target = $region40
    $region39: #{transformer_forward.15} parent=5 // pred_region
      %s191 = ssub.s32 %s11, 1
      %p192 = scmp.lt.s32.totalorder %s16, 1
      %s193 = scalar_select %p192, %s16, 1
      %s194 = smul.addr %s193, 8
      %s195 = scalar_lea.vmem %s0, %s194
      %p196 = pneg %p37
      %p197 = pneg %p34
      %p198 = pneg %p58
      %p199 = pneg %p55
      %p200 = pneg %p79
      %p201 = pneg %p76
      %p202 = pneg %p100
      %p203 = pneg %p97
      %p204 = pneg %p121
      %p205 = pneg %p118
      %p206 = pneg %p147
      %p207 = pneg %p144
      %p208 = scmp.lt.s32.totalorder %s16, 1
      %s209 = scalar_select %p208, %s16, 1
      %s210 = smul.addr %s209, 8
      %s211 = scalar_lea.vmem %s5, %s210
      %p212 = scmp.lt.s32.totalorder %s16, 1
      %s213 = scalar_select %p212, %s16, 1
      %s214 = smul.addr %s213, 8
      %s215 = scalar_lea.vmem %s0, %s214
      %p216 = scmp.lt.s32.totalorder %s16, 1
      %s217 = scalar_select %p216, %s16, 1
      %s218 = smul.addr %s217, 8
      %s219 = scalar_lea.vmem %s5, %s218
      %v221 = vld [vmem:[%s215] sm:$0xff]
      %v222 = vpack.c.bf16 %v221, %v221
      %v223 = vld [vmem:[%s1] sm:$0xf]
      %v224 = vld [vmem:[%s1 + $0x4] sm:$0xf]
      %v225 = vld [vmem:[%s1 + $0x8] sm:$0xf]
      %v226 = vld [vmem:[%s1 + $0xc] sm:$0xf]
      %v227 = vld [vmem:[%s2] sm:$0x1]
      %v229 = vlaneseq
      %v230 = vshrl.u32 %v229, 7
      %v231 = vsub.s32 0, %v230
      %v232 = vrot.slane %v227, %v231
      %v238 = vunpack.c.l.b16 %v223
      %v239 = vunpack.c.l.b16 %v224
      %v240 = vunpack.c.l.b16 %v225
      %v241 = vunpack.c.l.b16 %v226
      %v242 = vpack.c.b16 %v239, %v238
      %v243 = vpack.c.b16 %v241, %v240
      %vm246 = vcmask 261120
      %v248 = vsel %vm246, %v222, 0
      %250 = vmatprep.subr.bf16.mxu0 0
      %251 = vmatpush1.bf16.msra.mxu0 0
      %252 = vmatprep.subr.bf16.mxu0 0
      %253 = vmatpush1.bf16.msra.mxu0 0
      %254 = vmatprep.subr.bf16.mxu0 0
      %255 = vmatpush1.bf16.msra.mxu0 0
      %256 = vmatprep.subr.bf16.mxu0 0
      %257 = vmatpush1.bf16.msra.mxu0 0
      %258 = vmatprep.subr.bf16.mxu0 0
      %259 = vmatpush1.bf16.msra.mxu0 0
      %260 = vmatprep.subr.bf16.mxu0 0
      %261 = vmatpush1.bf16.msra.mxu0 0
      %262 = vmatprep.subr.bf16.mxu0 0
      %263 = vmatpush1.bf16.msra.mxu0 %v243
      %264 = vmatprep.subr.bf16.mxu0 0
      %265 = vmatpush1.bf16.msra.mxu0 %v242
      %266 = vmatprep.subr.bf16.mxu0 0
      %267 = vmatpush2.bf16.msra.mxu0 0
      %268 = vmatprep.subr.bf16.mxu0 0
      %269 = vmatpush2.bf16.msra.mxu0 0
      %270 = vmatprep.subr.bf16.mxu0 0
      %271 = vmatpush2.bf16.msra.mxu0 0
      %272 = vmatprep.subr.bf16.mxu0 0
      %273 = vmatpush2.bf16.msra.mxu0 0
      %274 = vmatprep.subr.bf16.mxu0 0
      %275 = vmatpush2.bf16.msra.mxu0 0
      %276 = vmatprep.subr.bf16.mxu0 0
      %277 = vmatpush2.bf16.msra.mxu0 0
      %278 = vmatprep.subr.bf16.mxu0 0
      %279 = vmatpush2.bf16.msra.mxu0 0
      %280 = vmatprep.subr.bf16.mxu0 0
      %281 = vmatpush2.bf16.msra.mxu0 0
      %282 = vmatprep.mubr.bf16.mxu0 0
      %283 = vmatmul.mubr.bf16.gmra.mxu0 %v248
      %v284 = vpop.f32.mrf.mxu0
      %v285 = vadd.f32 %v232, %v284
      %v286 = vpop.f32.mrf.mxu0
      %v287 = vpop.f32.mrf.mxu0
      %v288 = vpop.f32.mrf.mxu0
      %289 = vdwg.mxu0
      %v290 = vld [vmem:[%s3] sm:$0xf]
      %v291 = vld [vmem:[%s3 + $0x4] sm:$0xf]
      %v292 = vld [vmem:[%s3 + $0x8] sm:$0xf]
      %v293 = vld [vmem:[%s3 + $0xc] sm:$0xf]
      %v294 = vld [vmem:[%s4] sm:$0x1]
      %v295 = vlaneseq
      %v296 = vshrl.u32 %v295, 7
      %v297 = vlaneseq
      %v298 = vand.u32 %v297, 127
      %vm299 = vcmp.le.s32.totalorder %v298, %v296
      %v300 = vsel %vm299, 0.0, -1e+30
      %v301 = vpack.c.bf16 %v285, %v285
      %303 = vrot.lane.b32.xlu0 %v301, 96
      %v304 = vpop.permute.xlu0 %303
      %vm305 = vcmask 64512
      %v307 = vsel %vm305, %v301, 0
      %v310 = vsel %vm305, %v304, 0
      %312 = vmatprep.subr.bf16.mxu0 0
      %313 = vmatpush1.bf16.xpose.msra.mxu0 0
      %314 = vmatprep.subr.bf16.mxu0 0
      %315 = vmatpush1.bf16.xpose.msra.mxu0 0
      %316 = vmatprep.subr.bf16.mxu0 0
      %317 = vmatpush1.bf16.xpose.msra.mxu0 0
      %318 = vmatprep.subr.bf16.mxu0 0
      %319 = vmatpush1.bf16.xpose.msra.mxu0 0
      %320 = vmatprep.subr.bf16.mxu0 0
      %321 = vmatpush1.bf16.xpose.msra.mxu0 0
      %322 = vmatprep.subr.bf16.mxu0 0
      %323 = vmatpush1.bf16.xpose.msra.mxu0 0
      %324 = vmatprep.subr.bf16.mxu0 0
      %325 = vmatpush1.bf16.xpose.msra.mxu0 0
      %326 = vmatprep.subr.bf16.mxu0 0
      %327 = vmatpush1.bf16.xpose.msra.mxu0 %v310
      %328 = vmatprep.subr.bf16.mxu0 0
      %329 = vmatpush2.bf16.xpose.msra.mxu0 0
      %330 = vmatprep.subr.bf16.mxu0 0
      %331 = vmatpush2.bf16.xpose.msra.mxu0 0
      %332 = vmatprep.subr.bf16.mxu0 0
      %333 = vmatpush2.bf16.xpose.msra.mxu0 0
      %334 = vmatprep.subr.bf16.mxu0 0
      %335 = vmatpush2.bf16.xpose.msra.mxu0 0
      %336 = vmatprep.subr.bf16.mxu0 0
      %337 = vmatpush2.bf16.xpose.msra.mxu0 0
      %338 = vmatprep.subr.bf16.mxu0 0
      %339 = vmatpush2.bf16.xpose.msra.mxu0 0
      %340 = vmatprep.subr.bf16.mxu0 0
      %341 = vmatpush2.bf16.xpose.msra.mxu0 0
      %342 = vmatprep.subr.bf16.mxu0 0
      %343 = vmatpush2.bf16.xpose.msra.mxu0 0
      %344 = vmatprep.mubr.bf16.mxu0 0
      %345 = vmatmul.mubr.bf16.gmra.mxu0 %v307
      %v346 = vpop.f32.mrf.mxu0
      %v347 = vadd.f32 0.0, %v346
      %v348 = vpop.f32.mrf.mxu0
      %v349 = vpop.f32.mrf.mxu0
      %v350 = vpop.f32.mrf.mxu0
      %351 = vdwg.mxu0
      %v352 = vmul.f32 %v347, 0.35355338
      %v353 = vadd.f32 %v352, %v300
      %v354 = vsel %vm305, %v353, -inf
      %355 = vmax.xlane.f32.xlu0 %v354
      %v356 = vpop.xlane.xlu0 %355
      %v357 = vsub.f32 %v353, %v356
      %v358 = vmul.f32 %v357, 1.442695
      %v359 = vpow.pop %v358
      %v360 = vsel %vm305, %v359, 0.0
      %361 = vadd.xlane.f32.xlu0 %v360
      %v362 = vpop.xlane.xlu0 %361
      %v363 = vrcp.pop %v362
      %v364 = vmul.f32 %v359, %v363
      %v365 = vpack.c.bf16 %v364, %v364
      %366 = vrot.lane.b32.xlu0 %v301, 64
      %v367 = vpop.permute.xlu0 %366
      %v369 = vsel %vm305, %v365, 0
      %vm371 = vcmask 1043456
      %v373 = vsel %vm371, %v367, 0
      %375 = vmatprep.subr.bf16.mxu0 0
      %376 = vmatpush1.bf16.msra.mxu0 0
      %377 = vmatprep.subr.bf16.mxu0 0
      %378 = vmatpush1.bf16.msra.mxu0 0
      %379 = vmatprep.subr.bf16.mxu0 0
      %380 = vmatpush1.bf16.msra.mxu0 0
      %381 = vmatprep.subr.bf16.mxu0 0
      %382 = vmatpush1.bf16.msra.mxu0 0
      %383 = vmatprep.subr.bf16.mxu0 0
      %384 = vmatpush1.bf16.msra.mxu0 0
      %385 = vmatprep.subr.bf16.mxu0 0
      %386 = vmatpush1.bf16.msra.mxu0 0
      %387 = vmatprep.subr.bf16.mxu0 0
      %388 = vmatpush1.bf16.msra.mxu0 0
      %389 = vmatprep.subr.bf16.mxu0 0
      %390 = vmatpush1.bf16.msra.mxu0 %v373
      %391 = vmatprep.subr.bf16.mxu0 0
      %392 = vmatpush2.bf16.msra.mxu0 0
      %393 = vmatprep.subr.bf16.mxu0 0
      %394 = vmatpush2.bf16.msra.mxu0 0
      %395 = vmatprep.subr.bf16.mxu0 0
      %396 = vmatpush2.bf16.msra.mxu0 0
      %397 = vmatprep.subr.bf16.mxu0 0
      %398 = vmatpush2.bf16.msra.mxu0 0
      %399 = vmatprep.subr.bf16.mxu0 0
      %400 = vmatpush2.bf16.msra.mxu0 0
      %401 = vmatprep.subr.bf16.mxu0 0
      %402 = vmatpush2.bf16.msra.mxu0 0
      %403 = vmatprep.subr.bf16.mxu0 0
      %404 = vmatpush2.bf16.msra.mxu0 0
      %405 = vmatprep.subr.bf16.mxu0 0
      %406 = vmatpush2.bf16.msra.mxu0 0
      %407 = vmatprep.mubr.bf16.mxu0 0
      %408 = vmatmul.mubr.bf16.gmra.mxu0 %v369
      %v409 = vpop.f32.mrf.mxu0
      %v410 = vadd.f32 0.0, %v409
      %v411 = vpop.f32.mrf.mxu0
      %v412 = vpop.f32.mrf.mxu0
      %v413 = vpop.f32.mrf.mxu0
      %414 = vdwg.mxu0
      %v415 = vpack.c.bf16 %v410, %v410
      %416 = vrot.lane.b32.xlu0 %v301, 120
      %v417 = vpop.permute.xlu0 %416
      %418 = vrot.lane.b32.xlu0 %v301, 88
      %v419 = vpop.permute.xlu0 %418
      %v421 = vsel %vm305, %v417, 0
      %v424 = vsel %vm305, %v419, 0
      %426 = vmatprep.subr.bf16.mxu0 0
      %427 = vmatpush1.bf16.xpose.msra.mxu0 0
      %428 = vmatprep.subr.bf16.mxu0 0
      %429 = vmatpush1.bf16.xpose.msra.mxu0 0
      %430 = vmatprep.subr.bf16.mxu0 0
      %431 = vmatpush1.bf16.xpose.msra.mxu0 0
      %432 = vmatprep.subr.bf16.mxu0 0
      %433 = vmatpush1.bf16.xpose.msra.mxu0 0
      %434 = vmatprep.subr.bf16.mxu0 0
      %435 = vmatpush1.bf16.xpose.msra.mxu0 0
      %436 = vmatprep.subr.bf16.mxu0 0
      %437 = vmatpush1.bf16.xpose.msra.mxu0 0
      %438 = vmatprep.subr.bf16.mxu0 0
      %439 = vmatpush1.bf16.xpose.msra.mxu0 0
      %440 = vmatprep.subr.bf16.mxu0 0
      %441 = vmatpush1.bf16.xpose.msra.mxu0 %v424
      %442 = vmatprep.subr.bf16.mxu0 0
      %443 = vmatpush2.bf16.xpose.msra.mxu0 0
      %444 = vmatprep.subr.bf16.mxu0 0
      %445 = vmatpush2.bf16.xpose.msra.mxu0 0
      %446 = vmatprep.subr.bf16.mxu0 0
      %447 = vmatpush2.bf16.xpose.msra.mxu0 0
      %448 = vmatprep.subr.bf16.mxu0 0
      %449 = vmatpush2.bf16.xpose.msra.mxu0 0
      %450 = vmatprep.subr.bf16.mxu0 0
      %451 = vmatpush2.bf16.xpose.msra.mxu0 0
      %452 = vmatprep.subr.bf16.mxu0 0
      %453 = vmatpush2.bf16.xpose.msra.mxu0 0
      %454 = vmatprep.subr.bf16.mxu0 0
      %455 = vmatpush2.bf16.xpose.msra.mxu0 0
      %456 = vmatprep.subr.bf16.mxu0 0
      %457 = vmatpush2.bf16.xpose.msra.mxu0 0
      %458 = vmatprep.mubr.bf16.mxu0 0
      %459 = vmatmul.mubr.bf16.gmra.mxu0 %v421
      %v460 = vpop.f32.mrf.mxu0
      %v461 = vadd.f32 0.0, %v460
      %v462 = vpop.f32.mrf.mxu0
      %v463 = vpop.f32.mrf.mxu0
      %v464 = vpop.f32.mrf.mxu0
      %465 = vdwg.mxu0
      %v466 = vmul.f32 %v461, 0.35355338
      %v467 = vadd.f32 %v466, %v300
      %v468 = vsel %vm305, %v467, -inf
      %469 = vmax.xlane.f32.xlu0 %v468
      %v470 = vpop.xlane.xlu0 %469
      %v471 = vsub.f32 %v467, %v470
      %v472 = vmul.f32 %v471, 1.442695
      %v473 = vpow.pop %v472
      %v474 = vsel %vm305, %v473, 0.0
      %475 = vadd.xlane.f32.xlu0 %v474
      %v476 = vpop.xlane.xlu0 %475
      %v477 = vrcp.pop %v476
      %v478 = vmul.f32 %v473, %v477
      %v479 = vpack.c.bf16 %v478, %v478
      %480 = vrot.lane.b32.xlu0 %v301, 56
      %v481 = vpop.permute.xlu0 %480
      %v483 = vsel %vm305, %v479, 0
      %v486 = vsel %vm371, %v481, 0
      %488 = vmatprep.subr.bf16.mxu0 0
      %489 = vmatpush1.bf16.msra.mxu0 0
      %490 = vmatprep.subr.bf16.mxu0 0
      %491 = vmatpush1.bf16.msra.mxu0 0
      %492 = vmatprep.subr.bf16.mxu0 0
      %493 = vmatpush1.bf16.msra.mxu0 0
      %494 = vmatprep.subr.bf16.mxu0 0
      %495 = vmatpush1.bf16.msra.mxu0 0
      %496 = vmatprep.subr.bf16.mxu0 0
      %497 = vmatpush1.bf16.msra.mxu0 0
      %498 = vmatprep.subr.bf16.mxu0 0
      %499 = vmatpush1.bf16.msra.mxu0 0
      %500 = vmatprep.subr.bf16.mxu0 0
      %501 = vmatpush1.bf16.msra.mxu0 0
      %502 = vmatprep.subr.bf16.mxu0 0
      %503 = vmatpush1.bf16.msra.mxu0 %v486
      %504 = vmatprep.subr.bf16.mxu0 0
      %505 = vmatpush2.bf16.msra.mxu0 0
      %506 = vmatprep.subr.bf16.mxu0 0
      %507 = vmatpush2.bf16.msra.mxu0 0
      %508 = vmatprep.subr.bf16.mxu0 0
      %509 = vmatpush2.bf16.msra.mxu0 0
      %510 = vmatprep.subr.bf16.mxu0 0
      %511 = vmatpush2.bf16.msra.mxu0 0
      %512 = vmatprep.subr.bf16.mxu0 0
      %513 = vmatpush2.bf16.msra.mxu0 0
      %514 = vmatprep.subr.bf16.mxu0 0
      %515 = vmatpush2.bf16.msra.mxu0 0
      %516 = vmatprep.subr.bf16.mxu0 0
      %517 = vmatpush2.bf16.msra.mxu0 0
      %518 = vmatprep.subr.bf16.mxu0 0
      %519 = vmatpush2.bf16.msra.mxu0 0
      %520 = vmatprep.mubr.bf16.mxu0 0
      %521 = vmatmul.mubr.bf16.gmra.mxu0 %v483
      %v522 = vpop.f32.mrf.mxu0
      %v523 = vadd.f32 0.0, %v522
      %v524 = vpop.f32.mrf.mxu0
      %v525 = vpop.f32.mrf.mxu0
      %v526 = vpop.f32.mrf.mxu0
      %527 = vdwg.mxu0
      %v528 = vpack.c.bf16 %v523, %v523
      %v530 = vsel %vm305, %v528, 0
      %v533 = vsel %vm371, %v291, 0
      %535 = vmatprep.subr.bf16.mxu0 0
      %536 = vmatpush1.bf16.msra.mxu0 0
      %537 = vmatprep.subr.bf16.mxu0 0
      %538 = vmatpush1.bf16.msra.mxu0 0
      %539 = vmatprep.subr.bf16.mxu0 0
      %540 = vmatpush1.bf16.msra.mxu0 0
      %541 = vmatprep.subr.bf16.mxu0 0
      %542 = vmatpush1.bf16.msra.mxu0 0
      %543 = vmatprep.subr.bf16.mxu0 0
      %544 = vmatpush1.bf16.msra.mxu0 0
      %545 = vmatprep.subr.bf16.mxu0 0
      %546 = vmatpush1.bf16.msra.mxu0 0
      %547 = vmatprep.subr.bf16.mxu0 0
      %548 = vmatpush1.bf16.msra.mxu0 0
      %549 = vmatprep.subr.bf16.mxu0 0
      %550 = vmatpush1.bf16.msra.mxu0 %v533
      %551 = vmatprep.subr.bf16.mxu0 0
      %552 = vmatpush2.bf16.msra.mxu0 0
      %553 = vmatprep.subr.bf16.mxu0 0
      %554 = vmatpush2.bf16.msra.mxu0 0
      %555 = vmatprep.subr.bf16.mxu0 0
      %556 = vmatpush2.bf16.msra.mxu0 0
      %557 = vmatprep.subr.bf16.mxu0 0
      %558 = vmatpush2.bf16.msra.mxu0 0
      %559 = vmatprep.subr.bf16.mxu0 0
      %560 = vmatpush2.bf16.msra.mxu0 0
      %561 = vmatprep.subr.bf16.mxu0 0
      %562 = vmatpush2.bf16.msra.mxu0 0
      %563 = vmatprep.subr.bf16.mxu0 0
      %564 = vmatpush2.bf16.msra.mxu0 0
      %565 = vmatprep.subr.bf16.mxu0 0
      %566 = vmatpush2.bf16.msra.mxu0 0
      %567 = vmatprep.mubr.bf16.mxu0 0
      %568 = vmatmul.mubr.bf16.gmra.mxu0 %v530
      %v569 = vpop.f32.mrf.mxu0
      %v570 = vadd.f32 0.0, %v569
      %v571 = vpop.f32.mrf.mxu0
      %v572 = vpop.f32.mrf.mxu0
      %v573 = vpop.f32.mrf.mxu0
      %574 = vdwg.mxu0
      %v576 = vsel %vm305, %v415, 0
      %v579 = vsel %vm371, %v290, 0
      %581 = vmatprep.subr.bf16.mxu0 0
      %582 = vmatpush1.bf16.msra.mxu0 0
      %583 = vmatprep.subr.bf16.mxu0 0
      %584 = vmatpush1.bf16.msra.mxu0 0
      %585 = vmatprep.subr.bf16.mxu0 0
      %586 = vmatpush1.bf16.msra.mxu0 0
      %587 = vmatprep.subr.bf16.mxu0 0
      %588 = vmatpush1.bf16.msra.mxu0 0
      %589 = vmatprep.subr.bf16.mxu0 0
      %590 = vmatpush1.bf16.msra.mxu0 0
      %591 = vmatprep.subr.bf16.mxu0 0
      %592 = vmatpush1.bf16.msra.mxu0 0
      %593 = vmatprep.subr.bf16.mxu0 0
      %594 = vmatpush1.bf16.msra.mxu0 0
      %595 = vmatprep.subr.bf16.mxu0 0
      %596 = vmatpush1.bf16.msra.mxu0 %v579
      %597 = vmatprep.subr.bf16.mxu0 0
      %598 = vmatpush2.bf16.msra.mxu0 0
      %599 = vmatprep.subr.bf16.mxu0 0
      %600 = vmatpush2.bf16.msra.mxu0 0
      %601 = vmatprep.subr.bf16.mxu0 0
      %602 = vmatpush2.bf16.msra.mxu0 0
      %603 = vmatprep.subr.bf16.mxu0 0
      %604 = vmatpush2.bf16.msra.mxu0 0
      %605 = vmatprep.subr.bf16.mxu0 0
      %606 = vmatpush2.bf16.msra.mxu0 0
      %607 = vmatprep.subr.bf16.mxu0 0
      %608 = vmatpush2.bf16.msra.mxu0 0
      %609 = vmatprep.subr.bf16.mxu0 0
      %610 = vmatpush2.bf16.msra.mxu0 0
      %611 = vmatprep.subr.bf16.mxu0 0
      %612 = vmatpush2.bf16.msra.mxu0 0
      %613 = vmatprep.mubr.bf16.mxu0 0
      %614 = vmatmul.mubr.bf16.gmra.mxu0 %v576
      %v615 = vpop.f32.mrf.mxu0
      %v616 = vadd.f32 %v570, %v615
      %v617 = vpop.f32.mrf.mxu0
      %v618 = vpop.f32.mrf.mxu0
      %v619 = vpop.f32.mrf.mxu0
      %620 = vdwg.mxu0
      %621 = vrot.lane.b32.xlu0 %v301, 112
      %v622 = vpop.permute.xlu0 %621
      %623 = vrot.lane.b32.xlu0 %v301, 80
      %v624 = vpop.permute.xlu0 %623
      %v626 = vsel %vm305, %v622, 0
      %v629 = vsel %vm305, %v624, 0
      %631 = vmatprep.subr.bf16.mxu0 0
      %632 = vmatpush1.bf16.xpose.msra.mxu0 0
      %633 = vmatprep.subr.bf16.mxu0 0
      %634 = vmatpush1.bf16.xpose.msra.mxu0 0
      %635 = vmatprep.subr.bf16.mxu0 0
      %636 = vmatpush1.bf16.xpose.msra.mxu0 0
      %637 = vmatprep.subr.bf16.mxu0 0
      %638 = vmatpush1.bf16.xpose.msra.mxu0 0
      %639 = vmatprep.subr.bf16.mxu0 0
      %640 = vmatpush1.bf16.xpose.msra.mxu0 0
      %641 = vmatprep.subr.bf16.mxu0 0
      %642 = vmatpush1.bf16.xpose.msra.mxu0 0
      %643 = vmatprep.subr.bf16.mxu0 0
      %644 = vmatpush1.bf16.xpose.msra.mxu0 0
      %645 = vmatprep.subr.bf16.mxu0 0
      %646 = vmatpush1.bf16.xpose.msra.mxu0 %v629
      %647 = vmatprep.subr.bf16.mxu0 0
      %648 = vmatpush2.bf16.xpose.msra.mxu0 0
      %649 = vmatprep.subr.bf16.mxu0 0
      %650 = vmatpush2.bf16.xpose.msra.mxu0 0
      %651 = vmatprep.subr.bf16.mxu0 0
      %652 = vmatpush2.bf16.xpose.msra.mxu0 0
      %653 = vmatprep.subr.bf16.mxu0 0
      %654 = vmatpush2.bf16.xpose.msra.mxu0 0
      %655 = vmatprep.subr.bf16.mxu0 0
      %656 = vmatpush2.bf16.xpose.msra.mxu0 0
      %657 = vmatprep.subr.bf16.mxu0 0
      %658 = vmatpush2.bf16.xpose.msra.mxu0 0
      %659 = vmatprep.subr.bf16.mxu0 0
      %660 = vmatpush2.bf16.xpose.msra.mxu0 0
      %661 = vmatprep.subr.bf16.mxu0 0
      %662 = vmatpush2.bf16.xpose.msra.mxu0 0
      %663 = vmatprep.mubr.bf16.mxu0 0
      %664 = vmatmul.mubr.bf16.gmra.mxu0 %v626
      %v665 = vpop.f32.mrf.mxu0
      %v666 = vadd.f32 0.0, %v665
      %v667 = vpop.f32.mrf.mxu0
      %v668 = vpop.f32.mrf.mxu0
      %v669 = vpop.f32.mrf.mxu0
      %670 = vdwg.mxu0
      %v671 = vmul.f32 %v666, 0.35355338
      %v672 = vadd.f32 %v671, %v300
      %v673 = vsel %vm305, %v672, -inf
      %674 = vmax.xlane.f32.xlu0 %v673
      %v675 = vpop.xlane.xlu0 %674
      %v676 = vsub.f32 %v672, %v675
      %v677 = vmul.f32 %v676, 1.442695
      %v678 = vpow.pop %v677
      %v679 = vsel %vm305, %v678, 0.0
      %680 = vadd.xlane.f32.xlu0 %v679
      %v681 = vpop.xlane.xlu0 %680
      %v682 = vrcp.pop %v681
      %v683 = vmul.f32 %v678, %v682
      %v684 = vpack.c.bf16 %v683, %v683
      %685 = vrot.lane.b32.xlu0 %v301, 48
      %v686 = vpop.permute.xlu0 %685
      %v688 = vsel %vm305, %v684, 0
      %v691 = vsel %vm371, %v686, 0
      %693 = vmatprep.subr.bf16.mxu0 0
      %694 = vmatpush1.bf16.msra.mxu0 0
      %695 = vmatprep.subr.bf16.mxu0 0
      %696 = vmatpush1.bf16.msra.mxu0 0
      %697 = vmatprep.subr.bf16.mxu0 0
      %698 = vmatpush1.bf16.msra.mxu0 0
      %699 = vmatprep.subr.bf16.mxu0 0
      %700 = vmatpush1.bf16.msra.mxu0 0
      %701 = vmatprep.subr.bf16.mxu0 0
      %702 = vmatpush1.bf16.msra.mxu0 0
      %703 = vmatprep.subr.bf16.mxu0 0
      %704 = vmatpush1.bf16.msra.mxu0 0
      %705 = vmatprep.subr.bf16.mxu0 0
      %706 = vmatpush1.bf16.msra.mxu0 0
      %707 = vmatprep.subr.bf16.mxu0 0
      %708 = vmatpush1.bf16.msra.mxu0 %v691
      %709 = vmatprep.subr.bf16.mxu0 0
      %710 = vmatpush2.bf16.msra.mxu0 0
      %711 = vmatprep.subr.bf16.mxu0 0
      %712 = vmatpush2.bf16.msra.mxu0 0
      %713 = vmatprep.subr.bf16.mxu0 0
      %714 = vmatpush2.bf16.msra.mxu0 0
      %715 = vmatprep.subr.bf16.mxu0 0
      %716 = vmatpush2.bf16.msra.mxu0 0
      %717 = vmatprep.subr.bf16.mxu0 0
      %718 = vmatpush2.bf16.msra.mxu0 0
      %719 = vmatprep.subr.bf16.mxu0 0
      %720 = vmatpush2.bf16.msra.mxu0 0
      %721 = vmatprep.subr.bf16.mxu0 0
      %722 = vmatpush2.bf16.msra.mxu0 0
      %723 = vmatprep.subr.bf16.mxu0 0
      %724 = vmatpush2.bf16.msra.mxu0 0
      %725 = vmatprep.mubr.bf16.mxu0 0
      %726 = vmatmul.mubr.bf16.gmra.mxu0 %v688
      %v727 = vpop.f32.mrf.mxu0
      %v728 = vadd.f32 0.0, %v727
      %v729 = vpop.f32.mrf.mxu0
      %v730 = vpop.f32.mrf.mxu0
      %v731 = vpop.f32.mrf.mxu0
      %732 = vdwg.mxu0
      %v733 = vpack.c.bf16 %v728, %v728
      %v735 = vsel %vm305, %v733, 0
      %v738 = vsel %vm371, %v292, 0
      %740 = vmatprep.subr.bf16.mxu0 0
      %741 = vmatpush1.bf16.msra.mxu0 0
      %742 = vmatprep.subr.bf16.mxu0 0
      %743 = vmatpush1.bf16.msra.mxu0 0
      %744 = vmatprep.subr.bf16.mxu0 0
      %745 = vmatpush1.bf16.msra.mxu0 0
      %746 = vmatprep.subr.bf16.mxu0 0
      %747 = vmatpush1.bf16.msra.mxu0 0
      %748 = vmatprep.subr.bf16.mxu0 0
      %749 = vmatpush1.bf16.msra.mxu0 0
      %750 = vmatprep.subr.bf16.mxu0 0
      %751 = vmatpush1.bf16.msra.mxu0 0
      %752 = vmatprep.subr.bf16.mxu0 0
      %753 = vmatpush1.bf16.msra.mxu0 0
      %754 = vmatprep.subr.bf16.mxu0 0
      %755 = vmatpush1.bf16.msra.mxu0 %v738
      %756 = vmatprep.subr.bf16.mxu0 0
      %757 = vmatpush2.bf16.msra.mxu0 0
      %758 = vmatprep.subr.bf16.mxu0 0
      %759 = vmatpush2.bf16.msra.mxu0 0
      %760 = vmatprep.subr.bf16.mxu0 0
      %761 = vmatpush2.bf16.msra.mxu0 0
      %762 = vmatprep.subr.bf16.mxu0 0
      %763 = vmatpush2.bf16.msra.mxu0 0
      %764 = vmatprep.subr.bf16.mxu0 0
      %765 = vmatpush2.bf16.msra.mxu0 0
      %766 = vmatprep.subr.bf16.mxu0 0
      %767 = vmatpush2.bf16.msra.mxu0 0
      %768 = vmatprep.subr.bf16.mxu0 0
      %769 = vmatpush2.bf16.msra.mxu0 0
      %770 = vmatprep.subr.bf16.mxu0 0
      %771 = vmatpush2.bf16.msra.mxu0 0
      %772 = vmatprep.mubr.bf16.mxu0 0
      %773 = vmatmul.mubr.bf16.gmra.mxu0 %v735
      %v774 = vpop.f32.mrf.mxu0
      %v775 = vadd.f32 0.0, %v774
      %v776 = vpop.f32.mrf.mxu0
      %v777 = vpop.f32.mrf.mxu0
      %v778 = vpop.f32.mrf.mxu0
      %779 = vdwg.mxu0
      %v780 = vadd.f32 %v616, %v775
      %781 = vrot.lane.b32.xlu0 %v301, 104
      %v782 = vpop.permute.xlu0 %781
      %783 = vrot.lane.b32.xlu0 %v301, 72
      %v784 = vpop.permute.xlu0 %783
      %v786 = vsel %vm305, %v782, 0
      %v789 = vsel %vm305, %v784, 0
      %791 = vmatprep.subr.bf16.mxu0 0
      %792 = vmatpush1.bf16.xpose.msra.mxu0 0
      %793 = vmatprep.subr.bf16.mxu0 0
      %794 = vmatpush1.bf16.xpose.msra.mxu0 0
      %795 = vmatprep.subr.bf16.mxu0 0
      %796 = vmatpush1.bf16.xpose.msra.mxu0 0
      %797 = vmatprep.subr.bf16.mxu0 0
      %798 = vmatpush1.bf16.xpose.msra.mxu0 0
      %799 = vmatprep.subr.bf16.mxu0 0
      %800 = vmatpush1.bf16.xpose.msra.mxu0 0
      %801 = vmatprep.subr.bf16.mxu0 0
      %802 = vmatpush1.bf16.xpose.msra.mxu0 0
      %803 = vmatprep.subr.bf16.mxu0 0
      %804 = vmatpush1.bf16.xpose.msra.mxu0 0
      %805 = vmatprep.subr.bf16.mxu0 0
      %806 = vmatpush1.bf16.xpose.msra.mxu0 %v789
      %807 = vmatprep.subr.bf16.mxu0 0
      %808 = vmatpush2.bf16.xpose.msra.mxu0 0
      %809 = vmatprep.subr.bf16.mxu0 0
      %810 = vmatpush2.bf16.xpose.msra.mxu0 0
      %811 = vmatprep.subr.bf16.mxu0 0
      %812 = vmatpush2.bf16.xpose.msra.mxu0 0
      %813 = vmatprep.subr.bf16.mxu0 0
      %814 = vmatpush2.bf16.xpose.msra.mxu0 0
      %815 = vmatprep.subr.bf16.mxu0 0
      %816 = vmatpush2.bf16.xpose.msra.mxu0 0
      %817 = vmatprep.subr.bf16.mxu0 0
      %818 = vmatpush2.bf16.xpose.msra.mxu0 0
      %819 = vmatprep.subr.bf16.mxu0 0
      %820 = vmatpush2.bf16.xpose.msra.mxu0 0
      %821 = vmatprep.subr.bf16.mxu0 0
      %822 = vmatpush2.bf16.xpose.msra.mxu0 0
      %823 = vmatprep.mubr.bf16.mxu0 0
      %824 = vmatmul.mubr.bf16.gmra.mxu0 %v786
      %v825 = vpop.f32.mrf.mxu0
      %v826 = vadd.f32 0.0, %v825
      %v827 = vpop.f32.mrf.mxu0
      %v828 = vpop.f32.mrf.mxu0
      %v829 = vpop.f32.mrf.mxu0
      %830 = vdwg.mxu0
      %v831 = vmul.f32 %v826, 0.35355338
      %v832 = vadd.f32 %v831, %v300
      %v833 = vsel %vm305, %v832, -inf
      %834 = vmax.xlane.f32.xlu0 %v833
      %v835 = vpop.xlane.xlu0 %834
      %v836 = vsub.f32 %v832, %v835
      %v837 = vmul.f32 %v836, 1.442695
      %v838 = vpow.pop %v837
      %v839 = vsel %vm305, %v838, 0.0
      %840 = vadd.xlane.f32.xlu0 %v839
      %v841 = vpop.xlane.xlu0 %840
      %v842 = vrcp.pop %v841
      %v843 = vmul.f32 %v838, %v842
      %v844 = vpack.c.bf16 %v843, %v843
      %845 = vrot.lane.b32.xlu0 %v301, 40
      %v846 = vpop.permute.xlu0 %845
      %v848 = vsel %vm305, %v844, 0
      %v851 = vsel %vm371, %v846, 0
      %853 = vmatprep.subr.bf16.mxu0 0
      %854 = vmatpush1.bf16.msra.mxu0 0
      %855 = vmatprep.subr.bf16.mxu0 0
      %856 = vmatpush1.bf16.msra.mxu0 0
      %857 = vmatprep.subr.bf16.mxu0 0
      %858 = vmatpush1.bf16.msra.mxu0 0
      %859 = vmatprep.subr.bf16.mxu0 0
      %860 = vmatpush1.bf16.msra.mxu0 0
      %861 = vmatprep.subr.bf16.mxu0 0
      %862 = vmatpush1.bf16.msra.mxu0 0
      %863 = vmatprep.subr.bf16.mxu0 0
      %864 = vmatpush1.bf16.msra.mxu0 0
      %865 = vmatprep.subr.bf16.mxu0 0
      %866 = vmatpush1.bf16.msra.mxu0 0
      %867 = vmatprep.subr.bf16.mxu0 0
      %868 = vmatpush1.bf16.msra.mxu0 %v851
      %869 = vmatprep.subr.bf16.mxu0 0
      %870 = vmatpush2.bf16.msra.mxu0 0
      %871 = vmatprep.subr.bf16.mxu0 0
      %872 = vmatpush2.bf16.msra.mxu0 0
      %873 = vmatprep.subr.bf16.mxu0 0
      %874 = vmatpush2.bf16.msra.mxu0 0
      %875 = vmatprep.subr.bf16.mxu0 0
      %876 = vmatpush2.bf16.msra.mxu0 0
      %877 = vmatprep.subr.bf16.mxu0 0
      %878 = vmatpush2.bf16.msra.mxu0 0
      %879 = vmatprep.subr.bf16.mxu0 0
      %880 = vmatpush2.bf16.msra.mxu0 0
      %881 = vmatprep.subr.bf16.mxu0 0
      %882 = vmatpush2.bf16.msra.mxu0 0
      %883 = vmatprep.subr.bf16.mxu0 0
      %884 = vmatpush2.bf16.msra.mxu0 0
      %885 = vmatprep.mubr.bf16.mxu0 0
      %886 = vmatmul.mubr.bf16.gmra.mxu0 %v848
      %v887 = vpop.f32.mrf.mxu0
      %v888 = vadd.f32 0.0, %v887
      %v889 = vpop.f32.mrf.mxu0
      %v890 = vpop.f32.mrf.mxu0
      %v891 = vpop.f32.mrf.mxu0
      %892 = vdwg.mxu0
      %v893 = vpack.c.bf16 %v888, %v888
      %v895 = vsel %vm305, %v893, 0
      %v898 = vsel %vm371, %v293, 0
      %900 = vmatprep.subr.bf16.mxu0 0
      %901 = vmatpush1.bf16.msra.mxu0 0
      %902 = vmatprep.subr.bf16.mxu0 0
      %903 = vmatpush1.bf16.msra.mxu0 0
      %904 = vmatprep.subr.bf16.mxu0 0
      %905 = vmatpush1.bf16.msra.mxu0 0
      %906 = vmatprep.subr.bf16.mxu0 0
      %907 = vmatpush1.bf16.msra.mxu0 0
      %908 = vmatprep.subr.bf16.mxu0 0
      %909 = vmatpush1.bf16.msra.mxu0 0
      %910 = vmatprep.subr.bf16.mxu0 0
      %911 = vmatpush1.bf16.msra.mxu0 0
      %912 = vmatprep.subr.bf16.mxu0 0
      %913 = vmatpush1.bf16.msra.mxu0 0
      %914 = vmatprep.subr.bf16.mxu0 0
      %915 = vmatpush1.bf16.msra.mxu0 %v898
      %916 = vmatprep.subr.bf16.mxu0 0
      %917 = vmatpush2.bf16.msra.mxu0 0
      %918 = vmatprep.subr.bf16.mxu0 0
      %919 = vmatpush2.bf16.msra.mxu0 0
      %920 = vmatprep.subr.bf16.mxu0 0
      %921 = vmatpush2.bf16.msra.mxu0 0
      %922 = vmatprep.subr.bf16.mxu0 0
      %923 = vmatpush2.bf16.msra.mxu0 0
      %924 = vmatprep.subr.bf16.mxu0 0
      %925 = vmatpush2.bf16.msra.mxu0 0
      %926 = vmatprep.subr.bf16.mxu0 0
      %927 = vmatpush2.bf16.msra.mxu0 0
      %928 = vmatprep.subr.bf16.mxu0 0
      %929 = vmatpush2.bf16.msra.mxu0 0
      %930 = vmatprep.subr.bf16.mxu0 0
      %931 = vmatpush2.bf16.msra.mxu0 0
      %932 = vmatprep.mubr.bf16.mxu0 0
      %933 = vmatmul.mubr.bf16.gmra.mxu0 %v895
      %v934 = vpop.f32.mrf.mxu0
      %v935 = vadd.f32 0.0, %v934
      %v936 = vpop.f32.mrf.mxu0
      %v937 = vpop.f32.mrf.mxu0
      %v938 = vpop.f32.mrf.mxu0
      %939 = vdwg.mxu0
      %v940 = vadd.f32 %v780, %v935
      %v942 = vlaneseq
      %v943 = vshrl.u32 %v942, 7
      %v944 = vsub.s32 0, %v943
      %v945 = vrot.slane %v294, %v944
      %v947 = vadd.f32 %v940, %v945
      %948 = vst.msk [vmem:[%s219] sm:$0xff] %vm246, %v947
      %p949 = scmp.lt.s32.totalorder %s16, 1
      %s950 = scalar_select %p949, %s16, 1
      %s951 = smul.addr %s950, 8
      %s952 = scalar_lea.vmem %s5, %s951
      // Predicated region
      $region41: #{transformer_forward.15} parent=39 // pred_check
        %p953 = pneg %p144
      $region42: #{transformer_forward.15} parent=39 // pred_check_branch
        %955 = sbr.rel (%p953) target = $region44
      $region43: #{transformer_forward.15} parent=39 // pred_region
        _
      $region44: #{transformer_forward.15} parent=39 // pred_fallthru
        _
    $region40: #{transformer_forward.15} parent=5 // pred_fallthru
      _
    %p956 = scmp.le.s32.totalorder 2, %s11
    // Predicated region
    $region45: #{transformer_forward.15} parent=5 // pred_check
      %p957 = pneg %p956
    $region46: #{transformer_forward.15} parent=5 // pred_check_branch
      %959 = sbr.rel (%p957) target = $region48
    $region47: #{transformer_forward.15} parent=5 // pred_region
      %s960 = ssub.s32 %s11, 2
      // Predicated region
      $region49: #{transformer_forward.15} parent=47 // pred_check
        %p961 = pneg %p150
      $region50: #{transformer_forward.15} parent=47 // pred_check_branch
        %963 = sbr.rel (%p961) target = $region52
      $region51: #{transformer_forward.15} parent=47 // pred_region
        %p964 = scmp.lt.s32.totalorder %s17, 1
        %s965 = scalar_select %p964, %s17, 1
        %s966 = smul.addr %s965, 8
        %s967 = scalar_lea.vmem %s5, %s966
      $region52: #{transformer_forward.15} parent=47 // pred_fallthru
        _
    $region48: #{transformer_forward.15} parent=5 // pred_fallthru
      _
  $region6: #{transformer_forward.15} parent=0 // loop_footer
    %s15 = sadd.s32 1, %s11
  $region7: #{transformer_forward.15} parent=0 // loop_footer_branch
    %10 = sbr.rel target = $region3
  $region8: #{transformer_forward.15} parent=0 // loop_exit
    _

// kernel: transformer_forward.17
$region0: #{transformer_forward.17}
  #allocation0 [shape = 'u32[]', space=smem, size = 0x4, offset = 0x4, fixed_abs, tag = 'smem constant byte address 0x4 - core index']
  #allocation1 [shape = 'u32[144,128]{1,0:T(1,128)}', space=vmem, size = 0x12000, scoped, tag = 'internal scratch']
  #allocation2 [shape = 'f32[16,32]{1,0:T(8,128)}', space=vmem, size = 0x2000, scoped, tag = 'scratch operand']
  %s0 = inlined_call_operand.vmem [shape: f32[16,32], index: 0, kind: input, shape index: {}]
  %s1 = inlined_call_operand.vmem [shape: bf16[32,64], index: 1, kind: input, shape index: {}]
  %s2 = inlined_call_operand.vmem [shape: f32[1,64], index: 2, kind: input, shape index: {}]
  %s3 = inlined_call_operand.vmem [shape: bf16[64,32], index: 3, kind: input, shape index: {}]
  %s4 = inlined_call_operand.vmem [shape: f32[1,32], index: 4, kind: input, shape index: {}]
  %s5 = inlined_call_operand.vmem [shape: f32[16,32], index: 5, kind: output, shape index: {}]
  %s6 = sld [smem:[#allocation0]]
  $region38: #{transformer_forward.17} parent=0
    _
  %s8 = ssub.s32 1, %s6
  %s9 = scalar_select 0, %s8, %s6
  // Predicated region
  $region2: #{transformer_forward.17} parent=0 // pred_check
    _
  $region3: #{transformer_forward.17} parent=0 // pred_check_branch
    %11 = sbr.rel (0) target = $region5
  $region4: #{transformer_forward.17} parent=0 // pred_region
    _
  $region5: #{transformer_forward.17} parent=0 // pred_fallthru
    _
  // Predicated region
  $region6: #{transformer_forward.17} parent=0 // pred_check
    _
  $region7: #{transformer_forward.17} parent=0 // pred_check_branch
    %13 = sbr.rel (0) target = $region9
  $region8: #{transformer_forward.17} parent=0 // pred_region
    _
  $region9: #{transformer_forward.17} parent=0 // pred_fallthru
    _
  // Predicated region
  $region10: #{transformer_forward.17} parent=0 // pred_check
    _
  $region11: #{transformer_forward.17} parent=0 // pred_check_branch
    %15 = sbr.rel (0) target = $region13
  $region12: #{transformer_forward.17} parent=0 // pred_region
    _
  $region13: #{transformer_forward.17} parent=0 // pred_fallthru
    _
  // Predicated region
  $region14: #{transformer_forward.17} parent=0 // pred_check
    _
  $region15: #{transformer_forward.17} parent=0 // pred_check_branch
    %17 = sbr.rel (0) target = $region17
  $region16: #{transformer_forward.17} parent=0 // pred_region
    _
  $region17: #{transformer_forward.17} parent=0 // pred_fallthru
    _
  // Predicated region
  $region18: #{transformer_forward.17} parent=0 // pred_check
    _
  $region19: #{transformer_forward.17} parent=0 // pred_check_branch
    %19 = sbr.rel (0) target = $region21
  $region20: #{transformer_forward.17} parent=0 // pred_region
    _
  $region21: #{transformer_forward.17} parent=0 // pred_fallthru
    _
  %p21 = scmp.eq.s32.totalorder 0, 0
  // Predicated region
  $region22: #{transformer_forward.17} parent=0 // pred_check
    %p22 = pneg %p21
  $region23: #{transformer_forward.17} parent=0 // pred_check_branch
    %24 = sbr.rel (%p22) target = $region25
  $region24: #{transformer_forward.17} parent=0 // pred_region
    %vm25 = vcmask 261120
    %26 = vst.msk [vmem:[#allocation2] sm:$0xff] %vm25, 0.0
    %27 = vst.msk [vmem:[#allocation2 + $0x8] sm:$0xff] %vm25, 0.0
  $region25: #{transformer_forward.17} parent=0 // pred_fallthru
    _
  %v28 = vld [vmem:[%s0] sm:$0xff]
  %v29 = vld [vmem:[%s0 + $0x8] sm:$0xff]
  %v30 = vpack.c.bf16 %v29, %v28
  %v31 = vld [vmem:[%s1] sm:$0xf]
  %v32 = vld [vmem:[%s1 + $0x4] sm:$0xf]
  %v33 = vld [vmem:[%s1 + $0x8] sm:$0xf]
  %v34 = vld [vmem:[%s1 + $0xc] sm:$0xf]
  %v35 = vld [vmem:[%s2] sm:$0x1]
  %v37 = vlaneseq
  %v38 = vshrl.u32 %v37, 7
  %v39 = vsub.s32 0, %v38
  %v40 = vrot.slane %v35, %v39
  %v46 = vunpack.c.l.b16 %v31
  %v47 = vunpack.c.l.b16 %v32
  %v48 = vunpack.c.l.b16 %v33
  %v49 = vunpack.c.l.b16 %v34
  %v50 = vpack.c.b16 %v47, %v46
  %v51 = vpack.c.b16 %v49, %v48
  %vm54 = vcmask 261120
  %v56 = vsel %vm54, %v30, 0
  %58 = vmatprep.subr.bf16.mxu0 0
  %59 = vmatpush1.bf16.msra.mxu0 0
  %60 = vmatprep.subr.bf16.mxu0 0
  %61 = vmatpush1.bf16.msra.mxu0 0
  %62 = vmatprep.subr.bf16.mxu0 0
  %63 = vmatpush1.bf16.msra.mxu0 0
  %64 = vmatprep.subr.bf16.mxu0 0
  %65 = vmatpush1.bf16.msra.mxu0 0
  %66 = vmatprep.subr.bf16.mxu0 0
  %67 = vmatpush1.bf16.msra.mxu0 0
  %68 = vmatprep.subr.bf16.mxu0 0
  %69 = vmatpush1.bf16.msra.mxu0 0
  %70 = vmatprep.subr.bf16.mxu0 0
  %71 = vmatpush1.bf16.msra.mxu0 %v51
  %72 = vmatprep.subr.bf16.mxu0 0
  %73 = vmatpush1.bf16.msra.mxu0 %v50
  %74 = vmatprep.subr.bf16.mxu0 0
  %75 = vmatpush2.bf16.msra.mxu0 0
  %76 = vmatprep.subr.bf16.mxu0 0
  %77 = vmatpush2.bf16.msra.mxu0 0
  %78 = vmatprep.subr.bf16.mxu0 0
  %79 = vmatpush2.bf16.msra.mxu0 0
  %80 = vmatprep.subr.bf16.mxu0 0
  %81 = vmatpush2.bf16.msra.mxu0 0
  %82 = vmatprep.subr.bf16.mxu0 0
  %83 = vmatpush2.bf16.msra.mxu0 0
  %84 = vmatprep.subr.bf16.mxu0 0
  %85 = vmatpush2.bf16.msra.mxu0 0
  %86 = vmatprep.subr.bf16.mxu0 0
  %87 = vmatpush2.bf16.msra.mxu0 0
  %88 = vmatprep.subr.bf16.mxu0 0
  %89 = vmatpush2.bf16.msra.mxu0 0
  %90 = vmatprep.mubr.bf16.mxu0 0
  %91 = vmatmul.mubr.bf16.gmra.mxu0 %v56
  %v92 = vpop.f32.mrf.mxu0
  %v93 = vadd.f32 %v40, %v92
  %v94 = vpop.f32.mrf.mxu0
  %v95 = vpop.f32.mrf.mxu0
  %v96 = vadd.f32 %v40, %v95
  %v97 = vpop.f32.mrf.mxu0
  %98 = vdwg.mxu0
  %v99 = vmax.f32 %v93, 0.0
  %v100 = vmax.f32 %v96, 0.0
  %v101 = vld [vmem:[#allocation2] sm:$0xff]
  %v102 = vld [vmem:[#allocation2 + $0x8] sm:$0xff]
  %v103 = vpack.c.bf16 %v100, %v99
  %v104 = vld [vmem:[%s3] sm:$0xf]
  %v105 = vld [vmem:[%s3 + $0x4] sm:$0xf]
  %v106 = vld [vmem:[%s3 + $0x8] sm:$0xf]
  %v107 = vld [vmem:[%s3 + $0xc] sm:$0xf]
  %v108 = vld [vmem:[%s3 + $0x10] sm:$0xf]
  %v109 = vld [vmem:[%s3 + $0x14] sm:$0xf]
  %v110 = vld [vmem:[%s3 + $0x18] sm:$0xf]
  %v111 = vld [vmem:[%s3 + $0x1c] sm:$0xf]
  %v120 = vunpack.c.l.b16 %v104
  %v121 = vunpack.c.l.b16 %v105
  %v122 = vunpack.c.l.b16 %v106
  %v123 = vunpack.c.l.b16 %v107
  %v124 = vunpack.c.l.b16 %v108
  %v125 = vunpack.c.l.b16 %v109
  %v126 = vunpack.c.l.b16 %v110
  %v127 = vunpack.c.l.b16 %v111
  %v128 = vpack.c.b16 %v121, %v120
  %v129 = vpack.c.b16 %v123, %v122
  %v130 = vpack.c.b16 %v125, %v124
  %v131 = vpack.c.b16 %v127, %v126
  %vm136 = vcmask 523264
  %v138 = vsel %vm136, %v103, 0
  %140 = vmatprep.subr.bf16.mxu0 0
  %141 = vmatpush1.bf16.msra.mxu0 0
  %142 = vmatprep.subr.bf16.mxu0 0
  %143 = vmatpush1.bf16.msra.mxu0 0
  %144 = vmatprep.subr.bf16.mxu0 0
  %145 = vmatpush1.bf16.msra.mxu0 0
  %146 = vmatprep.subr.bf16.mxu0 0
  %147 = vmatpush1.bf16.msra.mxu0 0
  %148 = vmatprep.subr.bf16.mxu0 0
  %149 = vmatpush1.bf16.msra.mxu0 %v131
  %150 = vmatprep.subr.bf16.mxu0 0
  %151 = vmatpush1.bf16.msra.mxu0 %v130
  %152 = vmatprep.subr.bf16.mxu0 0
  %153 = vmatpush1.bf16.msra.mxu0 %v129
  %154 = vmatprep.subr.bf16.mxu0 0
  %155 = vmatpush1.bf16.msra.mxu0 %v128
  %156 = vmatprep.subr.bf16.mxu0 0
  %157 = vmatpush2.bf16.msra.mxu0 0
  %158 = vmatprep.subr.bf16.mxu0 0
  %159 = vmatpush2.bf16.msra.mxu0 0
  %160 = vmatprep.subr.bf16.mxu0 0
  %161 = vmatpush2.bf16.msra.mxu0 0
  %162 = vmatprep.subr.bf16.mxu0 0
  %163 = vmatpush2.bf16.msra.mxu0 0
  %164 = vmatprep.subr.bf16.mxu0 0
  %165 = vmatpush2.bf16.msra.mxu0 0
  %166 = vmatprep.subr.bf16.mxu0 0
  %167 = vmatpush2.bf16.msra.mxu0 0
  %168 = vmatprep.subr.bf16.mxu0 0
  %169 = vmatpush2.bf16.msra.mxu0 0
  %170 = vmatprep.subr.bf16.mxu0 0
  %171 = vmatpush2.bf16.msra.mxu0 0
  %172 = vmatprep.mubr.bf16.mxu0 0
  %173 = vmatmul.mubr.bf16.gmra.mxu0 %v138
  %v174 = vpop.f32.mrf.mxu0
  %v175 = vadd.f32 0.0, %v174
  %v176 = vpop.f32.mrf.mxu0
  %v177 = vpop.f32.mrf.mxu0
  %v178 = vadd.f32 0.0, %v177
  %v179 = vpop.f32.mrf.mxu0
  %180 = vdwg.mxu0
  %v181 = vadd.f32 %v101, %v175
  %v182 = vadd.f32 %v102, %v178
  %183 = vst.msk [vmem:[#allocation2] sm:$0xff] %vm54, %v181
  %184 = vst.msk [vmem:[#allocation2 + $0x8] sm:$0xff] %vm54, %v182
  // Predicated region
  $region26: #{transformer_forward.17} parent=0 // pred_check
    %p185 = pneg %p21
  $region27: #{transformer_forward.17} parent=0 // pred_check_branch
    %187 = sbr.rel (%p185) target = $region29
  $region28: #{transformer_forward.17} parent=0 // pred_region
    %v188 = vld [vmem:[#allocation2] sm:$0xff]
    %v189 = vld [vmem:[#allocation2 + $0x8] sm:$0xff]
    %v190 = vld [vmem:[%s4] sm:$0x1]
    %v192 = vlaneseq
    %v193 = vshrl.u32 %v192, 7
    %v194 = vsub.s32 0, %v193
    %v195 = vrot.slane %v190, %v194
    %v197 = vadd.f32 %v188, %v195
    %v198 = vadd.f32 %v189, %v195
    %199 = vst.msk [vmem:[%s5] sm:$0xff] %vm54, %v197
    %200 = vst.msk [vmem:[%s5 + $0x8] sm:$0xff] %vm54, %v198
  $region29: #{transformer_forward.17} parent=0 // pred_fallthru
    _
  // Predicated region
  $region30: #{transformer_forward.17} parent=0 // pred_check
    _
  $region31: #{transformer_forward.17} parent=0 // pred_check_branch
    %202 = sbr.rel (0) target = $region33
  $region32: #{transformer_forward.17} parent=0 // pred_region
    _
  $region33: #{transformer_forward.17} parent=0 // pred_fallthru
    _
  // Predicated region
  $region34: #{transformer_forward.17} parent=0 // pred_check
    _
  $region35: #{transformer_forward.17} parent=0 // pred_check_branch
    %204 = sbr.rel (0) target = $region37
  $region36: #{transformer_forward.17} parent=0 // pred_region
    _
  $region37: #{transformer_forward.17} parent=0 // pred_fallthru
    _

// kernel: transformer_forward.21
$region0: #{transformer_forward.21}
  #allocation0 [shape = 'u32[]', space=smem, size = 0x4, offset = 0x4, fixed_abs, tag = 'smem constant byte address 0x4 - core index']
  #allocation1 [shape = 'u32[144,128]{1,0:T(1,128)}', space=vmem, size = 0x12000, scoped, tag = 'internal scratch']
  %s0 = inlined_call_operand.vmem [shape: f32[16,32], index: 0, kind: input, shape index: {}]
  %s1 = inlined_call_operand.vmem [shape: bf16[32,50], index: 1, kind: input, shape index: {}]
  %s2 = inlined_call_operand.hbm [shape: f32[16,50], index: 2, kind: output, shape index: {}]
  %s3 = sld [smem:[#allocation0]]
  $region18: #{transformer_forward.21} parent=0
    _
  %s5 = ssub.s32 1, %s3
  %s6 = scalar_select 0, %s5, %s3
  $region1: #{transformer_forward.21} parent=0
    #allocation2 [shape = 'u8[8192]{0}', space=vmem, size = 0x2000, scoped, tag = 'output window, operand 0, single buffered']
    #allocation3 [shape = 's32[1]{0}', space=sflag, size = 0x4, scoped, tag = 'scoped memory for transformer_forward.21']
    %7 = vsyncpa [#allocation3], 0
    // Predicated region
    $region2: #{transformer_forward.21} parent=1 // pred_check
      _
    $region3: #{transformer_forward.21} parent=1 // pred_check_branch
      %9 = sbr.rel (0) target = $region5
    $region4: #{transformer_forward.21} parent=1 // pred_region
      _
    $region5: #{transformer_forward.21} parent=1 // pred_fallthru
      _
    // Predicated region
    $region6: #{transformer_forward.21} parent=1 // pred_check
      _
    $region7: #{transformer_forward.21} parent=1 // pred_check_branch
      %11 = sbr.rel (0) target = $region9
    $region8: #{transformer_forward.21} parent=1 // pred_region
      _
    $region9: #{transformer_forward.21} parent=1 // pred_fallthru
      _
    %v13 = vld [vmem:[%s0] sm:$0xff]
    %v14 = vld [vmem:[%s0 + $0x8] sm:$0xff]
    %v15 = vpack.c.bf16 %v14, %v13
    %v16 = vld [vmem:[%s1] sm:$0xf]
    %v17 = vld [vmem:[%s1 + $0x4] sm:$0xf]
    %v18 = vld [vmem:[%s1 + $0x8] sm:$0xf]
    %v19 = vld [vmem:[%s1 + $0xc] sm:$0xf]
    %v24 = vunpack.c.l.b16 %v16
    %v25 = vunpack.c.l.b16 %v17
    %v26 = vunpack.c.l.b16 %v18
    %v27 = vunpack.c.l.b16 %v19
    %v28 = vpack.c.b16 %v25, %v24
    %v29 = vpack.c.b16 %v27, %v26
    %vm32 = vcmask 261120
    %v34 = vsel %vm32, %v15, 0
    %36 = vmatprep.subr.bf16.mxu0 0
    %37 = vmatpush1.bf16.msra.mxu0 0
    %38 = vmatprep.subr.bf16.mxu0 0
    %39 = vmatpush1.bf16.msra.mxu0 0
    %40 = vmatprep.subr.bf16.mxu0 0
    %41 = vmatpush1.bf16.msra.mxu0 0
    %42 = vmatprep.subr.bf16.mxu0 0
    %43 = vmatpush1.bf16.msra.mxu0 0
    %44 = vmatprep.subr.bf16.mxu0 0
    %45 = vmatpush1.bf16.msra.mxu0 0
    %46 = vmatprep.subr.bf16.mxu0 0
    %47 = vmatpush1.bf16.msra.mxu0 0
    %48 = vmatprep.subr.bf16.mxu0 0
    %49 = vmatpush1.bf16.msra.mxu0 %v29
    %50 = vmatprep.subr.bf16.mxu0 0
    %51 = vmatpush1.bf16.msra.mxu0 %v28
    %52 = vmatprep.subr.bf16.mxu0 0
    %53 = vmatpush2.bf16.msra.mxu0 0
    %54 = vmatprep.subr.bf16.mxu0 0
    %55 = vmatpush2.bf16.msra.mxu0 0
    %56 = vmatprep.subr.bf16.mxu0 0
    %57 = vmatpush2.bf16.msra.mxu0 0
    %58 = vmatprep.subr.bf16.mxu0 0
    %59 = vmatpush2.bf16.msra.mxu0 0
    %60 = vmatprep.subr.bf16.mxu0 0
    %61 = vmatpush2.bf16.msra.mxu0 0
    %62 = vmatprep.subr.bf16.mxu0 0
    %63 = vmatpush2.bf16.msra.mxu0 0
    %64 = vmatprep.subr.bf16.mxu0 0
    %65 = vmatpush2.bf16.msra.mxu0 0
    %66 = vmatprep.subr.bf16.mxu0 0
    %67 = vmatpush2.bf16.msra.mxu0 0
    %68 = vmatprep.mubr.bf16.mxu0 0
    %69 = vmatmul.mubr.bf16.gmra.mxu0 %v34
    %v70 = vpop.f32.mrf.mxu0
    %v71 = vadd.f32 0.0, %v70
    %v72 = vpop.f32.mrf.mxu0
    %v73 = vpop.f32.mrf.mxu0
    %v74 = vadd.f32 0.0, %v73
    %v75 = vpop.f32.mrf.mxu0
    %76 = vdwg.mxu0
    %vm77 = vcmask 408576
    %v78 = vsel %vm77, %v71, -inf
    %79 = vmax.xlane.f32.xlu0 %v78
    %v80 = vpop.xlane.xlu0 %79
    %v81 = vsel %vm77, %v74, -inf
    %82 = vmax.xlane.f32.xlu0 %v81
    %v83 = vpop.xlane.xlu0 %82
    %v84 = vsub.f32 %v71, %v80
    %v85 = vsub.f32 %v74, %v83
    %v86 = vmul.f32 %v84, 1.442695
    %v87 = vpow.pop %v86
    %v88 = vmul.f32 %v85, 1.442695
    %v89 = vpow.pop %v88
    %v90 = vsel %vm77, %v87, 0.0
    %91 = vadd.xlane.f32.xlu0 %v90
    %v92 = vpop.xlane.xlu0 %91
    %v93 = vsel %vm77, %v89, 0.0
    %94 = vadd.xlane.f32.xlu0 %v93
    %v95 = vpop.xlane.xlu0 %94
    %v96 = vrcp.pop %v92
    %v97 = vmul.f32 %v87, %v96
    %v98 = vrcp.pop %v95
    %v99 = vmul.f32 %v89, %v98
    %100 = vst.msk [vmem:[#allocation2] sm:$0xff] %vm77, %v97
    %101 = vst.msk [vmem:[#allocation2 + $0x8] sm:$0xff] %vm77, %v99
    // Predicated region
    $region10: #{transformer_forward.21} parent=1 // pred_check
      _
    $region11: #{transformer_forward.21} parent=1 // pred_check_branch
      %103 = sbr.rel (0) target = $region13
    $region12: #{transformer_forward.21} parent=1 // pred_region
      %s105 = ssub.s32 256, 256
      %106 = vsyncadd [#allocation3], %s105
      %s107 = sshll.u32 [#allocation2], 4
      %s108 = int_to_ptr.vmem [resolvable:$true] %s107
      %113 = dma.vmem_to_hbm [thread:$0]  %s108, 256, %s2, [#allocation3], 128, 128, 8
    $region13: #{transformer_forward.21} parent=1 // pred_fallthru
      _
    // Predicated region
    $region14: #{transformer_forward.21} parent=1 // pred_check
      _
    $region15: #{transformer_forward.21} parent=1 // pred_check_branch
      %115 = sbr.rel (0) target = $region17
    $region16: #{transformer_forward.21} parent=1 // pred_region
      %116 = dma.done [#allocation3], 256
    $region17: #{transformer_forward.21} parent=1 // pred_fallthru
      _
    %117 = vsyncpa [#allocation3], 1

// kernel: transformer_forward.16
$region0: #{transformer_forward.16}
  #allocation0 [shape = 'u32[]', space=smem, size = 0x4, offset = 0x4, fixed_abs, tag = 'smem constant byte address 0x4 - core index']
  #allocation1 [shape = 'u32[144,128]{1,0:T(1,128)}', space=vmem, size = 0x12000, scoped, tag = 'internal scratch']
  %s0 = inlined_call_operand.vmem [shape: f32[2,8,32], index: 0, kind: input, shape index: {}]
  %s1 = inlined_call_operand.vmem [shape: f32[2,12,32], index: 1, kind: input, shape index: {}]
  %s2 = inlined_call_operand.vmem [shape: bf16[32,32], index: 2, kind: input, shape index: {}]
  %s3 = inlined_call_operand.vmem [shape: f32[1,32], index: 3, kind: input, shape index: {}]
  %s4 = inlined_call_operand.vmem [shape: bf16[32,64], index: 4, kind: input, shape index: {}]
  %s5 = inlined_call_operand.vmem [shape: f32[1,64], index: 5, kind: input, shape index: {}]
  %s6 = inlined_call_operand.vmem [shape: bf16[32,32], index: 6, kind: input, shape index: {}]
  %s7 = inlined_call_operand.vmem [shape: f32[1,32], index: 7, kind: input, shape index: {}]
  %s8 = inlined_call_operand.vmem [shape: f32[2,8,32], index: 8, kind: output, shape index: {}]
  %s9 = sld [smem:[#allocation0]]
  $region65: #{transformer_forward.16} parent=0
    _
  %s11 = ssub.s32 1, %s9
  %s12 = scalar_select 0, %s11, %s9
  loop: start=0, step=1, limit=4
  $region2: #{transformer_forward.16} parent=0 // loop_pre_header
    _
  $region3: #{transformer_forward.16} parent=0 // loop_header
    %s14 = sphi 0, %s18
    %p15 = scmp.ge.s32.totalorder %s14, 4
    %s24 = sphi 0, %s26
    %s27 = sphi 0, %s24
    %s28 = sphi 0, %s27
    %s44 = sphi 0, %s28
    %s50 = sphi 0, %s52
    %s53 = sphi 0, %s50
    %s54 = sphi 0, %s53
    %s70 = sphi 0, %s54
    %s74 = sphi 0, %s74
    %s76 = sphi 0, %s74
    %s77 = sphi 0, %s76
    %s91 = sphi 0, %s77
    %s95 = sphi 0, %s95
    %s97 = sphi 0, %s95
    %s98 = sphi 0, %s97
    %s112 = sphi 0, %s98
    %s116 = sphi 0, %s116
    %s118 = sphi 0, %s116
    %s119 = sphi 0, %s118
    %s133 = sphi 0, %s119
    %s137 = sphi 0, %s137
    %s139 = sphi 0, %s137
    %s140 = sphi 0, %s139
    %s154 = sphi 0, %s140
    %s158 = sphi 0, %s158
    %s160 = sphi 0, %s158
    %s161 = sphi 0, %s160
    %s175 = sphi 0, %s161
    %s179 = sphi 0, %s179
    %s181 = sphi 0, %s179
    %s182 = sphi 0, %s181
    %s196 = sphi 0, %s182
    %s202 = sphi 0, %s204
    %s205 = sphi 0, %s202
    %s206 = sphi 0, %s205
    %s222 = sphi 0, %s206
  $region4: #{transformer_forward.16} parent=0 // loop_header_branch
    %17 = sbr.rel (%p15) target = $region8
  $region5: #{transformer_forward.16} parent=0 // loop_body
    %s19 = ssub.s32 %s14, 1
    %s20 = ssub.s32 %s14, 2
    %s21 = sadd.s32 %s14, 1
    %s22 = ssub.s32 %s14, %s21
    %p23 = scmp.eq.s32.totalorder %s22, 0
    %s25 = sadd.s32 %s24, 1
    %s26 = scalar_select %p23, %s24, %s25
    %p29 = pneg %p23
    %p30 = scmp.eq.s32.totalorder %s14, 1
    %p31 = por %p29, %p30
    %p32 = scmp.ne.s32.totalorder %s24, %s27
    %p33 = scmp.eq.s32.totalorder %s14, 0
    %p34 = por %p32, %p33
    %p35 = scmp.ne.s32.totalorder %s24, %s27
    %p36 = scmp.eq.s32.totalorder %s19, 1
    %p37 = por %p35, %p36
    %p38 = scmp.ne.s32.totalorder %s27, %s28
    %p39 = scmp.eq.s32.totalorder %s19, 0
    %p40 = por %p38, %p39
    %p41 = scmp.ne.s32.totalorder %s27, %s28
    %p42 = scmp.eq.s32.totalorder %s20, 1
    %p43 = por %p41, %p42
    %p45 = scmp.ne.s32.totalorder %s28, %s44
    %p46 = scmp.eq.s32.totalorder %s20, 0
    %p47 = por %p45, %p46
    %s48 = ssub.s32 %s14, %s21
    %p49 = scmp.eq.s32.totalorder %s48, 0
    %s51 = sadd.s32 %s50, 1
    %s52 = scalar_select %p49, %s50, %s51
    %p55 = pneg %p49
    %p56 = scmp.eq.s32.totalorder %s14, 1
    %p57 = por %p55, %p56
    %p58 = scmp.ne.s32.totalorder %s50, %s53
    %p59 = scmp.eq.s32.totalorder %s14, 0
    %p60 = por %p58, %p59
    %p61 = scmp.ne.s32.totalorder %s50, %s53
    %p62 = scmp.eq.s32.totalorder %s19, 1
    %p63 = por %p61, %p62
    %p64 = scmp.ne.s32.totalorder %s53, %s54
    %p65 = scmp.eq.s32.totalorder %s19, 0
    %p66 = por %p64, %p65
    %p67 = scmp.ne.s32.totalorder %s53, %s54
    %p68 = scmp.eq.s32.totalorder %s20, 1
    %p69 = por %p67, %p68
    %p71 = scmp.ne.s32.totalorder %s54, %s70
    %p72 = scmp.eq.s32.totalorder %s20, 0
    %p73 = por %p71, %p72
    %s75 = sadd.s32 %s74, 1
    %p78 = scmp.eq.s32.totalorder %s14, 1
    %p79 = scmp.ne.s32.totalorder %s74, %s76
    %p80 = scmp.eq.s32.totalorder %s14, 0
    %p81 = por %p79, %p80
    %p82 = scmp.ne.s32.totalorder %s74, %s76
    %p83 = scmp.eq.s32.totalorder %s19, 1
    %p84 = por %p82, %p83
    %p85 = scmp.ne.s32.totalorder %s76, %s77
    %p86 = scmp.eq.s32.totalorder %s19, 0
    %p87 = por %p85, %p86
    %p88 = scmp.ne.s32.totalorder %s76, %s77
    %p89 = scmp.eq.s32.totalorder %s20, 1
    %p90 = por %p88, %p89
    %p92 = scmp.ne.s32.totalorder %s77, %s91
    %p93 = scmp.eq.s32.totalorder %s20, 0
    %p94 = por %p92, %p93
    %s96 = sadd.s32 %s95, 1
    %p99 = scmp.eq.s32.totalorder %s14, 1
    %p100 = scmp.ne.s32.totalorder %s95, %s97
    %p101 = scmp.eq.s32.totalorder %s14, 0
    %p102 = por %p100, %p101
    %p103 = scmp.ne.s32.totalorder %s95, %s97
    %p104 = scmp.eq.s32.totalorder %s19, 1
    %p105 = por %p103, %p104
    %p106 = scmp.ne.s32.totalorder %s97, %s98
    %p107 = scmp.eq.s32.totalorder %s19, 0
    %p108 = por %p106, %p107
    %p109 = scmp.ne.s32.totalorder %s97, %s98
    %p110 = scmp.eq.s32.totalorder %s20, 1
    %p111 = por %p109, %p110
    %p113 = scmp.ne.s32.totalorder %s98, %s112
    %p114 = scmp.eq.s32.totalorder %s20, 0
    %p115 = por %p113, %p114
    %s117 = sadd.s32 %s116, 1
    %p120 = scmp.eq.s32.totalorder %s14, 1
    %p121 = scmp.ne.s32.totalorder %s116, %s118
    %p122 = scmp.eq.s32.totalorder %s14, 0
    %p123 = por %p121, %p122
    %p124 = scmp.ne.s32.totalorder %s116, %s118
    %p125 = scmp.eq.s32.totalorder %s19, 1
    %p126 = por %p124, %p125
    %p127 = scmp.ne.s32.totalorder %s118, %s119
    %p128 = scmp.eq.s32.totalorder %s19, 0
    %p129 = por %p127, %p128
    %p130 = scmp.ne.s32.totalorder %s118, %s119
    %p131 = scmp.eq.s32.totalorder %s20, 1
    %p132 = por %p130, %p131
    %p134 = scmp.ne.s32.totalorder %s119, %s133
    %p135 = scmp.eq.s32.totalorder %s20, 0
    %p136 = por %p134, %p135
    %s138 = sadd.s32 %s137, 1
    %p141 = scmp.eq.s32.totalorder %s14, 1
    %p142 = scmp.ne.s32.totalorder %s137, %s139
    %p143 = scmp.eq.s32.totalorder %s14, 0
    %p144 = por %p142, %p143
    %p145 = scmp.ne.s32.totalorder %s137, %s139
    %p146 = scmp.eq.s32.totalorder %s19, 1
    %p147 = por %p145, %p146
    %p148 = scmp.ne.s32.totalorder %s139, %s140
    %p149 = scmp.eq.s32.totalorder %s19, 0
    %p150 = por %p148, %p149
    %p151 = scmp.ne.s32.totalorder %s139, %s140
    %p152 = scmp.eq.s32.totalorder %s20, 1
    %p153 = por %p151, %p152
    %p155 = scmp.ne.s32.totalorder %s140, %s154
    %p156 = scmp.eq.s32.totalorder %s20, 0
    %p157 = por %p155, %p156
    %s159 = sadd.s32 %s158, 1
    %p162 = scmp.eq.s32.totalorder %s14, 1
    %p163 = scmp.ne.s32.totalorder %s158, %s160
    %p164 = scmp.eq.s32.totalorder %s14, 0
    %p165 = por %p163, %p164
    %p166 = scmp.ne.s32.totalorder %s158, %s160
    %p167 = scmp.eq.s32.totalorder %s19, 1
    %p168 = por %p166, %p167
    %p169 = scmp.ne.s32.totalorder %s160, %s161
    %p170 = scmp.eq.s32.totalorder %s19, 0
    %p171 = por %p169, %p170
    %p172 = scmp.ne.s32.totalorder %s160, %s161
    %p173 = scmp.eq.s32.totalorder %s20, 1
    %p174 = por %p172, %p173
    %p176 = scmp.ne.s32.totalorder %s161, %s175
    %p177 = scmp.eq.s32.totalorder %s20, 0
    %p178 = por %p176, %p177
    %s180 = sadd.s32 %s179, 1
    %p183 = scmp.eq.s32.totalorder %s14, 1
    %p184 = scmp.ne.s32.totalorder %s179, %s181
    %p185 = scmp.eq.s32.totalorder %s14, 0
    %p186 = por %p184, %p185
    %p187 = scmp.ne.s32.totalorder %s179, %s181
    %p188 = scmp.eq.s32.totalorder %s19, 1
    %p189 = por %p187, %p188
    %p190 = scmp.ne.s32.totalorder %s181, %s182
    %p191 = scmp.eq.s32.totalorder %s19, 0
    %p192 = por %p190, %p191
    %p193 = scmp.ne.s32.totalorder %s181, %s182
    %p194 = scmp.eq.s32.totalorder %s20, 1
    %p195 = por %p193, %p194
    %p197 = scmp.ne.s32.totalorder %s182, %s196
    %p198 = scmp.eq.s32.totalorder %s20, 0
    %p199 = por %p197, %p198
    %s200 = ssub.s32 %s14, %s21
    %p201 = scmp.eq.s32.totalorder %s200, 0
    %s203 = sadd.s32 %s202, 1
    %s204 = scalar_select %p201, %s202, %s203
    %p207 = pneg %p201
    %p208 = scmp.eq.s32.totalorder %s14, 1
    %p209 = por %p207, %p208
    %p210 = scmp.ne.s32.totalorder %s202, %s205
    %p211 = scmp.eq.s32.totalorder %s14, 0
    %p212 = por %p210, %p211
    %p213 = scmp.ne.s32.totalorder %s202, %s205
    %p214 = scmp.eq.s32.totalorder %s19, 1
    %p215 = por %p213, %p214
    %p216 = scmp.ne.s32.totalorder %s205, %s206
    %p217 = scmp.eq.s32.totalorder %s19, 0
    %p218 = por %p216, %p217
    %p219 = scmp.ne.s32.totalorder %s205, %s206
    %p220 = scmp.eq.s32.totalorder %s20, 1
    %p221 = por %p219, %p220
    %p223 = scmp.ne.s32.totalorder %s206, %s222
    %p224 = scmp.eq.s32.totalorder %s20, 0
    %p225 = por %p223, %p224
    %p226 = scmp.le.s32.totalorder 1, %s14
    %p227 = scmp.lt.s32.totalorder %s14, 3
    %p228 = pnand %p226, %p227
    %p229 = pneg %p228
    // Predicated region
    $region9: #{transformer_forward.16} parent=5 // pred_check
      _
    $region10: #{transformer_forward.16} parent=5 // pred_check_branch
      %231 = sbr.rel (%p228) target = $region12
    $region11: #{transformer_forward.16} parent=5 // pred_region
      %s232 = ssub.s32 %s14, 1
      // Predicated region
      $region13: #{transformer_forward.16} parent=11 // pred_check
        %p233 = pneg %p87
      $region14: #{transformer_forward.16} parent=11 // pred_check_branch
        %235 = sbr.rel (%p233) target = $region16
      $region15: #{transformer_forward.16} parent=11 // pred_region
        _
      $region16: #{transformer_forward.16} parent=11 // pred_fallthru
        _
      // Predicated region
      $region17: #{transformer_forward.16} parent=11 // pred_check
        %p236 = pneg %p108
      $region18: #{transformer_forward.16} parent=11 // pred_check_branch
        %238 = sbr.rel (%p236) target = $region20
      $region19: #{transformer_forward.16} parent=11 // pred_region
        _
      $region20: #{transformer_forward.16} parent=11 // pred_fallthru
        _
      // Predicated region
      $region21: #{transformer_forward.16} parent=11 // pred_check
        %p239 = pneg %p129
      $region22: #{transformer_forward.16} parent=11 // pred_check_branch
        %241 = sbr.rel (%p239) target = $region24
      $region23: #{transformer_forward.16} parent=11 // pred_region
        _
      $region24: #{transformer_forward.16} parent=11 // pred_fallthru
        _
      // Predicated region
      $region25: #{transformer_forward.16} parent=11 // pred_check
        %p242 = pneg %p150
      $region26: #{transformer_forward.16} parent=11 // pred_check_branch
        %244 = sbr.rel (%p242) target = $region28
      $region27: #{transformer_forward.16} parent=11 // pred_region
        _
      $region28: #{transformer_forward.16} parent=11 // pred_fallthru
        _
      // Predicated region
      $region29: #{transformer_forward.16} parent=11 // pred_check
        %p245 = pneg %p171
      $region30: #{transformer_forward.16} parent=11 // pred_check_branch
        %247 = sbr.rel (%p245) target = $region32
      $region31: #{transformer_forward.16} parent=11 // pred_region
        _
      $region32: #{transformer_forward.16} parent=11 // pred_fallthru
        _
      // Predicated region
      $region33: #{transformer_forward.16} parent=11 // pred_check
        %p248 = pneg %p192
      $region34: #{transformer_forward.16} parent=11 // pred_check_branch
        %250 = sbr.rel (%p248) target = $region36
      $region35: #{transformer_forward.16} parent=11 // pred_region
        _
      $region36: #{transformer_forward.16} parent=11 // pred_fallthru
        _
    $region12: #{transformer_forward.16} parent=5 // pred_fallthru
      _
    %p251 = scmp.lt.s32.totalorder %s14, 2
    // Predicated region
    $region37: #{transformer_forward.16} parent=5 // pred_check
      %p252 = pneg %p251
    $region38: #{transformer_forward.16} parent=5 // pred_check_branch
      %254 = sbr.rel (%p252) target = $region40
    $region39: #{transformer_forward.16} parent=5 // pred_region
      // Predicated region
      $region41: #{transformer_forward.16} parent=39 // pred_check
        %p255 = pneg %p34
      $region42: #{transformer_forward.16} parent=39 // pred_check_branch
        %257 = sbr.rel (%p255) target = $region44
      $region43: #{transformer_forward.16} parent=39 // pred_region
        %p258 = scmp.lt.s32.totalorder %s14, 1
        %s259 = scalar_select %p258, %s14, 1
        %s260 = smul.addr %s259, 8
        %s261 = scalar_lea.vmem %s0, %s260
      $region44: #{transformer_forward.16} parent=39 // pred_fallthru
        _
      // Predicated region
      $region45: #{transformer_forward.16} parent=39 // pred_check
        %p262 = pneg %p60
      $region46: #{transformer_forward.16} parent=39 // pred_check_branch
        %264 = sbr.rel (%p262) target = $region48
      $region47: #{transformer_forward.16} parent=39 // pred_region
        %p265 = scmp.lt.s32.totalorder %s14, 1
        %s266 = scalar_select %p265, %s14, 1
        %s267 = smul.addr %s266, 2
        %s268 = smul.addr %s267, 8
        %s269 = scalar_lea.vmem %s1, %s268
      $region48: #{transformer_forward.16} parent=39 // pred_fallthru
        _
    $region40: #{transformer_forward.16} parent=5 // pred_fallthru
      _
    %p270 = scmp.le.s32.totalorder 1, %s14
    %p271 = scmp.lt.s32.totalorder %s14, 3
    %p272 = pnand %p270, %p271
    %p273 = pneg %p272
    // Predicated region
    $region49: #{transformer_forward.16} parent=5 // pred_check
      _
    $region50: #{transformer_forward.16} parent=5 // pred_check_branch
      %275 = sbr.rel (%p272) target = $region52
    $region51: #{transformer_forward.16} parent=5 // pred_region
      %s276 = ssub.s32 %s14, 1
      %p277 = scmp.lt.s32.totalorder %s19, 1
      %s278 = scalar_select %p277, %s19, 1
      %s279 = smul.addr %s278, 8
      %s280 = scalar_lea.vmem %s0, %s279
      %p281 = pneg %p40
      %p282 = pneg %p37
      %p283 = scmp.lt.s32.totalorder %s19, 1
      %s284 = scalar_select %p283, %s19, 1
      %s285 = smul.addr %s284, 2
      %s286 = smul.addr %s285, 8
      %s287 = scalar_lea.vmem %s1, %s286
      %p288 = pneg %p66
      %p289 = pneg %p63
      %p290 = pneg %p87
      %p291 = pneg %p84
      %p292 = pneg %p108
      %p293 = pneg %p105
      %p294 = pneg %p129
      %p295 = pneg %p126
      %p296 = pneg %p150
      %p297 = pneg %p147
      %p298 = pneg %p171
      %p299 = pneg %p168
      %p300 = pneg %p192
      %p301 = pneg %p189
      %p302 = pneg %p218
      %p303 = pneg %p215
      %p304 = scmp.lt.s32.totalorder %s19, 1
      %s305 = scalar_select %p304, %s19, 1
      %s306 = smul.addr %s305, 8
      %s307 = scalar_lea.vmem %s8, %s306
      %p308 = scmp.lt.s32.totalorder %s19, 1
      %s309 = scalar_select %p308, %s19, 1
      %s310 = smul.addr %s309, 8
      %s311 = scalar_lea.vmem %s0, %s310
      %p312 = scmp.lt.s32.totalorder %s19, 1
      %s313 = scalar_select %p312, %s19, 1
      %s314 = smul.addr %s313, 2
      %s315 = smul.addr %s314, 8
      %s316 = scalar_lea.vmem %s1, %s315
      %p317 = scmp.lt.s32.totalorder %s19, 1
      %s318 = scalar_select %p317, %s19, 1
      %s319 = smul.addr %s318, 8
      %s320 = scalar_lea.vmem %s8, %s319
      %v322 = vld [vmem:[%s311] sm:$0xff]
      %v323 = vpack.c.bf16 %v322, %v322
      %v324 = vld [vmem:[%s316] sm:$0xff]
      %v325 = vld [vmem:[%s316 + $0x8] sm:$0xf]
      %v326 = vpack.c.bf16 %v325, %v324
      %v327 = vld [vmem:[%s2] sm:$0xf]
      %v328 = vld [vmem:[%s2 + $0x4] sm:$0xf]
      %v329 = vld [vmem:[%s2 + $0x8] sm:$0xf]
      %v330 = vld [vmem:[%s2 + $0xc] sm:$0xf]
      %v331 = vld [vmem:[%s3] sm:$0x1]
      %v333 = vlaneseq
      %v334 = vshrl.u32 %v333, 7
      %v335 = vsub.s32 0, %v334
      %v336 = vrot.slane %v331, %v335
      %v342 = vunpack.c.l.b16 %v327
      %v343 = vunpack.c.l.b16 %v328
      %v344 = vunpack.c.l.b16 %v329
      %v345 = vunpack.c.l.b16 %v330
      %v346 = vpack.c.b16 %v343, %v342
      %v347 = vpack.c.b16 %v345, %v344
      %vm350 = vcmask 261120
      %v352 = vsel %vm350, %v323, 0
      %354 = vmatprep.subr.bf16.mxu0 0
      %355 = vmatpush1.bf16.msra.mxu0 0
      %356 = vmatprep.subr.bf16.mxu0 0
      %357 = vmatpush1.bf16.msra.mxu0 0
      %358 = vmatprep.subr.bf16.mxu0 0
      %359 = vmatpush1.bf16.msra.mxu0 0
      %360 = vmatprep.subr.bf16.mxu0 0
      %361 = vmatpush1.bf16.msra.mxu0 0
      %362 = vmatprep.subr.bf16.mxu0 0
      %363 = vmatpush1.bf16.msra.mxu0 0
      %364 = vmatprep.subr.bf16.mxu0 0
      %365 = vmatpush1.bf16.msra.mxu0 0
      %366 = vmatprep.subr.bf16.mxu0 0
      %367 = vmatpush1.bf16.msra.mxu0 %v347
      %368 = vmatprep.subr.bf16.mxu0 0
      %369 = vmatpush1.bf16.msra.mxu0 %v346
      %370 = vmatprep.subr.bf16.mxu0 0
      %371 = vmatpush2.bf16.msra.mxu0 0
      %372 = vmatprep.subr.bf16.mxu0 0
      %373 = vmatpush2.bf16.msra.mxu0 0
      %374 = vmatprep.subr.bf16.mxu0 0
      %375 = vmatpush2.bf16.msra.mxu0 0
      %376 = vmatprep.subr.bf16.mxu0 0
      %377 = vmatpush2.bf16.msra.mxu0 0
      %378 = vmatprep.subr.bf16.mxu0 0
      %379 = vmatpush2.bf16.msra.mxu0 0
      %380 = vmatprep.subr.bf16.mxu0 0
      %381 = vmatpush2.bf16.msra.mxu0 0
      %382 = vmatprep.subr.bf16.mxu0 0
      %383 = vmatpush2.bf16.msra.mxu0 0
      %384 = vmatprep.subr.bf16.mxu0 0
      %385 = vmatpush2.bf16.msra.mxu0 0
      %386 = vmatprep.mubr.bf16.mxu0 0
      %387 = vmatmul.mubr.bf16.gmra.mxu0 %v352
      %v388 = vpop.f32.mrf.mxu0
      %v389 = vadd.f32 %v336, %v388
      %v390 = vpop.f32.mrf.mxu0
      %v391 = vpop.f32.mrf.mxu0
      %v392 = vpop.f32.mrf.mxu0
      %393 = vdwg.mxu0
      %v394 = vld [vmem:[%s4] sm:$0xf]
      %v395 = vld [vmem:[%s4 + $0x4] sm:$0xf]
      %v396 = vld [vmem:[%s4 + $0x8] sm:$0xf]
      %v397 = vld [vmem:[%s4 + $0xc] sm:$0xf]
      %v398 = vld [vmem:[%s5] sm:$0x1]
      %v400 = vlaneseq
      %v401 = vshrl.u32 %v400, 7
      %v402 = vsub.s32 0, %v401
      %v403 = vrot.slane %v398, %v402
      %v409 = vunpack.c.l.b16 %v394
      %v410 = vunpack.c.l.b16 %v395
      %v411 = vunpack.c.l.b16 %v396
      %v412 = vunpack.c.l.b16 %v397
      %v413 = vpack.c.b16 %v410, %v409
      %v414 = vpack.c.b16 %v412, %v411
      %v418 = vsel %vm350, %v326, 0
      %420 = vmatprep.subr.bf16.mxu0 0
      %421 = vmatpush1.bf16.msra.mxu0 0
      %422 = vmatprep.subr.bf16.mxu0 0
      %423 = vmatpush1.bf16.msra.mxu0 0
      %424 = vmatprep.subr.bf16.mxu0 0
      %425 = vmatpush1.bf16.msra.mxu0 0
      %426 = vmatprep.subr.bf16.mxu0 0
      %427 = vmatpush1.bf16.msra.mxu0 0
      %428 = vmatprep.subr.bf16.mxu0 0
      %429 = vmatpush1.bf16.msra.mxu0 0
      %430 = vmatprep.subr.bf16.mxu0 0
      %431 = vmatpush1.bf16.msra.mxu0 0
      %432 = vmatprep.subr.bf16.mxu0 0
      %433 = vmatpush1.bf16.msra.mxu0 %v414
      %434 = vmatprep.subr.bf16.mxu0 0
      %435 = vmatpush1.bf16.msra.mxu0 %v413
      %436 = vmatprep.subr.bf16.mxu0 0
      %437 = vmatpush2.bf16.msra.mxu0 0
      %438 = vmatprep.subr.bf16.mxu0 0
      %439 = vmatpush2.bf16.msra.mxu0 0
      %440 = vmatprep.subr.bf16.mxu0 0
      %441 = vmatpush2.bf16.msra.mxu0 0
      %442 = vmatprep.subr.bf16.mxu0 0
      %443 = vmatpush2.bf16.msra.mxu0 0
      %444 = vmatprep.subr.bf16.mxu0 0
      %445 = vmatpush2.bf16.msra.mxu0 0
      %446 = vmatprep.subr.bf16.mxu0 0
      %447 = vmatpush2.bf16.msra.mxu0 0
      %448 = vmatprep.subr.bf16.mxu0 0
      %449 = vmatpush2.bf16.msra.mxu0 0
      %450 = vmatprep.subr.bf16.mxu0 0
      %451 = vmatpush2.bf16.msra.mxu0 0
      %452 = vmatprep.mubr.bf16.mxu0 0
      %453 = vmatmul.mubr.bf16.gmra.mxu0 %v418
      %v454 = vpop.f32.mrf.mxu0
      %v455 = vadd.f32 %v403, %v454
      %v456 = vpop.f32.mrf.mxu0
      %v457 = vpop.f32.mrf.mxu0
      %v458 = vadd.f32 %v403, %v457
      %v459 = vpop.f32.mrf.mxu0
      %460 = vdwg.mxu0
      %v461 = vld [vmem:[%s6] sm:$0xf]
      %v462 = vld [vmem:[%s6 + $0x4] sm:$0xf]
      %v463 = vld [vmem:[%s6 + $0x8] sm:$0xf]
      %v464 = vld [vmem:[%s6 + $0xc] sm:$0xf]
      %v465 = vld [vmem:[%s7] sm:$0x1]
      %v466 = vpack.c.bf16 %v389, %v389
      %v467 = vpack.c.bf16 %v458, %v455
      %vm468 = vcmask 64512
      %v470 = vsel %vm468, %v466, 0
      %v473 = vsel %vm468, %v467, 0
      %475 = vmatprep.subr.bf16.mxu0 0
      %476 = vmatpush1.bf16.xpose.msra.mxu0 0
      %477 = vmatprep.subr.bf16.mxu0 0
      %478 = vmatpush1.bf16.xpose.msra.mxu0 0
      %479 = vmatprep.subr.bf16.mxu0 0
      %480 = vmatpush1.bf16.xpose.msra.mxu0 0
      %481 = vmatprep.subr.bf16.mxu0 0
      %482 = vmatpush1.bf16.xpose.msra.mxu0 0
      %483 = vmatprep.subr.bf16.mxu0 0
      %484 = vmatpush1.bf16.xpose.msra.mxu0 0
      %485 = vmatprep.subr.bf16.mxu0 0
      %486 = vmatpush1.bf16.xpose.msra.mxu0 0
      %487 = vmatprep.subr.bf16.mxu0 0
      %488 = vmatpush1.bf16.xpose.msra.mxu0 0
      %489 = vmatprep.subr.bf16.mxu0 0
      %490 = vmatpush1.bf16.xpose.msra.mxu0 %v473
      %491 = vmatprep.subr.bf16.mxu0 0
      %492 = vmatpush2.bf16.xpose.msra.mxu0 0
      %493 = vmatprep.subr.bf16.mxu0 0
      %494 = vmatpush2.bf16.xpose.msra.mxu0 0
      %495 = vmatprep.subr.bf16.mxu0 0
      %496 = vmatpush2.bf16.xpose.msra.mxu0 0
      %497 = vmatprep.subr.bf16.mxu0 0
      %498 = vmatpush2.bf16.xpose.msra.mxu0 0
      %499 = vmatprep.subr.bf16.mxu0 0
      %500 = vmatpush2.bf16.xpose.msra.mxu0 0
      %501 = vmatprep.subr.bf16.mxu0 0
      %502 = vmatpush2.bf16.xpose.msra.mxu0 0
      %503 = vmatprep.subr.bf16.mxu0 0
      %504 = vmatpush2.bf16.xpose.msra.mxu0 0
      %505 = vmatprep.subr.bf16.mxu0 0
      %506 = vmatpush2.bf16.xpose.msra.mxu0 0
      %507 = vmatprep.mubr.bf16.mxu0 0
      %508 = vmatmul.mubr.bf16.gmra.mxu0 %v470
      %v509 = vpop.f32.mrf.mxu0
      %v510 = vadd.f32 0.0, %v509
      %v511 = vpop.f32.mrf.mxu0
      %v512 = vpop.f32.mrf.mxu0
      %v513 = vpop.f32.mrf.mxu0
      %514 = vdwg.mxu0
      %v515 = vmul.f32 %v510, 0.35355338
      %vm516 = vcmask 97280
      %v517 = vsel %vm516, %v515, -inf
      %518 = vmax.xlane.f32.xlu0 %v517
      %v519 = vpop.xlane.xlu0 %518
      %v520 = vsub.f32 %v515, %v519
      %v521 = vmul.f32 %v520, 1.442695
      %v522 = vpow.pop %v521
      %v523 = vsel %vm516, %v522, 0.0
      %524 = vadd.xlane.f32.xlu0 %v523
      %v525 = vpop.xlane.xlu0 %524
      %v526 = vrcp.pop %v525
      %v527 = vmul.f32 %v522, %v526
      %v528 = vpack.c.bf16 %v527, %v527
      %530 = vrot.lane.b32.xlu0 %v467, 96
      %v531 = vpop.permute.xlu0 %530
      %v533 = vsel %vm516, %v528, 0
      %vm535 = vcmask 1045504
      %v537 = vsel %vm535, %v531, 0
      %539 = vmatprep.subr.bf16.mxu0 0
      %540 = vmatpush1.bf16.msra.mxu0 0
      %541 = vmatprep.subr.bf16.mxu0 0
      %542 = vmatpush1.bf16.msra.mxu0 0
      %543 = vmatprep.subr.bf16.mxu0 0
      %544 = vmatpush1.bf16.msra.mxu0 0
      %545 = vmatprep.subr.bf16.mxu0 0
      %546 = vmatpush1.bf16.msra.mxu0 0
      %547 = vmatprep.subr.bf16.mxu0 0
      %548 = vmatpush1.bf16.msra.mxu0 0
      %549 = vmatprep.subr.bf16.mxu0 0
      %550 = vmatpush1.bf16.msra.mxu0 0
      %551 = vmatprep.subr.bf16.mxu0 0
      %552 = vmatpush1.bf16.msra.mxu0 0
      %553 = vmatprep.subr.bf16.mxu0 0
      %554 = vmatpush1.bf16.msra.mxu0 %v537
      %555 = vmatprep.subr.bf16.mxu0 0
      %556 = vmatpush2.bf16.msra.mxu0 0
      %557 = vmatprep.subr.bf16.mxu0 0
      %558 = vmatpush2.bf16.msra.mxu0 0
      %559 = vmatprep.subr.bf16.mxu0 0
      %560 = vmatpush2.bf16.msra.mxu0 0
      %561 = vmatprep.subr.bf16.mxu0 0
      %562 = vmatpush2.bf16.msra.mxu0 0
      %563 = vmatprep.subr.bf16.mxu0 0
      %564 = vmatpush2.bf16.msra.mxu0 0
      %565 = vmatprep.subr.bf16.mxu0 0
      %566 = vmatpush2.bf16.msra.mxu0 0
      %567 = vmatprep.subr.bf16.mxu0 0
      %568 = vmatpush2.bf16.msra.mxu0 0
      %569 = vmatprep.subr.bf16.mxu0 0
      %570 = vmatpush2.bf16.msra.mxu0 0
      %571 = vmatprep.mubr.bf16.mxu0 0
      %572 = vmatmul.mubr.bf16.gmra.mxu0 %v533
      %v573 = vpop.f32.mrf.mxu0
      %v574 = vadd.f32 0.0, %v573
      %v575 = vpop.f32.mrf.mxu0
      %v576 = vpop.f32.mrf.mxu0
      %v577 = vpop.f32.mrf.mxu0
      %578 = vdwg.mxu0
      %v579 = vpack.c.bf16 %v574, %v574
      %581 = vrot.lane.b32.xlu0 %v466, 120
      %v582 = vpop.permute.xlu0 %581
      %583 = vrot.lane.b32.xlu0 %v467, 120
      %v584 = vpop.permute.xlu0 %583
      %v586 = vsel %vm468, %v582, 0
      %v589 = vsel %vm468, %v584, 0
      %591 = vmatprep.subr.bf16.mxu0 0
      %592 = vmatpush1.bf16.xpose.msra.mxu0 0
      %593 = vmatprep.subr.bf16.mxu0 0
      %594 = vmatpush1.bf16.xpose.msra.mxu0 0
      %595 = vmatprep.subr.bf16.mxu0 0
      %596 = vmatpush1.bf16.xpose.msra.mxu0 0
      %597 = vmatprep.subr.bf16.mxu0 0
      %598 = vmatpush1.bf16.xpose.msra.mxu0 0
      %599 = vmatprep.subr.bf16.mxu0 0
      %600 = vmatpush1.bf16.xpose.msra.mxu0 0
      %601 = vmatprep.subr.bf16.mxu0 0
      %602 = vmatpush1.bf16.xpose.msra.mxu0 0
      %603 = vmatprep.subr.bf16.mxu0 0
      %604 = vmatpush1.bf16.xpose.msra.mxu0 0
      %605 = vmatprep.subr.bf16.mxu0 0
      %606 = vmatpush1.bf16.xpose.msra.mxu0 %v589
      %607 = vmatprep.subr.bf16.mxu0 0
      %608 = vmatpush2.bf16.xpose.msra.mxu0 0
      %609 = vmatprep.subr.bf16.mxu0 0
      %610 = vmatpush2.bf16.xpose.msra.mxu0 0
      %611 = vmatprep.subr.bf16.mxu0 0
      %612 = vmatpush2.bf16.xpose.msra.mxu0 0
      %613 = vmatprep.subr.bf16.mxu0 0
      %614 = vmatpush2.bf16.xpose.msra.mxu0 0
      %615 = vmatprep.subr.bf16.mxu0 0
      %616 = vmatpush2.bf16.xpose.msra.mxu0 0
      %617 = vmatprep.subr.bf16.mxu0 0
      %618 = vmatpush2.bf16.xpose.msra.mxu0 0
      %619 = vmatprep.subr.bf16.mxu0 0
      %620 = vmatpush2.bf16.xpose.msra.mxu0 0
      %621 = vmatprep.subr.bf16.mxu0 0
      %622 = vmatpush2.bf16.xpose.msra.mxu0 0
      %623 = vmatprep.mubr.bf16.mxu0 0
      %624 = vmatmul.mubr.bf16.gmra.mxu0 %v586
      %v625 = vpop.f32.mrf.mxu0
      %v626 = vadd.f32 0.0, %v625
      %v627 = vpop.f32.mrf.mxu0
      %v628 = vpop.f32.mrf.mxu0
      %v629 = vpop.f32.mrf.mxu0
      %630 = vdwg.mxu0
      %v631 = vmul.f32 %v626, 0.35355338
      %v632 = vsel %vm516, %v631, -inf
      %633 = vmax.xlane.f32.xlu0 %v632
      %v634 = vpop.xlane.xlu0 %633
      %v635 = vsub.f32 %v631, %v634
      %v636 = vmul.f32 %v635, 1.442695
      %v637 = vpow.pop %v636
      %v638 = vsel %vm516, %v637, 0.0
      %639 = vadd.xlane.f32.xlu0 %v638
      %v640 = vpop.xlane.xlu0 %639
      %v641 = vrcp.pop %v640
      %v642 = vmul.f32 %v637, %v641
      %v643 = vpack.c.bf16 %v642, %v642
      %644 = vrot.lane.b32.xlu0 %v467, 88
      %v645 = vpop.permute.xlu0 %644
      %v647 = vsel %vm516, %v643, 0
      %v650 = vsel %vm535, %v645, 0
      %652 = vmatprep.subr.bf16.mxu0 0
      %653 = vmatpush1.bf16.msra.mxu0 0
      %654 = vmatprep.subr.bf16.mxu0 0
      %655 = vmatpush1.bf16.msra.mxu0 0
      %656 = vmatprep.subr.bf16.mxu0 0
      %657 = vmatpush1.bf16.msra.mxu0 0
      %658 = vmatprep.subr.bf16.mxu0 0
      %659 = vmatpush1.bf16.msra.mxu0 0
      %660 = vmatprep.subr.bf16.mxu0 0
      %661 = vmatpush1.bf16.msra.mxu0 0
      %662 = vmatprep.subr.bf16.mxu0 0
      %663 = vmatpush1.bf16.msra.mxu0 0
      %664 = vmatprep.subr.bf16.mxu0 0
      %665 = vmatpush1.bf16.msra.mxu0 0
      %666 = vmatprep.subr.bf16.mxu0 0
      %667 = vmatpush1.bf16.msra.mxu0 %v650
      %668 = vmatprep.subr.bf16.mxu0 0
      %669 = vmatpush2.bf16.msra.mxu0 0
      %670 = vmatprep.subr.bf16.mxu0 0
      %671 = vmatpush2.bf16.msra.mxu0 0
      %672 = vmatprep.subr.bf16.mxu0 0
      %673 = vmatpush2.bf16.msra.mxu0 0
      %674 = vmatprep.subr.bf16.mxu0 0
      %675 = vmatpush2.bf16.msra.mxu0 0
      %676 = vmatprep.subr.bf16.mxu0 0
      %677 = vmatpush2.bf16.msra.mxu0 0
      %678 = vmatprep.subr.bf16.mxu0 0
      %679 = vmatpush2.bf16.msra.mxu0 0
      %680 = vmatprep.subr.bf16.mxu0 0
      %681 = vmatpush2.bf16.msra.mxu0 0
      %682 = vmatprep.subr.bf16.mxu0 0
      %683 = vmatpush2.bf16.msra.mxu0 0
      %684 = vmatprep.mubr.bf16.mxu0 0
      %685 = vmatmul.mubr.bf16.gmra.mxu0 %v647
      %v686 = vpop.f32.mrf.mxu0
      %v687 = vadd.f32 0.0, %v686
      %v688 = vpop.f32.mrf.mxu0
      %v689 = vpop.f32.mrf.mxu0
      %v690 = vpop.f32.mrf.mxu0
      %691 = vdwg.mxu0
      %v692 = vpack.c.bf16 %v687, %v687
      %v694 = vsel %vm468, %v692, 0
      %vm696 = vcmask 1043456
      %v698 = vsel %vm696, %v462, 0
      %700 = vmatprep.subr.bf16.mxu0 0
      %701 = vmatpush1.bf16.msra.mxu0 0
      %702 = vmatprep.subr.bf16.mxu0 0
      %703 = vmatpush1.bf16.msra.mxu0 0
      %704 = vmatprep.subr.bf16.mxu0 0
      %705 = vmatpush1.bf16.msra.mxu0 0
      %706 = vmatprep.subr.bf16.mxu0 0
      %707 = vmatpush1.bf16.msra.mxu0 0
      %708 = vmatprep.subr.bf16.mxu0 0
      %709 = vmatpush1.bf16.msra.mxu0 0
      %710 = vmatprep.subr.bf16.mxu0 0
      %711 = vmatpush1.bf16.msra.mxu0 0
      %712 = vmatprep.subr.bf16.mxu0 0
      %713 = vmatpush1.bf16.msra.mxu0 0
      %714 = vmatprep.subr.bf16.mxu0 0
      %715 = vmatpush1.bf16.msra.mxu0 %v698
      %716 = vmatprep.subr.bf16.mxu0 0
      %717 = vmatpush2.bf16.msra.mxu0 0
      %718 = vmatprep.subr.bf16.mxu0 0
      %719 = vmatpush2.bf16.msra.mxu0 0
      %720 = vmatprep.subr.bf16.mxu0 0
      %721 = vmatpush2.bf16.msra.mxu0 0
      %722 = vmatprep.subr.bf16.mxu0 0
      %723 = vmatpush2.bf16.msra.mxu0 0
      %724 = vmatprep.subr.bf16.mxu0 0
      %725 = vmatpush2.bf16.msra.mxu0 0
      %726 = vmatprep.subr.bf16.mxu0 0
      %727 = vmatpush2.bf16.msra.mxu0 0
      %728 = vmatprep.subr.bf16.mxu0 0
      %729 = vmatpush2.bf16.msra.mxu0 0
      %730 = vmatprep.subr.bf16.mxu0 0
      %731 = vmatpush2.bf16.msra.mxu0 0
      %732 = vmatprep.mubr.bf16.mxu0 0
      %733 = vmatmul.mubr.bf16.gmra.mxu0 %v694
      %v734 = vpop.f32.mrf.mxu0
      %v735 = vadd.f32 0.0, %v734
      %v736 = vpop.f32.mrf.mxu0
      %v737 = vpop.f32.mrf.mxu0
      %v738 = vpop.f32.mrf.mxu0
      %739 = vdwg.mxu0
      %v741 = vsel %vm468, %v579, 0
      %v744 = vsel %vm696, %v461, 0
      %746 = vmatprep.subr.bf16.mxu0 0
      %747 = vmatpush1.bf16.msra.mxu0 0
      %748 = vmatprep.subr.bf16.mxu0 0
      %749 = vmatpush1.bf16.msra.mxu0 0
      %750 = vmatprep.subr.bf16.mxu0 0
      %751 = vmatpush1.bf16.msra.mxu0 0
      %752 = vmatprep.subr.bf16.mxu0 0
      %753 = vmatpush1.bf16.msra.mxu0 0
      %754 = vmatprep.subr.bf16.mxu0 0
      %755 = vmatpush1.bf16.msra.mxu0 0
      %756 = vmatprep.subr.bf16.mxu0 0
      %757 = vmatpush1.bf16.msra.mxu0 0
      %758 = vmatprep.subr.bf16.mxu0 0
      %759 = vmatpush1.bf16.msra.mxu0 0
      %760 = vmatprep.subr.bf16.mxu0 0
      %761 = vmatpush1.bf16.msra.mxu0 %v744
      %762 = vmatprep.subr.bf16.mxu0 0
      %763 = vmatpush2.bf16.msra.mxu0 0
      %764 = vmatprep.subr.bf16.mxu0 0
      %765 = vmatpush2.bf16.msra.mxu0 0
      %766 = vmatprep.subr.bf16.mxu0 0
      %767 = vmatpush2.bf16.msra.mxu0 0
      %768 = vmatprep.subr.bf16.mxu0 0
      %769 = vmatpush2.bf16.msra.mxu0 0
      %770 = vmatprep.subr.bf16.mxu0 0
      %771 = vmatpush2.bf16.msra.mxu0 0
      %772 = vmatprep.subr.bf16.mxu0 0
      %773 = vmatpush2.bf16.msra.mxu0 0
      %774 = vmatprep.subr.bf16.mxu0 0
      %775 = vmatpush2.bf16.msra.mxu0 0
      %776 = vmatprep.subr.bf16.mxu0 0
      %777 = vmatpush2.bf16.msra.mxu0 0
      %778 = vmatprep.mubr.bf16.mxu0 0
      %779 = vmatmul.mubr.bf16.gmra.mxu0 %v741
      %v780 = vpop.f32.mrf.mxu0
      %v781 = vadd.f32 %v735, %v780
      %v782 = vpop.f32.mrf.mxu0
      %v783 = vpop.f32.mrf.mxu0
      %v784 = vpop.f32.mrf.mxu0
      %785 = vdwg.mxu0
      %786 = vrot.lane.b32.xlu0 %v466, 112
      %v787 = vpop.permute.xlu0 %786
      %788 = vrot.lane.b32.xlu0 %v467, 112
      %v789 = vpop.permute.xlu0 %788
      %v791 = vsel %vm468, %v787, 0
      %v794 = vsel %vm468, %v789, 0
      %796 = vmatprep.subr.bf16.mxu0 0
      %797 = vmatpush1.bf16.xpose.msra.mxu0 0
      %798 = vmatprep.subr.bf16.mxu0 0
      %799 = vmatpush1.bf16.xpose.msra.mxu0 0
      %800 = vmatprep.subr.bf16.mxu0 0
      %801 = vmatpush1.bf16.xpose.msra.mxu0 0
      %802 = vmatprep.subr.bf16.mxu0 0
      %803 = vmatpush1.bf16.xpose.msra.mxu0 0
      %804 = vmatprep.subr.bf16.mxu0 0
      %805 = vmatpush1.bf16.xpose.msra.mxu0 0
      %806 = vmatprep.subr.bf16.mxu0 0
      %807 = vmatpush1.bf16.xpose.msra.mxu0 0
      %808 = vmatprep.subr.bf16.mxu0 0
      %809 = vmatpush1.bf16.xpose.msra.mxu0 0
      %810 = vmatprep.subr.bf16.mxu0 0
      %811 = vmatpush1.bf16.xpose.msra.mxu0 %v794
      %812 = vmatprep.subr.bf16.mxu0 0
      %813 = vmatpush2.bf16.xpose.msra.mxu0 0
      %814 = vmatprep.subr.bf16.mxu0 0
      %815 = vmatpush2.bf16.xpose.msra.mxu0 0
      %816 = vmatprep.subr.bf16.mxu0 0
      %817 = vmatpush2.bf16.xpose.msra.mxu0 0
      %818 = vmatprep.subr.bf16.mxu0 0
      %819 = vmatpush2.bf16.xpose.msra.mxu0 0
      %820 = vmatprep.subr.bf16.mxu0 0
      %821 = vmatpush2.bf16.xpose.msra.mxu0 0
      %822 = vmatprep.subr.bf16.mxu0 0
      %823 = vmatpush2.bf16.xpose.msra.mxu0 0
      %824 = vmatprep.subr.bf16.mxu0 0
      %825 = vmatpush2.bf16.xpose.msra.mxu0 0
      %826 = vmatprep.subr.bf16.mxu0 0
      %827 = vmatpush2.bf16.xpose.msra.mxu0 0
      %828 = vmatprep.mubr.bf16.mxu0 0
      %829 = vmatmul.mubr.bf16.gmra.mxu0 %v791
      %v830 = vpop.f32.mrf.mxu0
      %v831 = vadd.f32 0.0, %v830
      %v832 = vpop.f32.mrf.mxu0
      %v833 = vpop.f32.mrf.mxu0
      %v834 = vpop.f32.mrf.mxu0
      %835 = vdwg.mxu0
      %v836 = vmul.f32 %v831, 0.35355338
      %v837 = vsel %vm516, %v836, -inf
      %838 = vmax.xlane.f32.xlu0 %v837
      %v839 = vpop.xlane.xlu0 %838
      %v840 = vsub.f32 %v836, %v839
      %v841 = vmul.f32 %v840, 1.442695
      %v842 = vpow.pop %v841
      %v843 = vsel %vm516, %v842, 0.0
      %844 = vadd.xlane.f32.xlu0 %v843
      %v845 = vpop.xlane.xlu0 %844
      %v846 = vrcp.pop %v845
      %v847 = vmul.f32 %v842, %v846
      %v848 = vpack.c.bf16 %v847, %v847
      %849 = vrot.lane.b32.xlu0 %v467, 80
      %v850 = vpop.permute.xlu0 %849
      %v852 = vsel %vm516, %v848, 0
      %v855 = vsel %vm535, %v850, 0
      %857 = vmatprep.subr.bf16.mxu0 0
      %858 = vmatpush1.bf16.msra.mxu0 0
      %859 = vmatprep.subr.bf16.mxu0 0
      %860 = vmatpush1.bf16.msra.mxu0 0
      %861 = vmatprep.subr.bf16.mxu0 0
      %862 = vmatpush1.bf16.msra.mxu0 0
      %863 = vmatprep.subr.bf16.mxu0 0
      %864 = vmatpush1.bf16.msra.mxu0 0
      %865 = vmatprep.subr.bf16.mxu0 0
      %866 = vmatpush1.bf16.msra.mxu0 0
      %867 = vmatprep.subr.bf16.mxu0 0
      %868 = vmatpush1.bf16.msra.mxu0 0
      %869 = vmatprep.subr.bf16.mxu0 0
      %870 = vmatpush1.bf16.msra.mxu0 0
      %871 = vmatprep.subr.bf16.mxu0 0
      %872 = vmatpush1.bf16.msra.mxu0 %v855
      %873 = vmatprep.subr.bf16.mxu0 0
      %874 = vmatpush2.bf16.msra.mxu0 0
      %875 = vmatprep.subr.bf16.mxu0 0
      %876 = vmatpush2.bf16.msra.mxu0 0
      %877 = vmatprep.subr.bf16.mxu0 0
      %878 = vmatpush2.bf16.msra.mxu0 0
      %879 = vmatprep.subr.bf16.mxu0 0
      %880 = vmatpush2.bf16.msra.mxu0 0
      %881 = vmatprep.subr.bf16.mxu0 0
      %882 = vmatpush2.bf16.msra.mxu0 0
      %883 = vmatprep.subr.bf16.mxu0 0
      %884 = vmatpush2.bf16.msra.mxu0 0
      %885 = vmatprep.subr.bf16.mxu0 0
      %886 = vmatpush2.bf16.msra.mxu0 0
      %887 = vmatprep.subr.bf16.mxu0 0
      %888 = vmatpush2.bf16.msra.mxu0 0
      %889 = vmatprep.mubr.bf16.mxu0 0
      %890 = vmatmul.mubr.bf16.gmra.mxu0 %v852
      %v891 = vpop.f32.mrf.mxu0
      %v892 = vadd.f32 0.0, %v891
      %v893 = vpop.f32.mrf.mxu0
      %v894 = vpop.f32.mrf.mxu0
      %v895 = vpop.f32.mrf.mxu0
      %896 = vdwg.mxu0
      %v897 = vpack.c.bf16 %v892, %v892
      %v899 = vsel %vm468, %v897, 0
      %v902 = vsel %vm696, %v463, 0
      %904 = vmatprep.subr.bf16.mxu0 0
      %905 = vmatpush1.bf16.msra.mxu0 0
      %906 = vmatprep.subr.bf16.mxu0 0
      %907 = vmatpush1.bf16.msra.mxu0 0
      %908 = vmatprep.subr.bf16.mxu0 0
      %909 = vmatpush1.bf16.msra.mxu0 0
      %910 = vmatprep.subr.bf16.mxu0 0
      %911 = vmatpush1.bf16.msra.mxu0 0
      %912 = vmatprep.subr.bf16.mxu0 0
      %913 = vmatpush1.bf16.msra.mxu0 0
      %914 = vmatprep.subr.bf16.mxu0 0
      %915 = vmatpush1.bf16.msra.mxu0 0
      %916 = vmatprep.subr.bf16.mxu0 0
      %917 = vmatpush1.bf16.msra.mxu0 0
      %918 = vmatprep.subr.bf16.mxu0 0
      %919 = vmatpush1.bf16.msra.mxu0 %v902
      %920 = vmatprep.subr.bf16.mxu0 0
      %921 = vmatpush2.bf16.msra.mxu0 0
      %922 = vmatprep.subr.bf16.mxu0 0
      %923 = vmatpush2.bf16.msra.mxu0 0
      %924 = vmatprep.subr.bf16.mxu0 0
      %925 = vmatpush2.bf16.msra.mxu0 0
      %926 = vmatprep.subr.bf16.mxu0 0
      %927 = vmatpush2.bf16.msra.mxu0 0
      %928 = vmatprep.subr.bf16.mxu0 0
      %929 = vmatpush2.bf16.msra.mxu0 0
      %930 = vmatprep.subr.bf16.mxu0 0
      %931 = vmatpush2.bf16.msra.mxu0 0
      %932 = vmatprep.subr.bf16.mxu0 0
      %933 = vmatpush2.bf16.msra.mxu0 0
      %934 = vmatprep.subr.bf16.mxu0 0
      %935 = vmatpush2.bf16.msra.mxu0 0
      %936 = vmatprep.mubr.bf16.mxu0 0
      %937 = vmatmul.mubr.bf16.gmra.mxu0 %v899
      %v938 = vpop.f32.mrf.mxu0
      %v939 = vadd.f32 0.0, %v938
      %v940 = vpop.f32.mrf.mxu0
      %v941 = vpop.f32.mrf.mxu0
      %v942 = vpop.f32.mrf.mxu0
      %943 = vdwg.mxu0
      %v944 = vadd.f32 %v781, %v939
      %945 = vrot.lane.b32.xlu0 %v466, 104
      %v946 = vpop.permute.xlu0 %945
      %947 = vrot.lane.b32.xlu0 %v467, 104
      %v948 = vpop.permute.xlu0 %947
      %v950 = vsel %vm468, %v946, 0
      %v953 = vsel %vm468, %v948, 0
      %955 = vmatprep.subr.bf16.mxu0 0
      %956 = vmatpush1.bf16.xpose.msra.mxu0 0
      %957 = vmatprep.subr.bf16.mxu0 0
      %958 = vmatpush1.bf16.xpose.msra.mxu0 0
      %959 = vmatprep.subr.bf16.mxu0 0
      %960 = vmatpush1.bf16.xpose.msra.mxu0 0
      %961 = vmatprep.subr.bf16.mxu0 0
      %962 = vmatpush1.bf16.xpose.msra.mxu0 0
      %963 = vmatprep.subr.bf16.mxu0 0
      %964 = vmatpush1.bf16.xpose.msra.mxu0 0
      %965 = vmatprep.subr.bf16.mxu0 0
      %966 = vmatpush1.bf16.xpose.msra.mxu0 0
      %967 = vmatprep.subr.bf16.mxu0 0
      %968 = vmatpush1.bf16.xpose.msra.mxu0 0
      %969 = vmatprep.subr.bf16.mxu0 0
      %970 = vmatpush1.bf16.xpose.msra.mxu0 %v953
      %971 = vmatprep.subr.bf16.mxu0 0
      %972 = vmatpush2.bf16.xpose.msra.mxu0 0
      %973 = vmatprep.subr.bf16.mxu0 0
      %974 = vmatpush2.bf16.xpose.msra.mxu0 0
      %975 = vmatprep.subr.bf16.mxu0 0
      %976 = vmatpush2.bf16.xpose.msra.mxu0 0
      %977 = vmatprep.subr.bf16.mxu0 0
      %978 = vmatpush2.bf16.xpose.msra.mxu0 0
      %979 = vmatprep.subr.bf16.mxu0 0
      %980 = vmatpush2.bf16.xpose.msra.mxu0 0
      %981 = vmatprep.subr.bf16.mxu0 0
      %982 = vmatpush2.bf16.xpose.msra.mxu0 0
      %983 = vmatprep.subr.bf16.mxu0 0
      %984 = vmatpush2.bf16.xpose.msra.mxu0 0
      %985 = vmatprep.subr.bf16.mxu0 0
      %986 = vmatpush2.bf16.xpose.msra.mxu0 0
      %987 = vmatprep.mubr.bf16.mxu0 0
      %988 = vmatmul.mubr.bf16.gmra.mxu0 %v950
      %v989 = vpop.f32.mrf.mxu0
      %v990 = vadd.f32 0.0, %v989
      %v991 = vpop.f32.mrf.mxu0
      %v992 = vpop.f32.mrf.mxu0
      %v993 = vpop.f32.mrf.mxu0
      %994 = vdwg.mxu0
      %v995 = vmul.f32 %v990, 0.35355338
      %v996 = vsel %vm516, %v995, -inf
      %997 = vmax.xlane.f32.xlu0 %v996
      %v998 = vpop.xlane.xlu0 %997
      %v999 = vsub.f32 %v995, %v998
      %v1000 = vmul.f32 %v999, 1.442695
      %v1001 = vpow.pop %v1000
      %v1002 = vsel %vm516, %v1001, 0.0
      %1003 = vadd.xlane.f32.xlu0 %v1002
      %v1004 = vpop.xlane.xlu0 %1003
      %v1005 = vrcp.pop %v1004
      %v1006 = vmul.f32 %v1001, %v1005
      %v1007 = vpack.c.bf16 %v1006, %v1006
      %1008 = vrot.lane.b32.xlu0 %v467, 72
      %v1009 = vpop.permute.xlu0 %1008
      %v1011 = vsel %vm516, %v1007, 0
      %v1014 = vsel %vm535, %v1009, 0
      %1016 = vmatprep.subr.bf16.mxu0 0
      %1017 = vmatpush1.bf16.msra.mxu0 0
      %1018 = vmatprep.subr.bf16.mxu0 0
      %1019 = vmatpush1.bf16.msra.mxu0 0
      %1020 = vmatprep.subr.bf16.mxu0 0
      %1021 = vmatpush1.bf16.msra.mxu0 0
      %1022 = vmatprep.subr.bf16.mxu0 0
      %1023 = vmatpush1.bf16.msra.mxu0 0
      %1024 = vmatprep.subr.bf16.mxu0 0
      %1025 = vmatpush1.bf16.msra.mxu0 0
      %1026 = vmatprep.subr.bf16.mxu0 0
      %1027 = vmatpush1.bf16.msra.mxu0 0
      %1028 = vmatprep.subr.bf16.mxu0 0
      %1029 = vmatpush1.bf16.msra.mxu0 0
      %1030 = vmatprep.subr.bf16.mxu0 0
      %1031 = vmatpush1.bf16.msra.mxu0 %v1014
      %1032 = vmatprep.subr.bf16.mxu0 0
      %1033 = vmatpush2.bf16.msra.mxu0 0
      %1034 = vmatprep.subr.bf16.mxu0 0
      %1035 = vmatpush2.bf16.msra.mxu0 0
      %1036 = vmatprep.subr.bf16.mxu0 0
      %1037 = vmatpush2.bf16.msra.mxu0 0
      %1038 = vmatprep.subr.bf16.mxu0 0
      %1039 = vmatpush2.bf16.msra.mxu0 0
      %1040 = vmatprep.subr.bf16.mxu0 0
      %1041 = vmatpush2.bf16.msra.mxu0 0
      %1042 = vmatprep.subr.bf16.mxu0 0
      %1043 = vmatpush2.bf16.msra.mxu0 0
      %1044 = vmatprep.subr.bf16.mxu0 0
      %1045 = vmatpush2.bf16.msra.mxu0 0
      %1046 = vmatprep.subr.bf16.mxu0 0
      %1047 = vmatpush2.bf16.msra.mxu0 0
      %1048 = vmatprep.mubr.bf16.mxu0 0
      %1049 = vmatmul.mubr.bf16.gmra.mxu0 %v1011
      %v1050 = vpop.f32.mrf.mxu0
      %v1051 = vadd.f32 0.0, %v1050
      %v1052 = vpop.f32.mrf.mxu0
      %v1053 = vpop.f32.mrf.mxu0
      %v1054 = vpop.f32.mrf.mxu0
      %1055 = vdwg.mxu0
      %v1056 = vpack.c.bf16 %v1051, %v1051
      %v1058 = vsel %vm468, %v1056, 0
      %v1061 = vsel %vm696, %v464, 0
      %1063 = vmatprep.subr.bf16.mxu0 0
      %1064 = vmatpush1.bf16.msra.mxu0 0
      %1065 = vmatprep.subr.bf16.mxu0 0
      %1066 = vmatpush1.bf16.msra.mxu0 0
      %1067 = vmatprep.subr.bf16.mxu0 0
      %1068 = vmatpush1.bf16.msra.mxu0 0
      %1069 = vmatprep.subr.bf16.mxu0 0
      %1070 = vmatpush1.bf16.msra.mxu0 0
      %1071 = vmatprep.subr.bf16.mxu0 0
      %1072 = vmatpush1.bf16.msra.mxu0 0
      %1073 = vmatprep.subr.bf16.mxu0 0
      %1074 = vmatpush1.bf16.msra.mxu0 0
      %1075 = vmatprep.subr.bf16.mxu0 0
      %1076 = vmatpush1.bf16.msra.mxu0 0
      %1077 = vmatprep.subr.bf16.mxu0 0
      %1078 = vmatpush1.bf16.msra.mxu0 %v1061
      %1079 = vmatprep.subr.bf16.mxu0 0
      %1080 = vmatpush2.bf16.msra.mxu0 0
      %1081 = vmatprep.subr.bf16.mxu0 0
      %1082 = vmatpush2.bf16.msra.mxu0 0
      %1083 = vmatprep.subr.bf16.mxu0 0
      %1084 = vmatpush2.bf16.msra.mxu0 0
      %1085 = vmatprep.subr.bf16.mxu0 0
      %1086 = vmatpush2.bf16.msra.mxu0 0
      %1087 = vmatprep.subr.bf16.mxu0 0
      %1088 = vmatpush2.bf16.msra.mxu0 0
      %1089 = vmatprep.subr.bf16.mxu0 0
      %1090 = vmatpush2.bf16.msra.mxu0 0
      %1091 = vmatprep.subr.bf16.mxu0 0
      %1092 = vmatpush2.bf16.msra.mxu0 0
      %1093 = vmatprep.subr.bf16.mxu0 0
      %1094 = vmatpush2.bf16.msra.mxu0 0
      %1095 = vmatprep.mubr.bf16.mxu0 0
      %1096 = vmatmul.mubr.bf16.gmra.mxu0 %v1058
      %v1097 = vpop.f32.mrf.mxu0
      %v1098 = vadd.f32 0.0, %v1097
      %v1099 = vpop.f32.mrf.mxu0
      %v1100 = vpop.f32.mrf.mxu0
      %v1101 = vpop.f32.mrf.mxu0
      %1102 = vdwg.mxu0
      %v1103 = vadd.f32 %v944, %v1098
      %v1105 = vlaneseq
      %v1106 = vshrl.u32 %v1105, 7
      %v1107 = vsub.s32 0, %v1106
      %v1108 = vrot.slane %v465, %v1107
      %v1110 = vadd.f32 %v1103, %v1108
      %1111 = vst.msk [vmem:[%s320] sm:$0xff] %vm350, %v1110
      %p1112 = scmp.lt.s32.totalorder %s19, 1
      %s1113 = scalar_select %p1112, %s19, 1
      %s1114 = smul.addr %s1113, 8
      %s1115 = scalar_lea.vmem %s8, %s1114
      // Predicated region
      $region53: #{transformer_forward.16} parent=51 // pred_check
        %p1116 = pneg %p215
      $region54: #{transformer_forward.16} parent=51 // pred_check_branch
        %1118 = sbr.rel (%p1116) target = $region56
      $region55: #{transformer_forward.16} parent=51 // pred_region
        _
      $region56: #{transformer_forward.16} parent=51 // pred_fallthru
        _
    $region52: #{transformer_forward.16} parent=5 // pred_fallthru
      _
    %p1119 = scmp.le.s32.totalorder 2, %s14
    // Predicated region
    $region57: #{transformer_forward.16} parent=5 // pred_check
      %p1120 = pneg %p1119
    $region58: #{transformer_forward.16} parent=5 // pred_check_branch
      %1122 = sbr.rel (%p1120) target = $region60
    $region59: #{transformer_forward.16} parent=5 // pred_region
      %s1123 = ssub.s32 %s14, 2
      // Predicated region
      $region61: #{transformer_forward.16} parent=59 // pred_check
        %p1124 = pneg %p221
      $region62: #{transformer_forward.16} parent=59 // pred_check_branch
        %1126 = sbr.rel (%p1124) target = $region64
      $region63: #{transformer_forward.16} parent=59 // pred_region
        %p1127 = scmp.lt.s32.totalorder %s20, 1
        %s1128 = scalar_select %p1127, %s20, 1
        %s1129 = smul.addr %s1128, 8
        %s1130 = scalar_lea.vmem %s8, %s1129
      $region64: #{transformer_forward.16} parent=59 // pred_fallthru
        _
    $region60: #{transformer_forward.16} parent=5 // pred_fallthru
      _
  $region6: #{transformer_forward.16} parent=0 // loop_footer
    %s18 = sadd.s32 1, %s14
  $region7: #{transformer_forward.16} parent=0 // loop_footer_branch
    %13 = sbr.rel target = $region3
  $region8: #{transformer_forward.16} parent=0 // loop_exit
    _

</llo_original>
